<compile_context>
chip_gen: v7x
topology: tpu7x:2x2x1
jax: 0.10.0
libtpu: 0.0.40
codegen_flags: <defaults>
</compile_context>

<pallas_src>
import functools

import jax
import jax.numpy as jnp
from jax import lax
from jax.experimental import pallas as pl
from jax.experimental.pallas import tpu as pltpu

EPS = 1e-5


def _bn_train(z):
    """BatchNorm1d(affine=False), training-mode batch stats, biased variance."""
    mean = jnp.mean(z, axis=0, keepdims=True)
    c = z - mean
    var = jnp.mean(c * c, axis=0, keepdims=True)
    return c * lax.rsqrt(var + EPS)


def _fused_mlp_kernel(x_ref, w1_ref, w2_ref, w3_ref, o_ref):
    """Whole 3-layer MLP in one grid step (per output-column split).

    Layers 1/2 are computed at full width (BN stats need the full batch but
    are independent per column); only the final Linear->BN touches this
    step's N slice of w3 / o_ref.  No K tiling -> no accumulator scratch,
    single lane-dense store.
    """
    # Layer 1: Linear -> BN -> ReLU   (bias cancelled by affine-free BN)
    h = jnp.dot(x_ref[...], w1_ref[...], preferred_element_type=jnp.float32)
    h = jnp.maximum(_bn_train(h), 0.0).astype(jnp.bfloat16)
    # Layer 2: Linear -> BN -> ReLU
    h = jnp.dot(h, w2_ref[...], preferred_element_type=jnp.float32)
    h = jnp.maximum(_bn_train(h), 0.0).astype(jnp.bfloat16)
    # Layer 3 (this step's output-column slice): Linear -> BN
    z = jnp.dot(h, w3_ref[...], preferred_element_type=jnp.float32)
    o_ref[...] = _bn_train(z).astype(o_ref.dtype)


def mlp_forward(x, w1, w2, w3, *, n_splits=2, out_dtype=jnp.float32,
                vmem_limit_bytes=None):
    """Fused BYOL-MLP forward (batch_norm=True path).

    x : [B, dim]  (any float dtype; cast to bf16 for the MXU)
    w1: [dim, hidden], w2: [hidden, hidden], w3: [hidden, proj] -- pre-cast to
        bf16 by the caller, ONCE, outside jit.
    Biases are intentionally omitted: every Linear here is followed by an
    affine-free training-mode BatchNorm, which cancels them exactly.
    n_splits: number of output-column blocks for the final layer ("parallel"
    grid axis; use 2 to feed both v7x TensorCores, 1 on single-TC chips).
    """
    B, dim = x.shape
    dim_w, hidden = w1.shape
    h_in, h_out = w2.shape
    h3, proj = w3.shape
    assert dim == dim_w and hidden == h_in == h_out == h3
    assert B % 8 == 0, "batch must be sublane (8) aligned"
    assert dim % 128 == 0 and hidden % 128 == 0, "feature dims must be lane aligned"
    assert proj % (128 * n_splits) == 0, \
        "each output split must be a lane-aligned multiple of 128"
    assert w1.dtype == w2.dtype == w3.dtype == jnp.bfloat16, \
        "pre-cast weights to bf16 once, outside jit"

    n_blk = proj // n_splits

    # Honest cost estimate (advisory only at these sizes).
    itemsize_out = jnp.dtype(out_dtype).itemsize
    flops = int(2 * B * (n_splits * (dim * hidden + hidden * hidden)
                         + hidden * proj)
                + 6 * B * (n_splits * 2 * hidden + proj))     # BN/ReLU epilogues
    cost = pl.CostEstimate(
        flops=flops,
        transcendentals=int(n_splits * 2 * hidden + proj),    # per-column rsqrt
        bytes_accessed=int(2 * (B * dim + dim * hidden + hidden * hidden
                                + hidden * proj)
                           + B * proj * itemsize_out),
    )

    cp_kwargs = dict(dimension_semantics=("parallel",))
    if vmem_limit_bytes is not None:
        cp_kwargs["vmem_limit_bytes"] = vmem_limit_bytes

    return pl.pallas_call(
        _fused_mlp_kernel,
        out_shape=jax.ShapeDtypeStruct((B, proj), out_dtype),
        grid=(n_splits,),
        in_specs=[
            # Constant block index across steps -> DMA'd exactly once.
            pl.BlockSpec((B, dim), lambda n: (0, 0)),
            pl.BlockSpec((dim, hidden), lambda n: (0, 0)),
            pl.BlockSpec((hidden, hidden), lambda n: (0, 0)),
            # Final-layer weight / output blocked over output columns.
            pl.BlockSpec((hidden, n_blk), lambda n: (0, n)),
        ],
        out_specs=pl.BlockSpec((B, n_blk), lambda n: (0, n)),
        compiler_params=pltpu.CompilerParams(**cp_kwargs),
        cost_estimate=cost,
    )(x.astype(jnp.bfloat16), w1, w2, w3)


def init_params(key, dim, hidden, projection):
    """PyTorch-style uniform(-1/sqrt(fan_in), 1/sqrt(fan_in)) init.
    Biases are created for faithfulness to nn.Linear but only consumed by the
    reference (the kernel drops them -- they cancel under affine-free BN)."""
    ks = jax.random.split(key, 6)

    def linear(kw, kb, fan_in, fan_out):
        bound = 1.0 / (fan_in ** 0.5)
        w = jax.random.uniform(kw, (fan_in, fan_out), jnp.float32, -bound, bound)
        b = jax.random.uniform(kb, (1, fan_out), jnp.float32, -bound, bound)
        return w, b

    w1, b1 = linear(ks[0], ks[1], dim, hidden)
    w2, b2 = linear(ks[2], ks[3], hidden, hidden)
    w3, b3 = linear(ks[4], ks[5], hidden, projection)
    return w1, b1, w2, b2, w3, b3


def reference_forward(x, w1, b1, w2, b2, w3, b3):
    """Pure-JAX reference with the same precision policy as the kernel
    (bf16 matmul inputs, f32 accumulation / BN, bf16 intermediates) but with
    the PyTorch biases kept -- validating the bias-cancellation claim."""
    def layer(h, w, b, relu, out_dtype):
        z = jnp.dot(h.astype(jnp.bfloat16), w.astype(jnp.bfloat16),
                    preferred_element_type=jnp.float32) + b
        m = jnp.mean(z, axis=0, keepdims=True)
        c = z - m
        v = jnp.mean(c * c, axis=0, keepdims=True)
        z = c * lax.rsqrt(v + EPS)
        if relu:
            z = jnp.maximum(z, 0.0)
        return z.astype(out_dtype)

    h = layer(x, w1, b1, True, jnp.bfloat16)
    h = layer(h, w2, b2, True, jnp.bfloat16)
    return layer(h, w3, b3, False, jnp.float32)


if __name__ == "__main__":
    # Small but MXU-friendly, 128-aligned shapes.  PROJ == HIDDEN to respect
    # the module's final-BN feature-count constraint.
    B, DIM, HIDDEN, PROJ = 128, 256, 512, 512

    key = jax.random.PRNGKey(0)
    kx, kp = jax.random.split(key)
    x = jax.random.normal(kx, (B, DIM), jnp.float32)
    w1, b1, w2, b2, w3, b3 = init_params(kp, DIM, HIDDEN, PROJ)

    # Pre-cast weights to bf16 ONCE, outside jit (no per-call HBM cast pass).
    w1b = w1.astype(jnp.bfloat16)
    w2b = w2.astype(jnp.bfloat16)
    w3b = w3.astype(jnp.bfloat16)

    fwd = jax.jit(functools.partial(mlp_forward, n_splits=2))
    out = jax.block_until_ready(fwd(x, w1b, w2b, w3b))

    ref = reference_forward(x, w1, b1, w2, b2, w3, b3)
    assert out.shape == (B, PROJ)
    assert out.dtype == jnp.float32
    # Tolerance covers bf16-intermediate rounding drift between the fused
    # Pallas path (bias dropped) and the biased XLA reference.
    assert jnp.allclose(out, ref, atol=2e-2, rtol=2e-2), "mismatch vs JAX reference"

    print("KERNEL_OK")
</pallas_src>

<mosaic_0001>
module attributes {stable_mosaic.version = 11 : i64} {
  func.func @_fused_mlp_kernel(%arg0: i32, %arg1: memref<128x256xbf16, #tpu.memory_space<vmem>>, %arg2: memref<256x512xbf16, #tpu.memory_space<vmem>>, %arg3: memref<512x512xbf16, #tpu.memory_space<vmem>>, %arg4: memref<512x256xbf16, #tpu.memory_space<vmem>>, %arg5: memref<128x256xf32, #tpu.memory_space<vmem>>) attributes {dimension_semantics = [#tpu.dimension_semantics<parallel>], iteration_bounds = array<i64: 2>, scalar_prefetch = 0 : i64, scratch_operands = 0 : i64, tpu.core_type = #tpu.core_type<tc>, window_params = [{pipeline_mode = #tpu.pipeline_mode<synchronous>, transform_indices = @transform_0, window_bounds = array<i64: 128, 256>}, {pipeline_mode = #tpu.pipeline_mode<synchronous>, transform_indices = @transform_1, window_bounds = array<i64: 256, 512>}, {pipeline_mode = #tpu.pipeline_mode<synchronous>, transform_indices = @transform_2, window_bounds = array<i64: 512, 512>}, {transform_indices = @transform_3, window_bounds = array<i64: 512, 256>}, {transform_indices = @transform_4, window_bounds = array<i64: 128, 256>}]} {
    %c0 = arith.constant 0 : index
    %c0_0 = arith.constant 0 : index
    %0 = vector.load %arg1[%c0, %c0_0] : memref<128x256xbf16, #tpu.memory_space<vmem>>, vector<128x256xbf16>
    %c0_1 = arith.constant 0 : index
    %c0_2 = arith.constant 0 : index
    %1 = vector.load %arg2[%c0_1, %c0_2] : memref<256x512xbf16, #tpu.memory_space<vmem>>, vector<256x512xbf16>
    %cst = arith.constant dense<0.000000e+00> : vector<128x512xf32>
    %2 = tpu.matmul %0, %1, %cst {dimension_numbers = #tpu.dot_dimension_numbers<[1], [0], [0], [1], [0, 0, 1, 1], [], []>} : vector<128x256xbf16>, vector<256x512xbf16>, vector<128x512xf32> -> vector<128x512xf32>
    %cst_3 = arith.constant dense<0.000000e+00> : vector<512xf32>
    %3 = vector.multi_reduction <add>, %2, %cst_3 [0] : vector<128x512xf32> to vector<512xf32>
    %4 = vector.shape_cast %3 : vector<512xf32> to vector<1x512xf32>
    %cst_4 = arith.constant 1.280000e+02 : f32
    %5 = vector.broadcast %cst_4 : f32 to vector<1x512xf32>
    %6 = arith.divf %4, %5 : vector<1x512xf32>
    %7 = vector.broadcast %6 : vector<1x512xf32> to vector<128x512xf32>
    %8 = arith.subf %2, %7 : vector<128x512xf32>
    %9 = arith.mulf %8, %8 : vector<128x512xf32>
    %cst_5 = arith.constant dense<0.000000e+00> : vector<512xf32>
    %10 = vector.multi_reduction <add>, %9, %cst_5 [0] : vector<128x512xf32> to vector<512xf32>
    %11 = vector.shape_cast %10 : vector<512xf32> to vector<1x512xf32>
    %cst_6 = arith.constant 1.280000e+02 : f32
    %12 = vector.broadcast %cst_6 : f32 to vector<1x512xf32>
    %13 = arith.divf %11, %12 : vector<1x512xf32>
    %cst_7 = arith.constant 9.99999974E-6 : f32
    %14 = vector.broadcast %cst_7 : f32 to vector<1x512xf32>
    %15 = arith.addf %13, %14 : vector<1x512xf32>
    %16 = math.rsqrt %15 : vector<1x512xf32>
    %17 = vector.broadcast %16 : vector<1x512xf32> to vector<128x512xf32>
    %18 = arith.mulf %8, %17 : vector<128x512xf32>
    %cst_8 = arith.constant 0.000000e+00 : f32
    %19 = vector.broadcast %cst_8 : f32 to vector<128x512xf32>
    %20 = arith.maximumf %18, %19 : vector<128x512xf32>
    %21 = arith.truncf %20 : vector<128x512xf32> to vector<128x512xbf16>
    %c0_9 = arith.constant 0 : index
    %c0_10 = arith.constant 0 : index
    %22 = vector.load %arg3[%c0_9, %c0_10] : memref<512x512xbf16, #tpu.memory_space<vmem>>, vector<512x512xbf16>
    %cst_11 = arith.constant dense<0.000000e+00> : vector<128x512xf32>
    %23 = tpu.matmul %21, %22, %cst_11 {dimension_numbers = #tpu.dot_dimension_numbers<[1], [0], [0], [1], [0, 0, 1, 1], [], []>} : vector<128x512xbf16>, vector<512x512xbf16>, vector<128x512xf32> -> vector<128x512xf32>
    %cst_12 = arith.constant dense<0.000000e+00> : vector<512xf32>
    %24 = vector.multi_reduction <add>, %23, %cst_12 [0] : vector<128x512xf32> to vector<512xf32>
    %25 = vector.shape_cast %24 : vector<512xf32> to vector<1x512xf32>
    %cst_13 = arith.constant 1.280000e+02 : f32
    %26 = vector.broadcast %cst_13 : f32 to vector<1x512xf32>
    %27 = arith.divf %25, %26 : vector<1x512xf32>
    %28 = vector.broadcast %27 : vector<1x512xf32> to vector<128x512xf32>
    %29 = arith.subf %23, %28 : vector<128x512xf32>
    %30 = arith.mulf %29, %29 : vector<128x512xf32>
    %cst_14 = arith.constant dense<0.000000e+00> : vector<512xf32>
    %31 = vector.multi_reduction <add>, %30, %cst_14 [0] : vector<128x512xf32> to vector<512xf32>
    %32 = vector.shape_cast %31 : vector<512xf32> to vector<1x512xf32>
    %cst_15 = arith.constant 1.280000e+02 : f32
    %33 = vector.broadcast %cst_15 : f32 to vector<1x512xf32>
    %34 = arith.divf %32, %33 : vector<1x512xf32>
    %cst_16 = arith.constant 9.99999974E-6 : f32
    %35 = vector.broadcast %cst_16 : f32 to vector<1x512xf32>
    %36 = arith.addf %34, %35 : vector<1x512xf32>
    %37 = math.rsqrt %36 : vector<1x512xf32>
    %38 = vector.broadcast %37 : vector<1x512xf32> to vector<128x512xf32>
    %39 = arith.mulf %29, %38 : vector<128x512xf32>
    %cst_17 = arith.constant 0.000000e+00 : f32
    %40 = vector.broadcast %cst_17 : f32 to vector<128x512xf32>
    %41 = arith.maximumf %39, %40 : vector<128x512xf32>
    %42 = arith.truncf %41 : vector<128x512xf32> to vector<128x512xbf16>
    %c0_18 = arith.constant 0 : index
    %c0_19 = arith.constant 0 : index
    %43 = vector.load %arg4[%c0_18, %c0_19] : memref<512x256xbf16, #tpu.memory_space<vmem>>, vector<512x256xbf16>
    %cst_20 = arith.constant dense<0.000000e+00> : vector<128x256xf32>
    %44 = tpu.matmul %42, %43, %cst_20 {dimension_numbers = #tpu.dot_dimension_numbers<[1], [0], [0], [1], [0, 0, 1, 1], [], []>} : vector<128x512xbf16>, vector<512x256xbf16>, vector<128x256xf32> -> vector<128x256xf32>
    %cst_21 = arith.constant dense<0.000000e+00> : vector<256xf32>
    %45 = vector.multi_reduction <add>, %44, %cst_21 [0] : vector<128x256xf32> to vector<256xf32>
    %46 = vector.shape_cast %45 : vector<256xf32> to vector<1x256xf32>
    %cst_22 = arith.constant 1.280000e+02 : f32
    %47 = vector.broadcast %cst_22 : f32 to vector<1x256xf32>
    %48 = arith.divf %46, %47 : vector<1x256xf32>
    %49 = vector.broadcast %48 : vector<1x256xf32> to vector<128x256xf32>
    %50 = arith.subf %44, %49 : vector<128x256xf32>
    %51 = arith.mulf %50, %50 : vector<128x256xf32>
    %cst_23 = arith.constant dense<0.000000e+00> : vector<256xf32>
    %52 = vector.multi_reduction <add>, %51, %cst_23 [0] : vector<128x256xf32> to vector<256xf32>
    %53 = vector.shape_cast %52 : vector<256xf32> to vector<1x256xf32>
    %cst_24 = arith.constant 1.280000e+02 : f32
    %54 = vector.broadcast %cst_24 : f32 to vector<1x256xf32>
    %55 = arith.divf %53, %54 : vector<1x256xf32>
    %cst_25 = arith.constant 9.99999974E-6 : f32
    %56 = vector.broadcast %cst_25 : f32 to vector<1x256xf32>
    %57 = arith.addf %55, %56 : vector<1x256xf32>
    %58 = math.rsqrt %57 : vector<1x256xf32>
    %59 = vector.broadcast %58 : vector<1x256xf32> to vector<128x256xf32>
    %60 = arith.mulf %50, %59 : vector<128x256xf32>
    %c0_26 = arith.constant 0 : index
    %c0_27 = arith.constant 0 : index
    %61 = vector.load %arg5[%c0_26, %c0_27] : memref<128x256xf32, #tpu.memory_space<vmem>>, vector<128x256xf32>
    tpu.vector_store %arg5[%c0_26, %c0_27], %60 {strides = array<i32>} : memref<128x256xf32, #tpu.memory_space<vmem>>, vector<128x256xf32>,
    return
  }
  func.func @transform_0(%arg0: i32) -> (i32, i32) {
    %c0_i32 = arith.constant 0 : i32
    %c0_i32_0 = arith.constant 0 : i32
    %c0_i32_1 = arith.constant 0 : i32
    return %c0_i32, %c0_i32_0 : i32, i32
  }
  func.func @transform_1(%arg0: i32) -> (i32, i32) {
    %c0_i32 = arith.constant 0 : i32
    %c0_i32_0 = arith.constant 0 : i32
    %c0_i32_1 = arith.constant 0 : i32
    return %c0_i32, %c0_i32_0 : i32, i32
  }
  func.func @transform_2(%arg0: i32) -> (i32, i32) {
    %c0_i32 = arith.constant 0 : i32
    %c0_i32_0 = arith.constant 0 : i32
    %c0_i32_1 = arith.constant 0 : i32
    return %c0_i32, %c0_i32_0 : i32, i32
  }
  func.func @transform_3(%arg0: i32) -> (i32, i32) {
    %c0_i32 = arith.constant 0 : i32
    %c0_i32_0 = arith.constant 0 : i32
    return %c0_i32, %arg0 : i32, i32
  }
  func.func @transform_4(%arg0: i32) -> (i32, i32) {
    %c0_i32 = arith.constant 0 : i32
    %c0_i32_0 = arith.constant 0 : i32
    return %c0_i32, %arg0 : i32, i32
  }
}

</mosaic_0001>

<llo_original>
// kernel: mlp_forward.1
$region0: #{mlp_forward.1}
  #allocation0 [shape = 'u32[]', space=smem, size = 0x4, offset = 0x4, fixed_abs, tag = 'smem constant byte address 0x4 - core index']
  #allocation1 [shape = 'u32[144,128]{1,0:T(1,128)}', space=vmem, size = 0x12000, scoped, tag = 'internal scratch']
  %s0 = inlined_call_operand.vmem [shape: bf16[128,256], index: 0, kind: input, shape index: {}]
  %s1 = inlined_call_operand.hbm [shape: bf16[256,512], index: 1, kind: input, shape index: {}]
  %s2 = inlined_call_operand.hbm [shape: bf16[512,512], index: 2, kind: input, shape index: {}]
  %s3 = inlined_call_operand.hbm [shape: bf16[512,512], index: 3, kind: input, shape index: {}]
  %s4 = inlined_call_operand.hbm [shape: f32[128,512], index: 4, kind: output, shape index: {}]
  %s5 = sld [smem:[#allocation0]]
  $region61: #{mlp_forward.1} parent=0
    _
  %s7 = ssub.s32 1, %s5
  %s8 = scalar_select 0, %s7, %s5
  $region1: #{mlp_forward.1} parent=0
    #allocation2 [shape = 'u8[262144]{0}', space=vmem, size = 0x40000, scoped, tag = 'input window, operand 1, single buffered']
    #allocation3 [shape = 's32[2]{0}', space=sflag, size = 0x8, scoped, tag = 'scoped memory for mlp_forward.1']
    #allocation4 [shape = 's32[2]{0}', space=sflag, size = 0x8, scoped, tag = 'scoped memory for mlp_forward.1']
    #allocation5 [shape = 'u8[524288]{0}', space=vmem, size = 0x80000, scoped, tag = 'input window, operand 2, single buffered']
    #allocation6 [shape = 's32[1]{0}', space=sflag, size = 0x4, scoped, tag = 'scoped memory for mlp_forward.1']
    #allocation7 [shape = 'u8[524288]{0}', space=vmem, size = 0x80000, scoped, tag = 'input window, operand 3']
    #allocation8 [shape = 'u8[262144]{0}', space=vmem, size = 0x40000, scoped, tag = 'output window, operand 0']
    %9 = vsyncpa [#allocation3], 0
    %10 = vsyncpa [#allocation6], 0
    %11 = vsyncpa [#allocation4], 0
    %s12 = scalar_lea.sflag [#allocation4], 1
    %13 = vsyncpa %s12, 0
    loop: start=0, step=1, limit=4
    $region2: #{mlp_forward.1} parent=1 // loop_pre_header
      _
    $region3: #{mlp_forward.1} parent=1 // loop_header
      %s15 = sphi 0, %s19
      %p16 = scmp.ge.s32.totalorder %s15, 4
      %s23 = sphi 0, %s23
      %s25 = sphi 0, %s23
      %s26 = sphi 0, %s25
      %s40 = sphi 0, %s26
      %s44 = sphi 0, %s44
      %s46 = sphi 0, %s44
      %s47 = sphi 0, %s46
      %s61 = sphi 0, %s47
      %s65 = sphi 0, %s65
      %s67 = sphi 0, %s65
      %s68 = sphi 0, %s67
      %s82 = sphi 0, %s68
      %s88 = sphi 0, %s90
      %s91 = sphi 0, %s88
      %s92 = sphi 0, %s91
      %s108 = sphi 0, %s92
      %s114 = sphi 0, %s116
      %s117 = sphi 0, %s114
      %s118 = sphi 0, %s117
      %s134 = sphi 0, %s118
    $region4: #{mlp_forward.1} parent=1 // loop_header_branch
      %18 = sbr.rel (%p16) target = $region8
    $region5: #{mlp_forward.1} parent=1 // loop_body
      %s20 = ssub.s32 %s15, 1
      %s21 = ssub.s32 %s15, 2
      %s22 = sadd.s32 %s15, 1
      %s24 = sadd.s32 %s23, 1
      %p27 = scmp.eq.s32.totalorder %s15, 1
      %p28 = scmp.ne.s32.totalorder %s23, %s25
      %p29 = scmp.eq.s32.totalorder %s15, 0
      %p30 = por %p28, %p29
      %p31 = scmp.ne.s32.totalorder %s23, %s25
      %p32 = scmp.eq.s32.totalorder %s20, 1
      %p33 = por %p31, %p32
      %p34 = scmp.ne.s32.totalorder %s25, %s26
      %p35 = scmp.eq.s32.totalorder %s20, 0
      %p36 = por %p34, %p35
      %p37 = scmp.ne.s32.totalorder %s25, %s26
      %p38 = scmp.eq.s32.totalorder %s21, 1
      %p39 = por %p37, %p38
      %p41 = scmp.ne.s32.totalorder %s26, %s40
      %p42 = scmp.eq.s32.totalorder %s21, 0
      %p43 = por %p41, %p42
      %s45 = sadd.s32 %s44, 1
      %p48 = scmp.eq.s32.totalorder %s15, 1
      %p49 = scmp.ne.s32.totalorder %s44, %s46
      %p50 = scmp.eq.s32.totalorder %s15, 0
      %p51 = por %p49, %p50
      %p52 = scmp.ne.s32.totalorder %s44, %s46
      %p53 = scmp.eq.s32.totalorder %s20, 1
      %p54 = por %p52, %p53
      %p55 = scmp.ne.s32.totalorder %s46, %s47
      %p56 = scmp.eq.s32.totalorder %s20, 0
      %p57 = por %p55, %p56
      %p58 = scmp.ne.s32.totalorder %s46, %s47
      %p59 = scmp.eq.s32.totalorder %s21, 1
      %p60 = por %p58, %p59
      %p62 = scmp.ne.s32.totalorder %s47, %s61
      %p63 = scmp.eq.s32.totalorder %s21, 0
      %p64 = por %p62, %p63
      %s66 = sadd.s32 %s65, 1
      %p69 = scmp.eq.s32.totalorder %s15, 1
      %p70 = scmp.ne.s32.totalorder %s65, %s67
      %p71 = scmp.eq.s32.totalorder %s15, 0
      %p72 = por %p70, %p71
      %p73 = scmp.ne.s32.totalorder %s65, %s67
      %p74 = scmp.eq.s32.totalorder %s20, 1
      %p75 = por %p73, %p74
      %p76 = scmp.ne.s32.totalorder %s67, %s68
      %p77 = scmp.eq.s32.totalorder %s20, 0
      %p78 = por %p76, %p77
      %p79 = scmp.ne.s32.totalorder %s67, %s68
      %p80 = scmp.eq.s32.totalorder %s21, 1
      %p81 = por %p79, %p80
      %p83 = scmp.ne.s32.totalorder %s68, %s82
      %p84 = scmp.eq.s32.totalorder %s21, 0
      %p85 = por %p83, %p84
      %s86 = ssub.s32 %s15, %s22
      %p87 = scmp.eq.s32.totalorder %s86, 0
      %s89 = sadd.s32 %s88, 1
      %s90 = scalar_select %p87, %s88, %s89
      %p93 = pneg %p87
      %p94 = scmp.eq.s32.totalorder %s15, 1
      %p95 = por %p93, %p94
      %p96 = scmp.ne.s32.totalorder %s88, %s91
      %p97 = scmp.eq.s32.totalorder %s15, 0
      %p98 = por %p96, %p97
      %p99 = scmp.ne.s32.totalorder %s88, %s91
      %p100 = scmp.eq.s32.totalorder %s20, 1
      %p101 = por %p99, %p100
      %p102 = scmp.ne.s32.totalorder %s91, %s92
      %p103 = scmp.eq.s32.totalorder %s20, 0
      %p104 = por %p102, %p103
      %p105 = scmp.ne.s32.totalorder %s91, %s92
      %p106 = scmp.eq.s32.totalorder %s21, 1
      %p107 = por %p105, %p106
      %p109 = scmp.ne.s32.totalorder %s92, %s108
      %p110 = scmp.eq.s32.totalorder %s21, 0
      %p111 = por %p109, %p110
      %s112 = ssub.s32 %s15, %s22
      %p113 = scmp.eq.s32.totalorder %s112, 0
      %s115 = sadd.s32 %s114, 1
      %s116 = scalar_select %p113, %s114, %s115
      %p119 = pneg %p113
      %p120 = scmp.eq.s32.totalorder %s15, 1
      %p121 = por %p119, %p120
      %p122 = scmp.ne.s32.totalorder %s114, %s117
      %p123 = scmp.eq.s32.totalorder %s15, 0
      %p124 = por %p122, %p123
      %p125 = scmp.ne.s32.totalorder %s114, %s117
      %p126 = scmp.eq.s32.totalorder %s20, 1
      %p127 = por %p125, %p126
      %p128 = scmp.ne.s32.totalorder %s117, %s118
      %p129 = scmp.eq.s32.totalorder %s20, 0
      %p130 = por %p128, %p129
      %p131 = scmp.ne.s32.totalorder %s117, %s118
      %p132 = scmp.eq.s32.totalorder %s21, 1
      %p133 = por %p131, %p132
      %p135 = scmp.ne.s32.totalorder %s118, %s134
      %p136 = scmp.eq.s32.totalorder %s21, 0
      %p137 = por %p135, %p136
      %p138 = scmp.le.s32.totalorder 1, %s15
      %p139 = scmp.lt.s32.totalorder %s15, 3
      %p140 = pnand %p138, %p139
      %p141 = pneg %p140
      // Predicated region
      $region9: #{mlp_forward.1} parent=5 // pred_check
        _
      $region10: #{mlp_forward.1} parent=5 // pred_check_branch
        %143 = sbr.rel (%p140) target = $region12
      $region11: #{mlp_forward.1} parent=5 // pred_region
        %s144 = ssub.s32 %s15, 1
        // Predicated region
        $region13: #{mlp_forward.1} parent=11 // pred_check
          %p145 = pneg %p36
        $region14: #{mlp_forward.1} parent=11 // pred_check_branch
          %147 = sbr.rel (%p145) target = $region16
        $region15: #{mlp_forward.1} parent=11 // pred_region
          _
        $region16: #{mlp_forward.1} parent=11 // pred_fallthru
          _
        // Predicated region
        $region17: #{mlp_forward.1} parent=11 // pred_check
          %p148 = pneg %p57
        $region18: #{mlp_forward.1} parent=11 // pred_check_branch
          %150 = sbr.rel (%p148) target = $region20
        $region19: #{mlp_forward.1} parent=11 // pred_region
          %s152 = ssub.s32 8192, 8192
          %153 = vsyncadd [#allocation3], %s152
          %s154 = sshll.u32 [#allocation2], 4
          %s155 = int_to_ptr.vmem [resolvable:$true] %s154
          %160 = dma.hbm_to_vmem [thread:$0]  %s1, 8192, %s155, [#allocation3], 256, 256, 16
        $region20: #{mlp_forward.1} parent=11 // pred_fallthru
          _
        // Predicated region
        $region21: #{mlp_forward.1} parent=11 // pred_check
          %p161 = pneg %p78
        $region22: #{mlp_forward.1} parent=11 // pred_check_branch
          %163 = sbr.rel (%p161) target = $region24
        $region23: #{mlp_forward.1} parent=11 // pred_region
          %s165 = ssub.s32 16384, 16384
          %166 = vsyncadd [#allocation6], %s165
          %s167 = sshll.u32 [#allocation5], 4
          %s168 = int_to_ptr.vmem [resolvable:$true] %s167
          %173 = dma.hbm_to_vmem [thread:$0]  %s2, 16384, %s168, [#allocation6], 256, 256, 16
        $region24: #{mlp_forward.1} parent=11 // pred_fallthru
          _
      $region12: #{mlp_forward.1} parent=5 // pred_fallthru
        _
      %p174 = scmp.lt.s32.totalorder %s15, 2
      // Predicated region
      $region25: #{mlp_forward.1} parent=5 // pred_check
        %p175 = pneg %p174
      $region26: #{mlp_forward.1} parent=5 // pred_check_branch
        %177 = sbr.rel (%p175) target = $region28
      $region27: #{mlp_forward.1} parent=5 // pred_region
        // Predicated region
        $region29: #{mlp_forward.1} parent=27 // pred_check
          %p178 = pneg %p98
        $region30: #{mlp_forward.1} parent=27 // pred_check_branch
          %180 = sbr.rel (%p178) target = $region32
        $region31: #{mlp_forward.1} parent=27 // pred_region
          %s181 = sand.u32 %s15, 1
          %s182 = scalar_lea.sflag [#allocation3], %s181
          %s183 = sand.u32 %s88, 1
          %s184 = smul.addr %s183, 512
          %s185 = scalar_lea.vmem [#allocation7], %s184
          %s186 = smul.u32 2, %s15
          %s188 = ssub.s32 8192, 8192
          %189 = vsyncadd %s182, %s188
          %s190 = smul.addr %s186, 64
          %s191 = scalar_lea.hbm %s3, %s190
          %s192 = sshll.u32 %s185, 4
          %s193 = int_to_ptr.vmem [resolvable:$true] %s192
          %198 = dma.hbm_to_vmem [thread:$0]  %s191, 8192, %s193, %s182, 256, 128, 8
        $region32: #{mlp_forward.1} parent=27 // pred_fallthru
          _
      $region28: #{mlp_forward.1} parent=5 // pred_fallthru
        _
      %p199 = scmp.le.s32.totalorder 1, %s15
      %p200 = scmp.lt.s32.totalorder %s15, 3
      %p201 = pnand %p199, %p200
      %p202 = pneg %p201
      // Predicated region
      $region33: #{mlp_forward.1} parent=5 // pred_check
        _
      $region34: #{mlp_forward.1} parent=5 // pred_check_branch
        %204 = sbr.rel (%p201) target = $region36
      $region35: #{mlp_forward.1} parent=5 // pred_region
        %s205 = ssub.s32 %s15, 1
        // Predicated region
        $region37: #{mlp_forward.1} parent=35 // pred_check
          %p206 = pneg %p57
        $region38: #{mlp_forward.1} parent=35 // pred_check_branch
          %208 = sbr.rel (%p206) target = $region40
        $region39: #{mlp_forward.1} parent=35 // pred_region
          %209 = dma.done [#allocation3], 8192
        $region40: #{mlp_forward.1} parent=35 // pred_fallthru
          _
        // Predicated region
        $region41: #{mlp_forward.1} parent=35 // pred_check
          %p210 = pneg %p78
        $region42: #{mlp_forward.1} parent=35 // pred_check_branch
          %212 = sbr.rel (%p210) target = $region44
        $region43: #{mlp_forward.1} parent=35 // pred_region
          %213 = dma.done [#allocation6], 16384
        $region44: #{mlp_forward.1} parent=35 // pred_fallthru
          _
        %s214 = sand.u32 %s20, 1
        %s215 = scalar_lea.sflag [#allocation3], %s214
        %s216 = sand.u32 %s91, 1
        %s217 = smul.addr %s216, 512
        %s218 = scalar_lea.vmem [#allocation7], %s217
        // Predicated region
        $region45: #{mlp_forward.1} parent=35 // pred_check
          %p219 = pneg %p104
        $region46: #{mlp_forward.1} parent=35 // pred_check_branch
          %221 = sbr.rel (%p219) target = $region48
        $region47: #{mlp_forward.1} parent=35 // pred_region
          %222 = dma.done %s215, 8192
        $region48: #{mlp_forward.1} parent=35 // pred_fallthru
          _
        %p223 = pneg %p36
        %p224 = pneg %p33
        %p225 = pneg %p57
        %p226 = pneg %p54
        %p227 = pneg %p78
        %p228 = pneg %p75
        %s229 = sand.u32 %s20, 1
        %s230 = scalar_lea.sflag [#allocation3], %s229
        %s231 = sand.u32 %s91, 1
        %s232 = smul.addr %s231, 512
        %s233 = scalar_lea.vmem [#allocation7], %s232
        %p234 = pneg %p104
        %p235 = pneg %p101
        %p236 = pneg %p130
        %p237 = pneg %p127
        %s238 = sand.u32 %s117, 1
        %s239 = scalar_lea.sflag [#allocation4], %s238
        %s240 = sand.u32 %s117, 1
        %s241 = smul.addr %s240, 256
        %s242 = scalar_lea.vmem [#allocation8], %s241
        %s243 = smul.u32 2, %s20
        %s244 = smul.u32 2, %s20
        %v245 = vld [vmem:[%s0] sm:$0xff]
        %v246 = vld [vmem:[%s0 + $0x8] sm:$0xff]
        %v247 = vld [vmem:[%s0 + $0x10] sm:$0xff]
        %v248 = vld [vmem:[%s0 + $0x18] sm:$0xff]
        %v249 = vld [vmem:[%s0 + $0x20] sm:$0xff]
        %v250 = vld [vmem:[%s0 + $0x28] sm:$0xff]
        %v251 = vld [vmem:[%s0 + $0x30] sm:$0xff]
        %v252 = vld [vmem:[%s0 + $0x38] sm:$0xff]
        %v253 = vld [vmem:[%s0 + $0x40] sm:$0xff]
        %v254 = vld [vmem:[%s0 + $0x48] sm:$0xff]
        %v255 = vld [vmem:[%s0 + $0x50] sm:$0xff]
        %v256 = vld [vmem:[%s0 + $0x58] sm:$0xff]
        %v257 = vld [vmem:[%s0 + $0x60] sm:$0xff]
        %v258 = vld [vmem:[%s0 + $0x68] sm:$0xff]
        %v259 = vld [vmem:[%s0 + $0x70] sm:$0xff]
        %v260 = vld [vmem:[%s0 + $0x78] sm:$0xff]
        %v261 = vld [vmem:[#allocation2] sm:$0xff]
        %v262 = vld [vmem:[#allocation2 + $0x8] sm:$0xff]
        %v263 = vld [vmem:[#allocation2 + $0x10] sm:$0xff]
        %v264 = vld [vmem:[#allocation2 + $0x18] sm:$0xff]
        %v265 = vld [vmem:[#allocation2 + $0x20] sm:$0xff]
        %v266 = vld [vmem:[#allocation2 + $0x28] sm:$0xff]
        %v267 = vld [vmem:[#allocation2 + $0x30] sm:$0xff]
        %v268 = vld [vmem:[#allocation2 + $0x38] sm:$0xff]
        %v269 = vld [vmem:[#allocation2 + $0x40] sm:$0xff]
        %v270 = vld [vmem:[#allocation2 + $0x48] sm:$0xff]
        %v271 = vld [vmem:[#allocation2 + $0x50] sm:$0xff]
        %v272 = vld [vmem:[#allocation2 + $0x58] sm:$0xff]
        %v273 = vld [vmem:[#allocation2 + $0x60] sm:$0xff]
        %v274 = vld [vmem:[#allocation2 + $0x68] sm:$0xff]
        %v275 = vld [vmem:[#allocation2 + $0x70] sm:$0xff]
        %v276 = vld [vmem:[#allocation2 + $0x78] sm:$0xff]
        %v277 = vld [vmem:[#allocation2 + $0x80] sm:$0xff]
        %v278 = vld [vmem:[#allocation2 + $0x88] sm:$0xff]
        %v279 = vld [vmem:[#allocation2 + $0x90] sm:$0xff]
        %v280 = vld [vmem:[#allocation2 + $0x98] sm:$0xff]
        %v281 = vld [vmem:[#allocation2 + $0xa0] sm:$0xff]
        %v282 = vld [vmem:[#allocation2 + $0xa8] sm:$0xff]
        %v283 = vld [vmem:[#allocation2 + $0xb0] sm:$0xff]
        %v284 = vld [vmem:[#allocation2 + $0xb8] sm:$0xff]
        %v285 = vld [vmem:[#allocation2 + $0xc0] sm:$0xff]
        %v286 = vld [vmem:[#allocation2 + $0xc8] sm:$0xff]
        %v287 = vld [vmem:[#allocation2 + $0xd0] sm:$0xff]
        %v288 = vld [vmem:[#allocation2 + $0xd8] sm:$0xff]
        %v289 = vld [vmem:[#allocation2 + $0xe0] sm:$0xff]
        %v290 = vld [vmem:[#allocation2 + $0xe8] sm:$0xff]
        %v291 = vld [vmem:[#allocation2 + $0xf0] sm:$0xff]
        %v292 = vld [vmem:[#allocation2 + $0xf8] sm:$0xff]
        %v293 = vld [vmem:[#allocation2 + $0x100] sm:$0xff]
        %v294 = vld [vmem:[#allocation2 + $0x108] sm:$0xff]
        %v295 = vld [vmem:[#allocation2 + $0x110] sm:$0xff]
        %v296 = vld [vmem:[#allocation2 + $0x118] sm:$0xff]
        %v297 = vld [vmem:[#allocation2 + $0x120] sm:$0xff]
        %v298 = vld [vmem:[#allocation2 + $0x128] sm:$0xff]
        %v299 = vld [vmem:[#allocation2 + $0x130] sm:$0xff]
        %v300 = vld [vmem:[#allocation2 + $0x138] sm:$0xff]
        %v301 = vld [vmem:[#allocation2 + $0x140] sm:$0xff]
        %v302 = vld [vmem:[#allocation2 + $0x148] sm:$0xff]
        %v303 = vld [vmem:[#allocation2 + $0x150] sm:$0xff]
        %v304 = vld [vmem:[#allocation2 + $0x158] sm:$0xff]
        %v305 = vld [vmem:[#allocation2 + $0x160] sm:$0xff]
        %v306 = vld [vmem:[#allocation2 + $0x168] sm:$0xff]
        %v307 = vld [vmem:[#allocation2 + $0x170] sm:$0xff]
        %v308 = vld [vmem:[#allocation2 + $0x178] sm:$0xff]
        %v309 = vld [vmem:[#allocation2 + $0x180] sm:$0xff]
        %v310 = vld [vmem:[#allocation2 + $0x188] sm:$0xff]
        %v311 = vld [vmem:[#allocation2 + $0x190] sm:$0xff]
        %v312 = vld [vmem:[#allocation2 + $0x198] sm:$0xff]
        %v313 = vld [vmem:[#allocation2 + $0x1a0] sm:$0xff]
        %v314 = vld [vmem:[#allocation2 + $0x1a8] sm:$0xff]
        %v315 = vld [vmem:[#allocation2 + $0x1b0] sm:$0xff]
        %v316 = vld [vmem:[#allocation2 + $0x1b8] sm:$0xff]
        %v317 = vld [vmem:[#allocation2 + $0x1c0] sm:$0xff]
        %v318 = vld [vmem:[#allocation2 + $0x1c8] sm:$0xff]
        %v319 = vld [vmem:[#allocation2 + $0x1d0] sm:$0xff]
        %v320 = vld [vmem:[#allocation2 + $0x1d8] sm:$0xff]
        %v321 = vld [vmem:[#allocation2 + $0x1e0] sm:$0xff]
        %v322 = vld [vmem:[#allocation2 + $0x1e8] sm:$0xff]
        %v323 = vld [vmem:[#allocation2 + $0x1f0] sm:$0xff]
        %v324 = vld [vmem:[#allocation2 + $0x1f8] sm:$0xff]
        %v341 = vunpack.c.l.b16 %v245
        %v342 = vunpack.c.h.b16 %v245
        %v343 = vunpack.c.l.b16 %v246
        %v344 = vunpack.c.h.b16 %v246
        %v345 = vunpack.c.l.b16 %v247
        %v346 = vunpack.c.h.b16 %v247
        %v347 = vunpack.c.l.b16 %v248
        %v348 = vunpack.c.h.b16 %v248
        %v349 = vunpack.c.l.b16 %v249
        %v350 = vunpack.c.h.b16 %v249
        %v351 = vunpack.c.l.b16 %v250
        %v352 = vunpack.c.h.b16 %v250
        %v353 = vunpack.c.l.b16 %v251
        %v354 = vunpack.c.h.b16 %v251
        %v355 = vunpack.c.l.b16 %v252
        %v356 = vunpack.c.h.b16 %v252
        %v357 = vunpack.c.l.b16 %v253
        %v358 = vunpack.c.h.b16 %v253
        %v359 = vunpack.c.l.b16 %v254
        %v360 = vunpack.c.h.b16 %v254
        %v361 = vunpack.c.l.b16 %v255
        %v362 = vunpack.c.h.b16 %v255
        %v363 = vunpack.c.l.b16 %v256
        %v364 = vunpack.c.h.b16 %v256
        %v365 = vunpack.c.l.b16 %v257
        %v366 = vunpack.c.h.b16 %v257
        %v367 = vunpack.c.l.b16 %v258
        %v368 = vunpack.c.h.b16 %v258
        %v369 = vunpack.c.l.b16 %v259
        %v370 = vunpack.c.h.b16 %v259
        %v371 = vunpack.c.l.b16 %v260
        %v372 = vunpack.c.h.b16 %v260
        %v373 = vpack.c.b16 %v343, %v341
        %v374 = vpack.c.b16 %v344, %v342
        %v375 = vpack.c.b16 %v347, %v345
        %v376 = vpack.c.b16 %v348, %v346
        %v377 = vpack.c.b16 %v351, %v349
        %v378 = vpack.c.b16 %v352, %v350
        %v379 = vpack.c.b16 %v355, %v353
        %v380 = vpack.c.b16 %v356, %v354
        %v381 = vpack.c.b16 %v359, %v357
        %v382 = vpack.c.b16 %v360, %v358
        %v383 = vpack.c.b16 %v363, %v361
        %v384 = vpack.c.b16 %v364, %v362
        %v385 = vpack.c.b16 %v367, %v365
        %v386 = vpack.c.b16 %v368, %v366
        %v387 = vpack.c.b16 %v371, %v369
        %v388 = vpack.c.b16 %v372, %v370
        %v469 = vunpack.c.l.b16 %v261
        %v470 = vunpack.c.h.b16 %v261
        %v471 = vunpack.c.l.b16 %v262
        %v472 = vunpack.c.h.b16 %v262
        %v473 = vunpack.c.l.b16 %v263
        %v474 = vunpack.c.h.b16 %v263
        %v475 = vunpack.c.l.b16 %v264
        %v476 = vunpack.c.h.b16 %v264
        %v477 = vunpack.c.l.b16 %v265
        %v478 = vunpack.c.h.b16 %v265
        %v479 = vunpack.c.l.b16 %v266
        %v480 = vunpack.c.h.b16 %v266
        %v481 = vunpack.c.l.b16 %v267
        %v482 = vunpack.c.h.b16 %v267
        %v483 = vunpack.c.l.b16 %v268
        %v484 = vunpack.c.h.b16 %v268
        %v485 = vunpack.c.l.b16 %v269
        %v486 = vunpack.c.h.b16 %v269
        %v487 = vunpack.c.l.b16 %v270
        %v488 = vunpack.c.h.b16 %v270
        %v489 = vunpack.c.l.b16 %v271
        %v490 = vunpack.c.h.b16 %v271
        %v491 = vunpack.c.l.b16 %v272
        %v492 = vunpack.c.h.b16 %v272
        %v493 = vunpack.c.l.b16 %v273
        %v494 = vunpack.c.h.b16 %v273
        %v495 = vunpack.c.l.b16 %v274
        %v496 = vunpack.c.h.b16 %v274
        %v497 = vunpack.c.l.b16 %v275
        %v498 = vunpack.c.h.b16 %v275
        %v499 = vunpack.c.l.b16 %v276
        %v500 = vunpack.c.h.b16 %v276
        %v501 = vunpack.c.l.b16 %v277
        %v502 = vunpack.c.h.b16 %v277
        %v503 = vunpack.c.l.b16 %v278
        %v504 = vunpack.c.h.b16 %v278
        %v505 = vunpack.c.l.b16 %v279
        %v506 = vunpack.c.h.b16 %v279
        %v507 = vunpack.c.l.b16 %v280
        %v508 = vunpack.c.h.b16 %v280
        %v509 = vunpack.c.l.b16 %v281
        %v510 = vunpack.c.h.b16 %v281
        %v511 = vunpack.c.l.b16 %v282
        %v512 = vunpack.c.h.b16 %v282
        %v513 = vunpack.c.l.b16 %v283
        %v514 = vunpack.c.h.b16 %v283
        %v515 = vunpack.c.l.b16 %v284
        %v516 = vunpack.c.h.b16 %v284
        %v517 = vunpack.c.l.b16 %v285
        %v518 = vunpack.c.h.b16 %v285
        %v519 = vunpack.c.l.b16 %v286
        %v520 = vunpack.c.h.b16 %v286
        %v521 = vunpack.c.l.b16 %v287
        %v522 = vunpack.c.h.b16 %v287
        %v523 = vunpack.c.l.b16 %v288
        %v524 = vunpack.c.h.b16 %v288
        %v525 = vunpack.c.l.b16 %v289
        %v526 = vunpack.c.h.b16 %v289
        %v527 = vunpack.c.l.b16 %v290
        %v528 = vunpack.c.h.b16 %v290
        %v529 = vunpack.c.l.b16 %v291
        %v530 = vunpack.c.h.b16 %v291
        %v531 = vunpack.c.l.b16 %v292
        %v532 = vunpack.c.h.b16 %v292
        %v533 = vunpack.c.l.b16 %v293
        %v534 = vunpack.c.h.b16 %v293
        %v535 = vunpack.c.l.b16 %v294
        %v536 = vunpack.c.h.b16 %v294
        %v537 = vunpack.c.l.b16 %v295
        %v538 = vunpack.c.h.b16 %v295
        %v539 = vunpack.c.l.b16 %v296
        %v540 = vunpack.c.h.b16 %v296
        %v541 = vunpack.c.l.b16 %v297
        %v542 = vunpack.c.h.b16 %v297
        %v543 = vunpack.c.l.b16 %v298
        %v544 = vunpack.c.h.b16 %v298
        %v545 = vunpack.c.l.b16 %v299
        %v546 = vunpack.c.h.b16 %v299
        %v547 = vunpack.c.l.b16 %v300
        %v548 = vunpack.c.h.b16 %v300
        %v549 = vunpack.c.l.b16 %v301
        %v550 = vunpack.c.h.b16 %v301
        %v551 = vunpack.c.l.b16 %v302
        %v552 = vunpack.c.h.b16 %v302
        %v553 = vunpack.c.l.b16 %v303
        %v554 = vunpack.c.h.b16 %v303
        %v555 = vunpack.c.l.b16 %v304
        %v556 = vunpack.c.h.b16 %v304
        %v557 = vunpack.c.l.b16 %v305
        %v558 = vunpack.c.h.b16 %v305
        %v559 = vunpack.c.l.b16 %v306
        %v560 = vunpack.c.h.b16 %v306
        %v561 = vunpack.c.l.b16 %v307
        %v562 = vunpack.c.h.b16 %v307
        %v563 = vunpack.c.l.b16 %v308
        %v564 = vunpack.c.h.b16 %v308
        %v565 = vunpack.c.l.b16 %v309
        %v566 = vunpack.c.h.b16 %v309
        %v567 = vunpack.c.l.b16 %v310
        %v568 = vunpack.c.h.b16 %v310
        %v569 = vunpack.c.l.b16 %v311
        %v570 = vunpack.c.h.b16 %v311
        %v571 = vunpack.c.l.b16 %v312
        %v572 = vunpack.c.h.b16 %v312
        %v573 = vunpack.c.l.b16 %v313
        %v574 = vunpack.c.h.b16 %v313
        %v575 = vunpack.c.l.b16 %v314
        %v576 = vunpack.c.h.b16 %v314
        %v577 = vunpack.c.l.b16 %v315
        %v578 = vunpack.c.h.b16 %v315
        %v579 = vunpack.c.l.b16 %v316
        %v580 = vunpack.c.h.b16 %v316
        %v581 = vunpack.c.l.b16 %v317
        %v582 = vunpack.c.h.b16 %v317
        %v583 = vunpack.c.l.b16 %v318
        %v584 = vunpack.c.h.b16 %v318
        %v585 = vunpack.c.l.b16 %v319
        %v586 = vunpack.c.h.b16 %v319
        %v587 = vunpack.c.l.b16 %v320
        %v588 = vunpack.c.h.b16 %v320
        %v589 = vunpack.c.l.b16 %v321
        %v590 = vunpack.c.h.b16 %v321
        %v591 = vunpack.c.l.b16 %v322
        %v592 = vunpack.c.h.b16 %v322
        %v593 = vunpack.c.l.b16 %v323
        %v594 = vunpack.c.h.b16 %v323
        %v595 = vunpack.c.l.b16 %v324
        %v596 = vunpack.c.h.b16 %v324
        %v597 = vpack.c.b16 %v473, %v469
        %v598 = vpack.c.b16 %v474, %v470
        %v599 = vpack.c.b16 %v475, %v471
        %v600 = vpack.c.b16 %v476, %v472
        %v601 = vpack.c.b16 %v481, %v477
        %v602 = vpack.c.b16 %v482, %v478
        %v603 = vpack.c.b16 %v483, %v479
        %v604 = vpack.c.b16 %v484, %v480
        %v605 = vpack.c.b16 %v489, %v485
        %v606 = vpack.c.b16 %v490, %v486
        %v607 = vpack.c.b16 %v491, %v487
        %v608 = vpack.c.b16 %v492, %v488
        %v609 = vpack.c.b16 %v497, %v493
        %v610 = vpack.c.b16 %v498, %v494
        %v611 = vpack.c.b16 %v499, %v495
        %v612 = vpack.c.b16 %v500, %v496
        %v613 = vpack.c.b16 %v505, %v501
        %v614 = vpack.c.b16 %v506, %v502
        %v615 = vpack.c.b16 %v507, %v503
        %v616 = vpack.c.b16 %v508, %v504
        %v617 = vpack.c.b16 %v513, %v509
        %v618 = vpack.c.b16 %v514, %v510
        %v619 = vpack.c.b16 %v515, %v511
        %v620 = vpack.c.b16 %v516, %v512
        %v621 = vpack.c.b16 %v521, %v517
        %v622 = vpack.c.b16 %v522, %v518
        %v623 = vpack.c.b16 %v523, %v519
        %v624 = vpack.c.b16 %v524, %v520
        %v625 = vpack.c.b16 %v529, %v525
        %v626 = vpack.c.b16 %v530, %v526
        %v627 = vpack.c.b16 %v531, %v527
        %v628 = vpack.c.b16 %v532, %v528
        %v629 = vpack.c.b16 %v537, %v533
        %v630 = vpack.c.b16 %v538, %v534
        %v631 = vpack.c.b16 %v539, %v535
        %v632 = vpack.c.b16 %v540, %v536
        %v633 = vpack.c.b16 %v545, %v541
        %v634 = vpack.c.b16 %v546, %v542
        %v635 = vpack.c.b16 %v547, %v543
        %v636 = vpack.c.b16 %v548, %v544
        %v637 = vpack.c.b16 %v553, %v549
        %v638 = vpack.c.b16 %v554, %v550
        %v639 = vpack.c.b16 %v555, %v551
        %v640 = vpack.c.b16 %v556, %v552
        %v641 = vpack.c.b16 %v561, %v557
        %v642 = vpack.c.b16 %v562, %v558
        %v643 = vpack.c.b16 %v563, %v559
        %v644 = vpack.c.b16 %v564, %v560
        %v645 = vpack.c.b16 %v569, %v565
        %v646 = vpack.c.b16 %v570, %v566
        %v647 = vpack.c.b16 %v571, %v567
        %v648 = vpack.c.b16 %v572, %v568
        %v649 = vpack.c.b16 %v577, %v573
        %v650 = vpack.c.b16 %v578, %v574
        %v651 = vpack.c.b16 %v579, %v575
        %v652 = vpack.c.b16 %v580, %v576
        %v653 = vpack.c.b16 %v585, %v581
        %v654 = vpack.c.b16 %v586, %v582
        %v655 = vpack.c.b16 %v587, %v583
        %v656 = vpack.c.b16 %v588, %v584
        %v657 = vpack.c.b16 %v593, %v589
        %v658 = vpack.c.b16 %v594, %v590
        %v659 = vpack.c.b16 %v595, %v591
        %v660 = vpack.c.b16 %v596, %v592
        %725 = vmatprep.subr.bf16.mxu0 %v598
        %726 = vmatpush1.bf16.msra.mxu0 %v597
        %727 = vmatprep.subr.bf16.mxu0 %v602
        %728 = vmatpush1.bf16.msra.mxu0 %v601
        %729 = vmatprep.subr.bf16.mxu0 %v606
        %730 = vmatpush1.bf16.msra.mxu0 %v605
        %731 = vmatprep.subr.bf16.mxu0 %v610
        %732 = vmatpush1.bf16.msra.mxu0 %v609
        %733 = vmatprep.subr.bf16.mxu0 %v614
        %734 = vmatpush1.bf16.msra.mxu0 %v613
        %735 = vmatprep.subr.bf16.mxu0 %v618
        %736 = vmatpush1.bf16.msra.mxu0 %v617
        %737 = vmatprep.subr.bf16.mxu0 %v622
        %738 = vmatpush1.bf16.msra.mxu0 %v621
        %739 = vmatprep.subr.bf16.mxu0 %v626
        %740 = vmatpush1.bf16.msra.mxu0 %v625
        %741 = vmatprep.subr.bf16.mxu0 %v630
        %742 = vmatpush1.bf16.msra.mxu0 %v629
        %743 = vmatprep.subr.bf16.mxu0 %v634
        %744 = vmatpush1.bf16.msra.mxu0 %v633
        %745 = vmatprep.subr.bf16.mxu0 %v638
        %746 = vmatpush1.bf16.msra.mxu0 %v637
        %747 = vmatprep.subr.bf16.mxu0 %v642
        %748 = vmatpush1.bf16.msra.mxu0 %v641
        %749 = vmatprep.subr.bf16.mxu0 %v646
        %750 = vmatpush1.bf16.msra.mxu0 %v645
        %751 = vmatprep.subr.bf16.mxu0 %v650
        %752 = vmatpush1.bf16.msra.mxu0 %v649
        %753 = vmatprep.subr.bf16.mxu0 %v654
        %754 = vmatpush1.bf16.msra.mxu0 %v653
        %755 = vmatprep.subr.bf16.mxu0 %v658
        %756 = vmatpush1.bf16.msra.mxu0 %v657
        %757 = vmatprep.mubr.bf16.mxu0 %v374
        %758 = vmatmul.mubr.bf16.gmra.mrb[0].mxu0 %v373
        %v759 = vpop.f32.mrb[0].mxu0
        %v760 = vadd.f32 0.0, %v759
        %v761 = vpop.f32.mrb[0].mxu0
        %v762 = vadd.f32 0.0, %v761
        %v763 = vpop.f32.mrb[0].mxu0
        %v764 = vadd.f32 0.0, %v763
        %v765 = vpop.f32.mrb[0].mxu0
        %v766 = vadd.f32 0.0, %v765
        %767 = vmatprep.mubr.bf16.mxu0 %v376
        %768 = vmatmul.mubr.bf16.gmra.mrb[0].mxu0 %v375
        %v769 = vpop.f32.mrb[0].mxu0
        %v770 = vadd.f32 0.0, %v769
        %v771 = vpop.f32.mrb[0].mxu0
        %v772 = vadd.f32 0.0, %v771
        %v773 = vpop.f32.mrb[0].mxu0
        %v774 = vadd.f32 0.0, %v773
        %v775 = vpop.f32.mrb[0].mxu0
        %v776 = vadd.f32 0.0, %v775
        %777 = vmatprep.mubr.bf16.mxu0 %v378
        %778 = vmatmul.mubr.bf16.gmra.mrb[0].mxu0 %v377
        %v779 = vpop.f32.mrb[0].mxu0
        %v780 = vadd.f32 0.0, %v779
        %v781 = vpop.f32.mrb[0].mxu0
        %v782 = vadd.f32 0.0, %v781
        %v783 = vpop.f32.mrb[0].mxu0
        %v784 = vadd.f32 0.0, %v783
        %v785 = vpop.f32.mrb[0].mxu0
        %v786 = vadd.f32 0.0, %v785
        %787 = vmatprep.mubr.bf16.mxu0 %v380
        %788 = vmatmul.mubr.bf16.gmra.mrb[0].mxu0 %v379
        %v789 = vpop.f32.mrb[0].mxu0
        %v790 = vadd.f32 0.0, %v789
        %v791 = vpop.f32.mrb[0].mxu0
        %v792 = vadd.f32 0.0, %v791
        %v793 = vpop.f32.mrb[0].mxu0
        %v794 = vadd.f32 0.0, %v793
        %v795 = vpop.f32.mrb[0].mxu0
        %v796 = vadd.f32 0.0, %v795
        %797 = vmatprep.mubr.bf16.mxu0 %v382
        %798 = vmatmul.mubr.bf16.gmra.mrb[0].mxu0 %v381
        %v799 = vpop.f32.mrb[0].mxu0
        %v800 = vadd.f32 0.0, %v799
        %v801 = vpop.f32.mrb[0].mxu0
        %v802 = vadd.f32 0.0, %v801
        %v803 = vpop.f32.mrb[0].mxu0
        %v804 = vadd.f32 0.0, %v803
        %v805 = vpop.f32.mrb[0].mxu0
        %v806 = vadd.f32 0.0, %v805
        %807 = vmatprep.mubr.bf16.mxu0 %v384
        %808 = vmatmul.mubr.bf16.gmra.mrb[0].mxu0 %v383
        %v809 = vpop.f32.mrb[0].mxu0
        %v810 = vadd.f32 0.0, %v809
        %v811 = vpop.f32.mrb[0].mxu0
        %v812 = vadd.f32 0.0, %v811
        %v813 = vpop.f32.mrb[0].mxu0
        %v814 = vadd.f32 0.0, %v813
        %v815 = vpop.f32.mrb[0].mxu0
        %v816 = vadd.f32 0.0, %v815
        %817 = vmatprep.mubr.bf16.mxu0 %v386
        %818 = vmatmul.mubr.bf16.gmra.mrb[0].mxu0 %v385
        %v819 = vpop.f32.mrb[0].mxu0
        %v820 = vadd.f32 0.0, %v819
        %v821 = vpop.f32.mrb[0].mxu0
        %v822 = vadd.f32 0.0, %v821
        %v823 = vpop.f32.mrb[0].mxu0
        %v824 = vadd.f32 0.0, %v823
        %v825 = vpop.f32.mrb[0].mxu0
        %v826 = vadd.f32 0.0, %v825
        %827 = vmatprep.mubr.bf16.mxu0 %v388
        %828 = vmatmul.mubr.bf16.gmra.mrb[0].mxu0 %v387
        %v829 = vpop.f32.mrb[0].mxu0
        %v830 = vadd.f32 0.0, %v829
        %v831 = vpop.f32.mrb[0].mxu0
        %v832 = vadd.f32 0.0, %v831
        %v833 = vpop.f32.mrb[0].mxu0
        %v834 = vadd.f32 0.0, %v833
        %v835 = vpop.f32.mrb[0].mxu0
        %v836 = vadd.f32 0.0, %v835
        %837 = vdwg.mxu0
        %838 = vmatprep.subr.bf16.mxu0 %v600
        %839 = vmatpush1.bf16.msra.mxu0 %v599
        %840 = vmatprep.subr.bf16.mxu0 %v604
        %841 = vmatpush1.bf16.msra.mxu0 %v603
        %842 = vmatprep.subr.bf16.mxu0 %v608
        %843 = vmatpush1.bf16.msra.mxu0 %v607
        %844 = vmatprep.subr.bf16.mxu0 %v612
        %845 = vmatpush1.bf16.msra.mxu0 %v611
        %846 = vmatprep.subr.bf16.mxu0 %v616
        %847 = vmatpush1.bf16.msra.mxu0 %v615
        %848 = vmatprep.subr.bf16.mxu0 %v620
        %849 = vmatpush1.bf16.msra.mxu0 %v619
        %850 = vmatprep.subr.bf16.mxu0 %v624
        %851 = vmatpush1.bf16.msra.mxu0 %v623
        %852 = vmatprep.subr.bf16.mxu0 %v628
        %853 = vmatpush1.bf16.msra.mxu0 %v627
        %854 = vmatprep.subr.bf16.mxu0 %v632
        %855 = vmatpush1.bf16.msra.mxu0 %v631
        %856 = vmatprep.subr.bf16.mxu0 %v636
        %857 = vmatpush1.bf16.msra.mxu0 %v635
        %858 = vmatprep.subr.bf16.mxu0 %v640
        %859 = vmatpush1.bf16.msra.mxu0 %v639
        %860 = vmatprep.subr.bf16.mxu0 %v644
        %861 = vmatpush1.bf16.msra.mxu0 %v643
        %862 = vmatprep.subr.bf16.mxu0 %v648
        %863 = vmatpush1.bf16.msra.mxu0 %v647
        %864 = vmatprep.subr.bf16.mxu0 %v652
        %865 = vmatpush1.bf16.msra.mxu0 %v651
        %866 = vmatprep.subr.bf16.mxu0 %v656
        %867 = vmatpush1.bf16.msra.mxu0 %v655
        %868 = vmatprep.subr.bf16.mxu0 %v660
        %869 = vmatpush1.bf16.msra.mxu0 %v659
        %870 = vmatprep.mubr.bf16.mxu0 %v374
        %871 = vmatmul.mubr.bf16.gmra.mrb[0].mxu0 %v373
        %v872 = vpop.f32.mrb[0].mxu0
        %v873 = vadd.f32 0.0, %v872
        %v874 = vpop.f32.mrb[0].mxu0
        %v875 = vadd.f32 0.0, %v874
        %v876 = vpop.f32.mrb[0].mxu0
        %v877 = vadd.f32 0.0, %v876
        %v878 = vpop.f32.mrb[0].mxu0
        %v879 = vadd.f32 0.0, %v878
        %880 = vmatprep.mubr.bf16.mxu0 %v376
        %881 = vmatmul.mubr.bf16.gmra.mrb[0].mxu0 %v375
        %v882 = vpop.f32.mrb[0].mxu0
        %v883 = vadd.f32 0.0, %v882
        %v884 = vpop.f32.mrb[0].mxu0
        %v885 = vadd.f32 0.0, %v884
        %v886 = vpop.f32.mrb[0].mxu0
        %v887 = vadd.f32 0.0, %v886
        %v888 = vpop.f32.mrb[0].mxu0
        %v889 = vadd.f32 0.0, %v888
        %890 = vmatprep.mubr.bf16.mxu0 %v378
        %891 = vmatmul.mubr.bf16.gmra.mrb[0].mxu0 %v377
        %v892 = vpop.f32.mrb[0].mxu0
        %v893 = vadd.f32 0.0, %v892
        %v894 = vpop.f32.mrb[0].mxu0
        %v895 = vadd.f32 0.0, %v894
        %v896 = vpop.f32.mrb[0].mxu0
        %v897 = vadd.f32 0.0, %v896
        %v898 = vpop.f32.mrb[0].mxu0
        %v899 = vadd.f32 0.0, %v898
        %900 = vmatprep.mubr.bf16.mxu0 %v380
        %901 = vmatmul.mubr.bf16.gmra.mrb[0].mxu0 %v379
        %v902 = vpop.f32.mrb[0].mxu0
        %v903 = vadd.f32 0.0, %v902
        %v904 = vpop.f32.mrb[0].mxu0
        %v905 = vadd.f32 0.0, %v904
        %v906 = vpop.f32.mrb[0].mxu0
        %v907 = vadd.f32 0.0, %v906
        %v908 = vpop.f32.mrb[0].mxu0
        %v909 = vadd.f32 0.0, %v908
        %910 = vmatprep.mubr.bf16.mxu0 %v382
        %911 = vmatmul.mubr.bf16.gmra.mrb[0].mxu0 %v381
        %v912 = vpop.f32.mrb[0].mxu0
        %v913 = vadd.f32 0.0, %v912
        %v914 = vpop.f32.mrb[0].mxu0
        %v915 = vadd.f32 0.0, %v914
        %v916 = vpop.f32.mrb[0].mxu0
        %v917 = vadd.f32 0.0, %v916
        %v918 = vpop.f32.mrb[0].mxu0
        %v919 = vadd.f32 0.0, %v918
        %920 = vmatprep.mubr.bf16.mxu0 %v384
        %921 = vmatmul.mubr.bf16.gmra.mrb[0].mxu0 %v383
        %v922 = vpop.f32.mrb[0].mxu0
        %v923 = vadd.f32 0.0, %v922
        %v924 = vpop.f32.mrb[0].mxu0
        %v925 = vadd.f32 0.0, %v924
        %v926 = vpop.f32.mrb[0].mxu0
        %v927 = vadd.f32 0.0, %v926
        %v928 = vpop.f32.mrb[0].mxu0
        %v929 = vadd.f32 0.0, %v928
        %930 = vmatprep.mubr.bf16.mxu0 %v386
        %931 = vmatmul.mubr.bf16.gmra.mrb[0].mxu0 %v385
        %v932 = vpop.f32.mrb[0].mxu0
        %v933 = vadd.f32 0.0, %v932
        %v934 = vpop.f32.mrb[0].mxu0
        %v935 = vadd.f32 0.0, %v934
        %v936 = vpop.f32.mrb[0].mxu0
        %v937 = vadd.f32 0.0, %v936
        %v938 = vpop.f32.mrb[0].mxu0
        %v939 = vadd.f32 0.0, %v938
        %940 = vmatprep.mubr.bf16.mxu0 %v388
        %941 = vmatmul.mubr.bf16.gmra.mrb[0].mxu0 %v387
        %v942 = vpop.f32.mrb[0].mxu0
        %v943 = vadd.f32 0.0, %v942
        %v944 = vpop.f32.mrb[0].mxu0
        %v945 = vadd.f32 0.0, %v944
        %v946 = vpop.f32.mrb[0].mxu0
        %v947 = vadd.f32 0.0, %v946
        %v948 = vpop.f32.mrb[0].mxu0
        %v949 = vadd.f32 0.0, %v948
        %950 = vdwg.mxu0
        %v951 = vadd.f32 %v760, %v764
        %v952 = vadd.f32 %v951, %v770
        %v953 = vadd.f32 %v952, %v774
        %v954 = vadd.f32 %v953, %v780
        %v955 = vadd.f32 %v954, %v784
        %v956 = vadd.f32 %v955, %v790
        %v957 = vadd.f32 %v956, %v794
        %v958 = vadd.f32 %v957, %v800
        %v959 = vadd.f32 %v958, %v804
        %v960 = vadd.f32 %v959, %v810
        %v961 = vadd.f32 %v960, %v814
        %v962 = vadd.f32 %v961, %v820
        %v963 = vadd.f32 %v962, %v824
        %v964 = vadd.f32 %v963, %v830
        %v965 = vadd.f32 %v964, %v834
        %v966 = vrot.slane %v965, 4
        %v967 = vadd.f32 %v965, %v966
        %v968 = vrot.slane %v967, 2
        %v969 = vadd.f32 %v967, %v968
        %v970 = vrot.slane %v969, 1
        %v971 = vadd.f32 %v969, %v970
        %v972 = vadd.f32 %v762, %v766
        %v973 = vadd.f32 %v972, %v772
        %v974 = vadd.f32 %v973, %v776
        %v975 = vadd.f32 %v974, %v782
        %v976 = vadd.f32 %v975, %v786
        %v977 = vadd.f32 %v976, %v792
        %v978 = vadd.f32 %v977, %v796
        %v979 = vadd.f32 %v978, %v802
        %v980 = vadd.f32 %v979, %v806
        %v981 = vadd.f32 %v980, %v812
        %v982 = vadd.f32 %v981, %v816
        %v983 = vadd.f32 %v982, %v822
        %v984 = vadd.f32 %v983, %v826
        %v985 = vadd.f32 %v984, %v832
        %v986 = vadd.f32 %v985, %v836
        %v987 = vrot.slane %v986, 4
        %v988 = vadd.f32 %v986, %v987
        %v989 = vrot.slane %v988, 2
        %v990 = vadd.f32 %v988, %v989
        %v991 = vrot.slane %v990, 1
        %v992 = vadd.f32 %v990, %v991
        %v993 = vadd.f32 %v873, %v877
        %v994 = vadd.f32 %v993, %v883
        %v995 = vadd.f32 %v994, %v887
        %v996 = vadd.f32 %v995, %v893
        %v997 = vadd.f32 %v996, %v897
        %v998 = vadd.f32 %v997, %v903
        %v999 = vadd.f32 %v998, %v907
        %v1000 = vadd.f32 %v999, %v913
        %v1001 = vadd.f32 %v1000, %v917
        %v1002 = vadd.f32 %v1001, %v923
        %v1003 = vadd.f32 %v1002, %v927
        %v1004 = vadd.f32 %v1003, %v933
        %v1005 = vadd.f32 %v1004, %v937
        %v1006 = vadd.f32 %v1005, %v943
        %v1007 = vadd.f32 %v1006, %v947
        %v1008 = vrot.slane %v1007, 4
        %v1009 = vadd.f32 %v1007, %v1008
        %v1010 = vrot.slane %v1009, 2
        %v1011 = vadd.f32 %v1009, %v1010
        %v1012 = vrot.slane %v1011, 1
        %v1013 = vadd.f32 %v1011, %v1012
        %v1014 = vadd.f32 %v875, %v879
        %v1015 = vadd.f32 %v1014, %v885
        %v1016 = vadd.f32 %v1015, %v889
        %v1017 = vadd.f32 %v1016, %v895
        %v1018 = vadd.f32 %v1017, %v899
        %v1019 = vadd.f32 %v1018, %v905
        %v1020 = vadd.f32 %v1019, %v909
        %v1021 = vadd.f32 %v1020, %v915
        %v1022 = vadd.f32 %v1021, %v919
        %v1023 = vadd.f32 %v1022, %v925
        %v1024 = vadd.f32 %v1023, %v929
        %v1025 = vadd.f32 %v1024, %v935
        %v1026 = vadd.f32 %v1025, %v939
        %v1027 = vadd.f32 %v1026, %v945
        %v1028 = vadd.f32 %v1027, %v949
        %v1029 = vrot.slane %v1028, 4
        %v1030 = vadd.f32 %v1028, %v1029
        %v1031 = vrot.slane %v1030, 2
        %v1032 = vadd.f32 %v1030, %v1031
        %v1033 = vrot.slane %v1032, 1
        %v1034 = vadd.f32 %v1032, %v1033
        %v1035 = vrcp.pop 128.0
        %v1036 = vmul.f32 %v971, %v1035
        %v1037 = vmul.f32 %v992, %v1035
        %v1038 = vmul.f32 %v1013, %v1035
        %v1039 = vmul.f32 %v1034, %v1035
        %v1040 = vsub.f32 %v760, %v1036
        %v1041 = vsub.f32 %v762, %v1037
        %v1042 = vsub.f32 %v873, %v1038
        %v1043 = vsub.f32 %v875, %v1039
        %v1044 = vsub.f32 %v764, %v1036
        %v1045 = vsub.f32 %v766, %v1037
        %v1046 = vsub.f32 %v877, %v1038
        %v1047 = vsub.f32 %v879, %v1039
        %v1048 = vsub.f32 %v770, %v1036
        %v1049 = vsub.f32 %v772, %v1037
        %v1050 = vsub.f32 %v883, %v1038
        %v1051 = vsub.f32 %v885, %v1039
        %v1052 = vsub.f32 %v774, %v1036
        %v1053 = vsub.f32 %v776, %v1037
        %v1054 = vsub.f32 %v887, %v1038
        %v1055 = vsub.f32 %v889, %v1039
        %v1056 = vsub.f32 %v780, %v1036
        %v1057 = vsub.f32 %v782, %v1037
        %v1058 = vsub.f32 %v893, %v1038
        %v1059 = vsub.f32 %v895, %v1039
        %v1060 = vsub.f32 %v784, %v1036
        %v1061 = vsub.f32 %v786, %v1037
        %v1062 = vsub.f32 %v897, %v1038
        %v1063 = vsub.f32 %v899, %v1039
        %v1064 = vsub.f32 %v790, %v1036
        %v1065 = vsub.f32 %v792, %v1037
        %v1066 = vsub.f32 %v903, %v1038
        %v1067 = vsub.f32 %v905, %v1039
        %v1068 = vsub.f32 %v794, %v1036
        %v1069 = vsub.f32 %v796, %v1037
        %v1070 = vsub.f32 %v907, %v1038
        %v1071 = vsub.f32 %v909, %v1039
        %v1072 = vsub.f32 %v800, %v1036
        %v1073 = vsub.f32 %v802, %v1037
        %v1074 = vsub.f32 %v913, %v1038
        %v1075 = vsub.f32 %v915, %v1039
        %v1076 = vsub.f32 %v804, %v1036
        %v1077 = vsub.f32 %v806, %v1037
        %v1078 = vsub.f32 %v917, %v1038
        %v1079 = vsub.f32 %v919, %v1039
        %v1080 = vsub.f32 %v810, %v1036
        %v1081 = vsub.f32 %v812, %v1037
        %v1082 = vsub.f32 %v923, %v1038
        %v1083 = vsub.f32 %v925, %v1039
        %v1084 = vsub.f32 %v814, %v1036
        %v1085 = vsub.f32 %v816, %v1037
        %v1086 = vsub.f32 %v927, %v1038
        %v1087 = vsub.f32 %v929, %v1039
        %v1088 = vsub.f32 %v820, %v1036
        %v1089 = vsub.f32 %v822, %v1037
        %v1090 = vsub.f32 %v933, %v1038
        %v1091 = vsub.f32 %v935, %v1039
        %v1092 = vsub.f32 %v824, %v1036
        %v1093 = vsub.f32 %v826, %v1037
        %v1094 = vsub.f32 %v937, %v1038
        %v1095 = vsub.f32 %v939, %v1039
        %v1096 = vsub.f32 %v830, %v1036
        %v1097 = vsub.f32 %v832, %v1037
        %v1098 = vsub.f32 %v943, %v1038
        %v1099 = vsub.f32 %v945, %v1039
        %v1100 = vsub.f32 %v834, %v1036
        %v1101 = vsub.f32 %v836, %v1037
        %v1102 = vsub.f32 %v947, %v1038
        %v1103 = vsub.f32 %v949, %v1039
        %v1104 = vmul.f32 %v1040, %v1040
        %v1105 = vmul.f32 %v1041, %v1041
        %v1106 = vmul.f32 %v1042, %v1042
        %v1107 = vmul.f32 %v1043, %v1043
        %v1108 = vmul.f32 %v1044, %v1044
        %v1109 = vmul.f32 %v1045, %v1045
        %v1110 = vmul.f32 %v1046, %v1046
        %v1111 = vmul.f32 %v1047, %v1047
        %v1112 = vmul.f32 %v1048, %v1048
        %v1113 = vmul.f32 %v1049, %v1049
        %v1114 = vmul.f32 %v1050, %v1050
        %v1115 = vmul.f32 %v1051, %v1051
        %v1116 = vmul.f32 %v1052, %v1052
        %v1117 = vmul.f32 %v1053, %v1053
        %v1118 = vmul.f32 %v1054, %v1054
        %v1119 = vmul.f32 %v1055, %v1055
        %v1120 = vmul.f32 %v1056, %v1056
        %v1121 = vmul.f32 %v1057, %v1057
        %v1122 = vmul.f32 %v1058, %v1058
        %v1123 = vmul.f32 %v1059, %v1059
        %v1124 = vmul.f32 %v1060, %v1060
        %v1125 = vmul.f32 %v1061, %v1061
        %v1126 = vmul.f32 %v1062, %v1062
        %v1127 = vmul.f32 %v1063, %v1063
        %v1128 = vmul.f32 %v1064, %v1064
        %v1129 = vmul.f32 %v1065, %v1065
        %v1130 = vmul.f32 %v1066, %v1066
        %v1131 = vmul.f32 %v1067, %v1067
        %v1132 = vmul.f32 %v1068, %v1068
        %v1133 = vmul.f32 %v1069, %v1069
        %v1134 = vmul.f32 %v1070, %v1070
        %v1135 = vmul.f32 %v1071, %v1071
        %v1136 = vmul.f32 %v1072, %v1072
        %v1137 = vmul.f32 %v1073, %v1073
        %v1138 = vmul.f32 %v1074, %v1074
        %v1139 = vmul.f32 %v1075, %v1075
        %v1140 = vmul.f32 %v1076, %v1076
        %v1141 = vmul.f32 %v1077, %v1077
        %v1142 = vmul.f32 %v1078, %v1078
        %v1143 = vmul.f32 %v1079, %v1079
        %v1144 = vmul.f32 %v1080, %v1080
        %v1145 = vmul.f32 %v1081, %v1081
        %v1146 = vmul.f32 %v1082, %v1082
        %v1147 = vmul.f32 %v1083, %v1083
        %v1148 = vmul.f32 %v1084, %v1084
        %v1149 = vmul.f32 %v1085, %v1085
        %v1150 = vmul.f32 %v1086, %v1086
        %v1151 = vmul.f32 %v1087, %v1087
        %v1152 = vmul.f32 %v1088, %v1088
        %v1153 = vmul.f32 %v1089, %v1089
        %v1154 = vmul.f32 %v1090, %v1090
        %v1155 = vmul.f32 %v1091, %v1091
        %v1156 = vmul.f32 %v1092, %v1092
        %v1157 = vmul.f32 %v1093, %v1093
        %v1158 = vmul.f32 %v1094, %v1094
        %v1159 = vmul.f32 %v1095, %v1095
        %v1160 = vmul.f32 %v1096, %v1096
        %v1161 = vmul.f32 %v1097, %v1097
        %v1162 = vmul.f32 %v1098, %v1098
        %v1163 = vmul.f32 %v1099, %v1099
        %v1164 = vmul.f32 %v1100, %v1100
        %v1165 = vmul.f32 %v1101, %v1101
        %v1166 = vmul.f32 %v1102, %v1102
        %v1167 = vmul.f32 %v1103, %v1103
        %v1168 = vadd.f32 %v1104, %v1108
        %v1169 = vadd.f32 %v1168, %v1112
        %v1170 = vadd.f32 %v1169, %v1116
        %v1171 = vadd.f32 %v1170, %v1120
        %v1172 = vadd.f32 %v1171, %v1124
        %v1173 = vadd.f32 %v1172, %v1128
        %v1174 = vadd.f32 %v1173, %v1132
        %v1175 = vadd.f32 %v1174, %v1136
        %v1176 = vadd.f32 %v1175, %v1140
        %v1177 = vadd.f32 %v1176, %v1144
        %v1178 = vadd.f32 %v1177, %v1148
        %v1179 = vadd.f32 %v1178, %v1152
        %v1180 = vadd.f32 %v1179, %v1156
        %v1181 = vadd.f32 %v1180, %v1160
        %v1182 = vadd.f32 %v1181, %v1164
        %v1183 = vrot.slane %v1182, 4
        %v1184 = vadd.f32 %v1182, %v1183
        %v1185 = vrot.slane %v1184, 2
        %v1186 = vadd.f32 %v1184, %v1185
        %v1187 = vrot.slane %v1186, 1
        %v1188 = vadd.f32 %v1186, %v1187
        %v1189 = vadd.f32 %v1105, %v1109
        %v1190 = vadd.f32 %v1189, %v1113
        %v1191 = vadd.f32 %v1190, %v1117
        %v1192 = vadd.f32 %v1191, %v1121
        %v1193 = vadd.f32 %v1192, %v1125
        %v1194 = vadd.f32 %v1193, %v1129
        %v1195 = vadd.f32 %v1194, %v1133
        %v1196 = vadd.f32 %v1195, %v1137
        %v1197 = vadd.f32 %v1196, %v1141
        %v1198 = vadd.f32 %v1197, %v1145
        %v1199 = vadd.f32 %v1198, %v1149
        %v1200 = vadd.f32 %v1199, %v1153
        %v1201 = vadd.f32 %v1200, %v1157
        %v1202 = vadd.f32 %v1201, %v1161
        %v1203 = vadd.f32 %v1202, %v1165
        %v1204 = vrot.slane %v1203, 4
        %v1205 = vadd.f32 %v1203, %v1204
        %v1206 = vrot.slane %v1205, 2
        %v1207 = vadd.f32 %v1205, %v1206
        %v1208 = vrot.slane %v1207, 1
        %v1209 = vadd.f32 %v1207, %v1208
        %v1210 = vadd.f32 %v1106, %v1110
        %v1211 = vadd.f32 %v1210, %v1114
        %v1212 = vadd.f32 %v1211, %v1118
        %v1213 = vadd.f32 %v1212, %v1122
        %v1214 = vadd.f32 %v1213, %v1126
        %v1215 = vadd.f32 %v1214, %v1130
        %v1216 = vadd.f32 %v1215, %v1134
        %v1217 = vadd.f32 %v1216, %v1138
        %v1218 = vadd.f32 %v1217, %v1142
        %v1219 = vadd.f32 %v1218, %v1146
        %v1220 = vadd.f32 %v1219, %v1150
        %v1221 = vadd.f32 %v1220, %v1154
        %v1222 = vadd.f32 %v1221, %v1158
        %v1223 = vadd.f32 %v1222, %v1162
        %v1224 = vadd.f32 %v1223, %v1166
        %v1225 = vrot.slane %v1224, 4
        %v1226 = vadd.f32 %v1224, %v1225
        %v1227 = vrot.slane %v1226, 2
        %v1228 = vadd.f32 %v1226, %v1227
        %v1229 = vrot.slane %v1228, 1
        %v1230 = vadd.f32 %v1228, %v1229
        %v1231 = vadd.f32 %v1107, %v1111
        %v1232 = vadd.f32 %v1231, %v1115
        %v1233 = vadd.f32 %v1232, %v1119
        %v1234 = vadd.f32 %v1233, %v1123
        %v1235 = vadd.f32 %v1234, %v1127
        %v1236 = vadd.f32 %v1235, %v1131
        %v1237 = vadd.f32 %v1236, %v1135
        %v1238 = vadd.f32 %v1237, %v1139
        %v1239 = vadd.f32 %v1238, %v1143
        %v1240 = vadd.f32 %v1239, %v1147
        %v1241 = vadd.f32 %v1240, %v1151
        %v1242 = vadd.f32 %v1241, %v1155
        %v1243 = vadd.f32 %v1242, %v1159
        %v1244 = vadd.f32 %v1243, %v1163
        %v1245 = vadd.f32 %v1244, %v1167
        %v1246 = vrot.slane %v1245, 4
        %v1247 = vadd.f32 %v1245, %v1246
        %v1248 = vrot.slane %v1247, 2
        %v1249 = vadd.f32 %v1247, %v1248
        %v1250 = vrot.slane %v1249, 1
        %v1251 = vadd.f32 %v1249, %v1250
        %v1252 = vmul.f32 %v1188, %v1035
        %v1253 = vmul.f32 %v1209, %v1035
        %v1254 = vmul.f32 %v1230, %v1035
        %v1255 = vmul.f32 %v1251, %v1035
        %v1256 = vadd.f32 %v1252, 1e-05
        %v1257 = vadd.f32 %v1253, 1e-05
        %v1258 = vadd.f32 %v1254, 1e-05
        %v1259 = vadd.f32 %v1255, 1e-05
        %v1260 = vrsqrt.pop %v1256
        %v1261 = vrsqrt.pop %v1257
        %v1262 = vrsqrt.pop %v1258
        %v1263 = vrsqrt.pop %v1259
        %v1264 = vmul.f32 %v1040, %v1260
        %v1265 = vmul.f32 %v1041, %v1261
        %v1266 = vmul.f32 %v1042, %v1262
        %v1267 = vmul.f32 %v1043, %v1263
        %v1268 = vmul.f32 %v1044, %v1260
        %v1269 = vmul.f32 %v1045, %v1261
        %v1270 = vmul.f32 %v1046, %v1262
        %v1271 = vmul.f32 %v1047, %v1263
        %v1272 = vmul.f32 %v1048, %v1260
        %v1273 = vmul.f32 %v1049, %v1261
        %v1274 = vmul.f32 %v1050, %v1262
        %v1275 = vmul.f32 %v1051, %v1263
        %v1276 = vmul.f32 %v1052, %v1260
        %v1277 = vmul.f32 %v1053, %v1261
        %v1278 = vmul.f32 %v1054, %v1262
        %v1279 = vmul.f32 %v1055, %v1263
        %v1280 = vmul.f32 %v1056, %v1260
        %v1281 = vmul.f32 %v1057, %v1261
        %v1282 = vmul.f32 %v1058, %v1262
        %v1283 = vmul.f32 %v1059, %v1263
        %v1284 = vmul.f32 %v1060, %v1260
        %v1285 = vmul.f32 %v1061, %v1261
        %v1286 = vmul.f32 %v1062, %v1262
        %v1287 = vmul.f32 %v1063, %v1263
        %v1288 = vmul.f32 %v1064, %v1260
        %v1289 = vmul.f32 %v1065, %v1261
        %v1290 = vmul.f32 %v1066, %v1262
        %v1291 = vmul.f32 %v1067, %v1263
        %v1292 = vmul.f32 %v1068, %v1260
        %v1293 = vmul.f32 %v1069, %v1261
        %v1294 = vmul.f32 %v1070, %v1262
        %v1295 = vmul.f32 %v1071, %v1263
        %v1296 = vmul.f32 %v1072, %v1260
        %v1297 = vmul.f32 %v1073, %v1261
        %v1298 = vmul.f32 %v1074, %v1262
        %v1299 = vmul.f32 %v1075, %v1263
        %v1300 = vmul.f32 %v1076, %v1260
        %v1301 = vmul.f32 %v1077, %v1261
        %v1302 = vmul.f32 %v1078, %v1262
        %v1303 = vmul.f32 %v1079, %v1263
        %v1304 = vmul.f32 %v1080, %v1260
        %v1305 = vmul.f32 %v1081, %v1261
        %v1306 = vmul.f32 %v1082, %v1262
        %v1307 = vmul.f32 %v1083, %v1263
        %v1308 = vmul.f32 %v1084, %v1260
        %v1309 = vmul.f32 %v1085, %v1261
        %v1310 = vmul.f32 %v1086, %v1262
        %v1311 = vmul.f32 %v1087, %v1263
        %v1312 = vmul.f32 %v1088, %v1260
        %v1313 = vmul.f32 %v1089, %v1261
        %v1314 = vmul.f32 %v1090, %v1262
        %v1315 = vmul.f32 %v1091, %v1263
        %v1316 = vmul.f32 %v1092, %v1260
        %v1317 = vmul.f32 %v1093, %v1261
        %v1318 = vmul.f32 %v1094, %v1262
        %v1319 = vmul.f32 %v1095, %v1263
        %v1320 = vmul.f32 %v1096, %v1260
        %v1321 = vmul.f32 %v1097, %v1261
        %v1322 = vmul.f32 %v1098, %v1262
        %v1323 = vmul.f32 %v1099, %v1263
        %v1324 = vmul.f32 %v1100, %v1260
        %v1325 = vmul.f32 %v1101, %v1261
        %v1326 = vmul.f32 %v1102, %v1262
        %v1327 = vmul.f32 %v1103, %v1263
        %v1328 = vmax.f32 %v1264, 0.0
        %v1329 = vmax.f32 %v1265, 0.0
        %v1330 = vmax.f32 %v1266, 0.0
        %v1331 = vmax.f32 %v1267, 0.0
        %v1332 = vmax.f32 %v1268, 0.0
        %v1333 = vmax.f32 %v1269, 0.0
        %v1334 = vmax.f32 %v1270, 0.0
        %v1335 = vmax.f32 %v1271, 0.0
        %v1336 = vmax.f32 %v1272, 0.0
        %v1337 = vmax.f32 %v1273, 0.0
        %v1338 = vmax.f32 %v1274, 0.0
        %v1339 = vmax.f32 %v1275, 0.0
        %v1340 = vmax.f32 %v1276, 0.0
        %v1341 = vmax.f32 %v1277, 0.0
        %v1342 = vmax.f32 %v1278, 0.0
        %v1343 = vmax.f32 %v1279, 0.0
        %v1344 = vmax.f32 %v1280, 0.0
        %v1345 = vmax.f32 %v1281, 0.0
        %v1346 = vmax.f32 %v1282, 0.0
        %v1347 = vmax.f32 %v1283, 0.0
        %v1348 = vmax.f32 %v1284, 0.0
        %v1349 = vmax.f32 %v1285, 0.0
        %v1350 = vmax.f32 %v1286, 0.0
        %v1351 = vmax.f32 %v1287, 0.0
        %v1352 = vmax.f32 %v1288, 0.0
        %v1353 = vmax.f32 %v1289, 0.0
        %v1354 = vmax.f32 %v1290, 0.0
        %v1355 = vmax.f32 %v1291, 0.0
        %v1356 = vmax.f32 %v1292, 0.0
        %v1357 = vmax.f32 %v1293, 0.0
        %v1358 = vmax.f32 %v1294, 0.0
        %v1359 = vmax.f32 %v1295, 0.0
        %v1360 = vmax.f32 %v1296, 0.0
        %v1361 = vmax.f32 %v1297, 0.0
        %v1362 = vmax.f32 %v1298, 0.0
        %v1363 = vmax.f32 %v1299, 0.0
        %v1364 = vmax.f32 %v1300, 0.0
        %v1365 = vmax.f32 %v1301, 0.0
        %v1366 = vmax.f32 %v1302, 0.0
        %v1367 = vmax.f32 %v1303, 0.0
        %v1368 = vmax.f32 %v1304, 0.0
        %v1369 = vmax.f32 %v1305, 0.0
        %v1370 = vmax.f32 %v1306, 0.0
        %v1371 = vmax.f32 %v1307, 0.0
        %v1372 = vmax.f32 %v1308, 0.0
        %v1373 = vmax.f32 %v1309, 0.0
        %v1374 = vmax.f32 %v1310, 0.0
        %v1375 = vmax.f32 %v1311, 0.0
        %v1376 = vmax.f32 %v1312, 0.0
        %v1377 = vmax.f32 %v1313, 0.0
        %v1378 = vmax.f32 %v1314, 0.0
        %v1379 = vmax.f32 %v1315, 0.0
        %v1380 = vmax.f32 %v1316, 0.0
        %v1381 = vmax.f32 %v1317, 0.0
        %v1382 = vmax.f32 %v1318, 0.0
        %v1383 = vmax.f32 %v1319, 0.0
        %v1384 = vmax.f32 %v1320, 0.0
        %v1385 = vmax.f32 %v1321, 0.0
        %v1386 = vmax.f32 %v1322, 0.0
        %v1387 = vmax.f32 %v1323, 0.0
        %v1388 = vmax.f32 %v1324, 0.0
        %v1389 = vmax.f32 %v1325, 0.0
        %v1390 = vmax.f32 %v1326, 0.0
        %v1391 = vmax.f32 %v1327, 0.0
        %v1392 = vpack.c.bf16 %v1332, %v1328
        %v1393 = vpack.c.bf16 %v1333, %v1329
        %v1394 = vpack.c.bf16 %v1334, %v1330
        %v1395 = vpack.c.bf16 %v1335, %v1331
        %v1396 = vpack.c.bf16 %v1340, %v1336
        %v1397 = vpack.c.bf16 %v1341, %v1337
        %v1398 = vpack.c.bf16 %v1342, %v1338
        %v1399 = vpack.c.bf16 %v1343, %v1339
        %v1400 = vpack.c.bf16 %v1348, %v1344
        %v1401 = vpack.c.bf16 %v1349, %v1345
        %v1402 = vpack.c.bf16 %v1350, %v1346
        %v1403 = vpack.c.bf16 %v1351, %v1347
        %v1404 = vpack.c.bf16 %v1356, %v1352
        %v1405 = vpack.c.bf16 %v1357, %v1353
        %v1406 = vpack.c.bf16 %v1358, %v1354
        %v1407 = vpack.c.bf16 %v1359, %v1355
        %v1408 = vpack.c.bf16 %v1364, %v1360
        %v1409 = vpack.c.bf16 %v1365, %v1361
        %v1410 = vpack.c.bf16 %v1366, %v1362
        %v1411 = vpack.c.bf16 %v1367, %v1363
        %v1412 = vpack.c.bf16 %v1372, %v1368
        %v1413 = vpack.c.bf16 %v1373, %v1369
        %v1414 = vpack.c.bf16 %v1374, %v1370
        %v1415 = vpack.c.bf16 %v1375, %v1371
        %v1416 = vpack.c.bf16 %v1380, %v1376
        %v1417 = vpack.c.bf16 %v1381, %v1377
        %v1418 = vpack.c.bf16 %v1382, %v1378
        %v1419 = vpack.c.bf16 %v1383, %v1379
        %v1420 = vpack.c.bf16 %v1388, %v1384
        %v1421 = vpack.c.bf16 %v1389, %v1385
        %v1422 = vpack.c.bf16 %v1390, %v1386
        %v1423 = vpack.c.bf16 %v1391, %v1387
        %v1424 = vld [vmem:[#allocation5] sm:$0xff]
        %v1425 = vld [vmem:[#allocation5 + $0x8] sm:$0xff]
        %v1426 = vld [vmem:[#allocation5 + $0x10] sm:$0xff]
        %v1427 = vld [vmem:[#allocation5 + $0x18] sm:$0xff]
        %v1428 = vld [vmem:[#allocation5 + $0x20] sm:$0xff]
        %v1429 = vld [vmem:[#allocation5 + $0x28] sm:$0xff]
        %v1430 = vld [vmem:[#allocation5 + $0x30] sm:$0xff]
        %v1431 = vld [vmem:[#allocation5 + $0x38] sm:$0xff]
        %v1432 = vld [vmem:[#allocation5 + $0x40] sm:$0xff]
        %v1433 = vld [vmem:[#allocation5 + $0x48] sm:$0xff]
        %v1434 = vld [vmem:[#allocation5 + $0x50] sm:$0xff]
        %v1435 = vld [vmem:[#allocation5 + $0x58] sm:$0xff]
        %v1436 = vld [vmem:[#allocation5 + $0x60] sm:$0xff]
        %v1437 = vld [vmem:[#allocation5 + $0x68] sm:$0xff]
        %v1438 = vld [vmem:[#allocation5 + $0x70] sm:$0xff]
        %v1439 = vld [vmem:[#allocation5 + $0x78] sm:$0xff]
        %v1440 = vld [vmem:[#allocation5 + $0x80] sm:$0xff]
        %v1441 = vld [vmem:[#allocation5 + $0x88] sm:$0xff]
        %v1442 = vld [vmem:[#allocation5 + $0x90] sm:$0xff]
        %v1443 = vld [vmem:[#allocation5 + $0x98] sm:$0xff]
        %v1444 = vld [vmem:[#allocation5 + $0xa0] sm:$0xff]
        %v1445 = vld [vmem:[#allocation5 + $0xa8] sm:$0xff]
        %v1446 = vld [vmem:[#allocation5 + $0xb0] sm:$0xff]
        %v1447 = vld [vmem:[#allocation5 + $0xb8] sm:$0xff]
        %v1448 = vld [vmem:[#allocation5 + $0xc0] sm:$0xff]
        %v1449 = vld [vmem:[#allocation5 + $0xc8] sm:$0xff]
        %v1450 = vld [vmem:[#allocation5 + $0xd0] sm:$0xff]
        %v1451 = vld [vmem:[#allocation5 + $0xd8] sm:$0xff]
        %v1452 = vld [vmem:[#allocation5 + $0xe0] sm:$0xff]
        %v1453 = vld [vmem:[#allocation5 + $0xe8] sm:$0xff]
        %v1454 = vld [vmem:[#allocation5 + $0xf0] sm:$0xff]
        %v1455 = vld [vmem:[#allocation5 + $0xf8] sm:$0xff]
        %v1456 = vld [vmem:[#allocation5 + $0x100] sm:$0xff]
        %v1457 = vld [vmem:[#allocation5 + $0x108] sm:$0xff]
        %v1458 = vld [vmem:[#allocation5 + $0x110] sm:$0xff]
        %v1459 = vld [vmem:[#allocation5 + $0x118] sm:$0xff]
        %v1460 = vld [vmem:[#allocation5 + $0x120] sm:$0xff]
        %v1461 = vld [vmem:[#allocation5 + $0x128] sm:$0xff]
        %v1462 = vld [vmem:[#allocation5 + $0x130] sm:$0xff]
        %v1463 = vld [vmem:[#allocation5 + $0x138] sm:$0xff]
        %v1464 = vld [vmem:[#allocation5 + $0x140] sm:$0xff]
        %v1465 = vld [vmem:[#allocation5 + $0x148] sm:$0xff]
        %v1466 = vld [vmem:[#allocation5 + $0x150] sm:$0xff]
        %v1467 = vld [vmem:[#allocation5 + $0x158] sm:$0xff]
        %v1468 = vld [vmem:[#allocation5 + $0x160] sm:$0xff]
        %v1469 = vld [vmem:[#allocation5 + $0x168] sm:$0xff]
        %v1470 = vld [vmem:[#allocation5 + $0x170] sm:$0xff]
        %v1471 = vld [vmem:[#allocation5 + $0x178] sm:$0xff]
        %v1472 = vld [vmem:[#allocation5 + $0x180] sm:$0xff]
        %v1473 = vld [vmem:[#allocation5 + $0x188] sm:$0xff]
        %v1474 = vld [vmem:[#allocation5 + $0x190] sm:$0xff]
        %v1475 = vld [vmem:[#allocation5 + $0x198] sm:$0xff]
        %v1476 = vld [vmem:[#allocation5 + $0x1a0] sm:$0xff]
        %v1477 = vld [vmem:[#allocation5 + $0x1a8] sm:$0xff]
        %v1478 = vld [vmem:[#allocation5 + $0x1b0] sm:$0xff]
        %v1479 = vld [vmem:[#allocation5 + $0x1b8] sm:$0xff]
        %v1480 = vld [vmem:[#allocation5 + $0x1c0] sm:$0xff]
        %v1481 = vld [vmem:[#allocation5 + $0x1c8] sm:$0xff]
        %v1482 = vld [vmem:[#allocation5 + $0x1d0] sm:$0xff]
        %v1483 = vld [vmem:[#allocation5 + $0x1d8] sm:$0xff]
        %v1484 = vld [vmem:[#allocation5 + $0x1e0] sm:$0xff]
        %v1485 = vld [vmem:[#allocation5 + $0x1e8] sm:$0xff]
        %v1486 = vld [vmem:[#allocation5 + $0x1f0] sm:$0xff]
        %v1487 = vld [vmem:[#allocation5 + $0x1f8] sm:$0xff]
        %v1488 = vld [vmem:[#allocation5 + $0x200] sm:$0xff]
        %v1489 = vld [vmem:[#allocation5 + $0x208] sm:$0xff]
        %v1490 = vld [vmem:[#allocation5 + $0x210] sm:$0xff]
        %v1491 = vld [vmem:[#allocation5 + $0x218] sm:$0xff]
        %v1492 = vld [vmem:[#allocation5 + $0x220] sm:$0xff]
        %v1493 = vld [vmem:[#allocation5 + $0x228] sm:$0xff]
        %v1494 = vld [vmem:[#allocation5 + $0x230] sm:$0xff]
        %v1495 = vld [vmem:[#allocation5 + $0x238] sm:$0xff]
        %v1496 = vld [vmem:[#allocation5 + $0x240] sm:$0xff]
        %v1497 = vld [vmem:[#allocation5 + $0x248] sm:$0xff]
        %v1498 = vld [vmem:[#allocation5 + $0x250] sm:$0xff]
        %v1499 = vld [vmem:[#allocation5 + $0x258] sm:$0xff]
        %v1500 = vld [vmem:[#allocation5 + $0x260] sm:$0xff]
        %v1501 = vld [vmem:[#allocation5 + $0x268] sm:$0xff]
        %v1502 = vld [vmem:[#allocation5 + $0x270] sm:$0xff]
        %v1503 = vld [vmem:[#allocation5 + $0x278] sm:$0xff]
        %v1504 = vld [vmem:[#allocation5 + $0x280] sm:$0xff]
        %v1505 = vld [vmem:[#allocation5 + $0x288] sm:$0xff]
        %v1506 = vld [vmem:[#allocation5 + $0x290] sm:$0xff]
        %v1507 = vld [vmem:[#allocation5 + $0x298] sm:$0xff]
        %v1508 = vld [vmem:[#allocation5 + $0x2a0] sm:$0xff]
        %v1509 = vld [vmem:[#allocation5 + $0x2a8] sm:$0xff]
        %v1510 = vld [vmem:[#allocation5 + $0x2b0] sm:$0xff]
        %v1511 = vld [vmem:[#allocation5 + $0x2b8] sm:$0xff]
        %v1512 = vld [vmem:[#allocation5 + $0x2c0] sm:$0xff]
        %v1513 = vld [vmem:[#allocation5 + $0x2c8] sm:$0xff]
        %v1514 = vld [vmem:[#allocation5 + $0x2d0] sm:$0xff]
        %v1515 = vld [vmem:[#allocation5 + $0x2d8] sm:$0xff]
        %v1516 = vld [vmem:[#allocation5 + $0x2e0] sm:$0xff]
        %v1517 = vld [vmem:[#allocation5 + $0x2e8] sm:$0xff]
        %v1518 = vld [vmem:[#allocation5 + $0x2f0] sm:$0xff]
        %v1519 = vld [vmem:[#allocation5 + $0x2f8] sm:$0xff]
        %v1520 = vld [vmem:[#allocation5 + $0x300] sm:$0xff]
        %v1521 = vld [vmem:[#allocation5 + $0x308] sm:$0xff]
        %v1522 = vld [vmem:[#allocation5 + $0x310] sm:$0xff]
        %v1523 = vld [vmem:[#allocation5 + $0x318] sm:$0xff]
        %v1524 = vld [vmem:[#allocation5 + $0x320] sm:$0xff]
        %v1525 = vld [vmem:[#allocation5 + $0x328] sm:$0xff]
        %v1526 = vld [vmem:[#allocation5 + $0x330] sm:$0xff]
        %v1527 = vld [vmem:[#allocation5 + $0x338] sm:$0xff]
        %v1528 = vld [vmem:[#allocation5 + $0x340] sm:$0xff]
        %v1529 = vld [vmem:[#allocation5 + $0x348] sm:$0xff]
        %v1530 = vld [vmem:[#allocation5 + $0x350] sm:$0xff]
        %v1531 = vld [vmem:[#allocation5 + $0x358] sm:$0xff]
        %v1532 = vld [vmem:[#allocation5 + $0x360] sm:$0xff]
        %v1533 = vld [vmem:[#allocation5 + $0x368] sm:$0xff]
        %v1534 = vld [vmem:[#allocation5 + $0x370] sm:$0xff]
        %v1535 = vld [vmem:[#allocation5 + $0x378] sm:$0xff]
        %v1536 = vld [vmem:[#allocation5 + $0x380] sm:$0xff]
        %v1537 = vld [vmem:[#allocation5 + $0x388] sm:$0xff]
        %v1538 = vld [vmem:[#allocation5 + $0x390] sm:$0xff]
        %v1539 = vld [vmem:[#allocation5 + $0x398] sm:$0xff]
        %v1540 = vld [vmem:[#allocation5 + $0x3a0] sm:$0xff]
        %v1541 = vld [vmem:[#allocation5 + $0x3a8] sm:$0xff]
        %v1542 = vld [vmem:[#allocation5 + $0x3b0] sm:$0xff]
        %v1543 = vld [vmem:[#allocation5 + $0x3b8] sm:$0xff]
        %v1544 = vld [vmem:[#allocation5 + $0x3c0] sm:$0xff]
        %v1545 = vld [vmem:[#allocation5 + $0x3c8] sm:$0xff]
        %v1546 = vld [vmem:[#allocation5 + $0x3d0] sm:$0xff]
        %v1547 = vld [vmem:[#allocation5 + $0x3d8] sm:$0xff]
        %v1548 = vld [vmem:[#allocation5 + $0x3e0] sm:$0xff]
        %v1549 = vld [vmem:[#allocation5 + $0x3e8] sm:$0xff]
        %v1550 = vld [vmem:[#allocation5 + $0x3f0] sm:$0xff]
        %v1551 = vld [vmem:[#allocation5 + $0x3f8] sm:$0xff]
        %v1680 = vunpack.c.l.b16 %v1424
        %v1681 = vunpack.c.h.b16 %v1424
        %v1682 = vunpack.c.l.b16 %v1425
        %v1683 = vunpack.c.h.b16 %v1425
        %v1684 = vunpack.c.l.b16 %v1426
        %v1685 = vunpack.c.h.b16 %v1426
        %v1686 = vunpack.c.l.b16 %v1427
        %v1687 = vunpack.c.h.b16 %v1427
        %v1688 = vunpack.c.l.b16 %v1428
        %v1689 = vunpack.c.h.b16 %v1428
        %v1690 = vunpack.c.l.b16 %v1429
        %v1691 = vunpack.c.h.b16 %v1429
        %v1692 = vunpack.c.l.b16 %v1430
        %v1693 = vunpack.c.h.b16 %v1430
        %v1694 = vunpack.c.l.b16 %v1431
        %v1695 = vunpack.c.h.b16 %v1431
        %v1696 = vunpack.c.l.b16 %v1432
        %v1697 = vunpack.c.h.b16 %v1432
        %v1698 = vunpack.c.l.b16 %v1433
        %v1699 = vunpack.c.h.b16 %v1433
        %v1700 = vunpack.c.l.b16 %v1434
        %v1701 = vunpack.c.h.b16 %v1434
        %v1702 = vunpack.c.l.b16 %v1435
        %v1703 = vunpack.c.h.b16 %v1435
        %v1704 = vunpack.c.l.b16 %v1436
        %v1705 = vunpack.c.h.b16 %v1436
        %v1706 = vunpack.c.l.b16 %v1437
        %v1707 = vunpack.c.h.b16 %v1437
        %v1708 = vunpack.c.l.b16 %v1438
        %v1709 = vunpack.c.h.b16 %v1438
        %v1710 = vunpack.c.l.b16 %v1439
        %v1711 = vunpack.c.h.b16 %v1439
        %v1712 = vunpack.c.l.b16 %v1440
        %v1713 = vunpack.c.h.b16 %v1440
        %v1714 = vunpack.c.l.b16 %v1441
        %v1715 = vunpack.c.h.b16 %v1441
        %v1716 = vunpack.c.l.b16 %v1442
        %v1717 = vunpack.c.h.b16 %v1442
        %v1718 = vunpack.c.l.b16 %v1443
        %v1719 = vunpack.c.h.b16 %v1443
        %v1720 = vunpack.c.l.b16 %v1444
        %v1721 = vunpack.c.h.b16 %v1444
        %v1722 = vunpack.c.l.b16 %v1445
        %v1723 = vunpack.c.h.b16 %v1445
        %v1724 = vunpack.c.l.b16 %v1446
        %v1725 = vunpack.c.h.b16 %v1446
        %v1726 = vunpack.c.l.b16 %v1447
        %v1727 = vunpack.c.h.b16 %v1447
        %v1728 = vunpack.c.l.b16 %v1448
        %v1729 = vunpack.c.h.b16 %v1448
        %v1730 = vunpack.c.l.b16 %v1449
        %v1731 = vunpack.c.h.b16 %v1449
        %v1732 = vunpack.c.l.b16 %v1450
        %v1733 = vunpack.c.h.b16 %v1450
        %v1734 = vunpack.c.l.b16 %v1451
        %v1735 = vunpack.c.h.b16 %v1451
        %v1736 = vunpack.c.l.b16 %v1452
        %v1737 = vunpack.c.h.b16 %v1452
        %v1738 = vunpack.c.l.b16 %v1453
        %v1739 = vunpack.c.h.b16 %v1453
        %v1740 = vunpack.c.l.b16 %v1454
        %v1741 = vunpack.c.h.b16 %v1454
        %v1742 = vunpack.c.l.b16 %v1455
        %v1743 = vunpack.c.h.b16 %v1455
        %v1744 = vunpack.c.l.b16 %v1456
        %v1745 = vunpack.c.h.b16 %v1456
        %v1746 = vunpack.c.l.b16 %v1457
        %v1747 = vunpack.c.h.b16 %v1457
        %v1748 = vunpack.c.l.b16 %v1458
        %v1749 = vunpack.c.h.b16 %v1458
        %v1750 = vunpack.c.l.b16 %v1459
        %v1751 = vunpack.c.h.b16 %v1459
        %v1752 = vunpack.c.l.b16 %v1460
        %v1753 = vunpack.c.h.b16 %v1460
        %v1754 = vunpack.c.l.b16 %v1461
        %v1755 = vunpack.c.h.b16 %v1461
        %v1756 = vunpack.c.l.b16 %v1462
        %v1757 = vunpack.c.h.b16 %v1462
        %v1758 = vunpack.c.l.b16 %v1463
        %v1759 = vunpack.c.h.b16 %v1463
        %v1760 = vunpack.c.l.b16 %v1464
        %v1761 = vunpack.c.h.b16 %v1464
        %v1762 = vunpack.c.l.b16 %v1465
        %v1763 = vunpack.c.h.b16 %v1465
        %v1764 = vunpack.c.l.b16 %v1466
        %v1765 = vunpack.c.h.b16 %v1466
        %v1766 = vunpack.c.l.b16 %v1467
        %v1767 = vunpack.c.h.b16 %v1467
        %v1768 = vunpack.c.l.b16 %v1468
        %v1769 = vunpack.c.h.b16 %v1468
        %v1770 = vunpack.c.l.b16 %v1469
        %v1771 = vunpack.c.h.b16 %v1469
        %v1772 = vunpack.c.l.b16 %v1470
        %v1773 = vunpack.c.h.b16 %v1470
        %v1774 = vunpack.c.l.b16 %v1471
        %v1775 = vunpack.c.h.b16 %v1471
        %v1776 = vunpack.c.l.b16 %v1472
        %v1777 = vunpack.c.h.b16 %v1472
        %v1778 = vunpack.c.l.b16 %v1473
        %v1779 = vunpack.c.h.b16 %v1473
        %v1780 = vunpack.c.l.b16 %v1474
        %v1781 = vunpack.c.h.b16 %v1474
        %v1782 = vunpack.c.l.b16 %v1475
        %v1783 = vunpack.c.h.b16 %v1475
        %v1784 = vunpack.c.l.b16 %v1476
        %v1785 = vunpack.c.h.b16 %v1476
        %v1786 = vunpack.c.l.b16 %v1477
        %v1787 = vunpack.c.h.b16 %v1477
        %v1788 = vunpack.c.l.b16 %v1478
        %v1789 = vunpack.c.h.b16 %v1478
        %v1790 = vunpack.c.l.b16 %v1479
        %v1791 = vunpack.c.h.b16 %v1479
        %v1792 = vunpack.c.l.b16 %v1480
        %v1793 = vunpack.c.h.b16 %v1480
        %v1794 = vunpack.c.l.b16 %v1481
        %v1795 = vunpack.c.h.b16 %v1481
        %v1796 = vunpack.c.l.b16 %v1482
        %v1797 = vunpack.c.h.b16 %v1482
        %v1798 = vunpack.c.l.b16 %v1483
        %v1799 = vunpack.c.h.b16 %v1483
        %v1800 = vunpack.c.l.b16 %v1484
        %v1801 = vunpack.c.h.b16 %v1484
        %v1802 = vunpack.c.l.b16 %v1485
        %v1803 = vunpack.c.h.b16 %v1485
        %v1804 = vunpack.c.l.b16 %v1486
        %v1805 = vunpack.c.h.b16 %v1486
        %v1806 = vunpack.c.l.b16 %v1487
        %v1807 = vunpack.c.h.b16 %v1487
        %v1808 = vunpack.c.l.b16 %v1488
        %v1809 = vunpack.c.h.b16 %v1488
        %v1810 = vunpack.c.l.b16 %v1489
        %v1811 = vunpack.c.h.b16 %v1489
        %v1812 = vunpack.c.l.b16 %v1490
        %v1813 = vunpack.c.h.b16 %v1490
        %v1814 = vunpack.c.l.b16 %v1491
        %v1815 = vunpack.c.h.b16 %v1491
        %v1816 = vunpack.c.l.b16 %v1492
        %v1817 = vunpack.c.h.b16 %v1492
        %v1818 = vunpack.c.l.b16 %v1493
        %v1819 = vunpack.c.h.b16 %v1493
        %v1820 = vunpack.c.l.b16 %v1494
        %v1821 = vunpack.c.h.b16 %v1494
        %v1822 = vunpack.c.l.b16 %v1495
        %v1823 = vunpack.c.h.b16 %v1495
        %v1824 = vunpack.c.l.b16 %v1496
        %v1825 = vunpack.c.h.b16 %v1496
        %v1826 = vunpack.c.l.b16 %v1497
        %v1827 = vunpack.c.h.b16 %v1497
        %v1828 = vunpack.c.l.b16 %v1498
        %v1829 = vunpack.c.h.b16 %v1498
        %v1830 = vunpack.c.l.b16 %v1499
        %v1831 = vunpack.c.h.b16 %v1499
        %v1832 = vunpack.c.l.b16 %v1500
        %v1833 = vunpack.c.h.b16 %v1500
        %v1834 = vunpack.c.l.b16 %v1501
        %v1835 = vunpack.c.h.b16 %v1501
        %v1836 = vunpack.c.l.b16 %v1502
        %v1837 = vunpack.c.h.b16 %v1502
        %v1838 = vunpack.c.l.b16 %v1503
        %v1839 = vunpack.c.h.b16 %v1503
        %v1840 = vunpack.c.l.b16 %v1504
        %v1841 = vunpack.c.h.b16 %v1504
        %v1842 = vunpack.c.l.b16 %v1505
        %v1843 = vunpack.c.h.b16 %v1505
        %v1844 = vunpack.c.l.b16 %v1506
        %v1845 = vunpack.c.h.b16 %v1506
        %v1846 = vunpack.c.l.b16 %v1507
        %v1847 = vunpack.c.h.b16 %v1507
        %v1848 = vunpack.c.l.b16 %v1508
        %v1849 = vunpack.c.h.b16 %v1508
        %v1850 = vunpack.c.l.b16 %v1509
        %v1851 = vunpack.c.h.b16 %v1509
        %v1852 = vunpack.c.l.b16 %v1510
        %v1853 = vunpack.c.h.b16 %v1510
        %v1854 = vunpack.c.l.b16 %v1511
        %v1855 = vunpack.c.h.b16 %v1511
        %v1856 = vunpack.c.l.b16 %v1512
        %v1857 = vunpack.c.h.b16 %v1512
        %v1858 = vunpack.c.l.b16 %v1513
        %v1859 = vunpack.c.h.b16 %v1513
        %v1860 = vunpack.c.l.b16 %v1514
        %v1861 = vunpack.c.h.b16 %v1514
        %v1862 = vunpack.c.l.b16 %v1515
        %v1863 = vunpack.c.h.b16 %v1515
        %v1864 = vunpack.c.l.b16 %v1516
        %v1865 = vunpack.c.h.b16 %v1516
        %v1866 = vunpack.c.l.b16 %v1517
        %v1867 = vunpack.c.h.b16 %v1517
        %v1868 = vunpack.c.l.b16 %v1518
        %v1869 = vunpack.c.h.b16 %v1518
        %v1870 = vunpack.c.l.b16 %v1519
        %v1871 = vunpack.c.h.b16 %v1519
        %v1872 = vunpack.c.l.b16 %v1520
        %v1873 = vunpack.c.h.b16 %v1520
        %v1874 = vunpack.c.l.b16 %v1521
        %v1875 = vunpack.c.h.b16 %v1521
        %v1876 = vunpack.c.l.b16 %v1522
        %v1877 = vunpack.c.h.b16 %v1522
        %v1878 = vunpack.c.l.b16 %v1523
        %v1879 = vunpack.c.h.b16 %v1523
        %v1880 = vunpack.c.l.b16 %v1524
        %v1881 = vunpack.c.h.b16 %v1524
        %v1882 = vunpack.c.l.b16 %v1525
        %v1883 = vunpack.c.h.b16 %v1525
        %v1884 = vunpack.c.l.b16 %v1526
        %v1885 = vunpack.c.h.b16 %v1526
        %v1886 = vunpack.c.l.b16 %v1527
        %v1887 = vunpack.c.h.b16 %v1527
        %v1888 = vunpack.c.l.b16 %v1528
        %v1889 = vunpack.c.h.b16 %v1528
        %v1890 = vunpack.c.l.b16 %v1529
        %v1891 = vunpack.c.h.b16 %v1529
        %v1892 = vunpack.c.l.b16 %v1530
        %v1893 = vunpack.c.h.b16 %v1530
        %v1894 = vunpack.c.l.b16 %v1531
        %v1895 = vunpack.c.h.b16 %v1531
        %v1896 = vunpack.c.l.b16 %v1532
        %v1897 = vunpack.c.h.b16 %v1532
        %v1898 = vunpack.c.l.b16 %v1533
        %v1899 = vunpack.c.h.b16 %v1533
        %v1900 = vunpack.c.l.b16 %v1534
        %v1901 = vunpack.c.h.b16 %v1534
        %v1902 = vunpack.c.l.b16 %v1535
        %v1903 = vunpack.c.h.b16 %v1535
        %v1904 = vunpack.c.l.b16 %v1536
        %v1905 = vunpack.c.h.b16 %v1536
        %v1906 = vunpack.c.l.b16 %v1537
        %v1907 = vunpack.c.h.b16 %v1537
        %v1908 = vunpack.c.l.b16 %v1538
        %v1909 = vunpack.c.h.b16 %v1538
        %v1910 = vunpack.c.l.b16 %v1539
        %v1911 = vunpack.c.h.b16 %v1539
        %v1912 = vunpack.c.l.b16 %v1540
        %v1913 = vunpack.c.h.b16 %v1540
        %v1914 = vunpack.c.l.b16 %v1541
        %v1915 = vunpack.c.h.b16 %v1541
        %v1916 = vunpack.c.l.b16 %v1542
        %v1917 = vunpack.c.h.b16 %v1542
        %v1918 = vunpack.c.l.b16 %v1543
        %v1919 = vunpack.c.h.b16 %v1543
        %v1920 = vunpack.c.l.b16 %v1544
        %v1921 = vunpack.c.h.b16 %v1544
        %v1922 = vunpack.c.l.b16 %v1545
        %v1923 = vunpack.c.h.b16 %v1545
        %v1924 = vunpack.c.l.b16 %v1546
        %v1925 = vunpack.c.h.b16 %v1546
        %v1926 = vunpack.c.l.b16 %v1547
        %v1927 = vunpack.c.h.b16 %v1547
        %v1928 = vunpack.c.l.b16 %v1548
        %v1929 = vunpack.c.h.b16 %v1548
        %v1930 = vunpack.c.l.b16 %v1549
        %v1931 = vunpack.c.h.b16 %v1549
        %v1932 = vunpack.c.l.b16 %v1550
        %v1933 = vunpack.c.h.b16 %v1550
        %v1934 = vunpack.c.l.b16 %v1551
        %v1935 = vunpack.c.h.b16 %v1551
        %v1936 = vpack.c.b16 %v1684, %v1680
        %v1937 = vpack.c.b16 %v1685, %v1681
        %v1938 = vpack.c.b16 %v1686, %v1682
        %v1939 = vpack.c.b16 %v1687, %v1683
        %v1940 = vpack.c.b16 %v1692, %v1688
        %v1941 = vpack.c.b16 %v1693, %v1689
        %v1942 = vpack.c.b16 %v1694, %v1690
        %v1943 = vpack.c.b16 %v1695, %v1691
        %v1944 = vpack.c.b16 %v1700, %v1696
        %v1945 = vpack.c.b16 %v1701, %v1697
        %v1946 = vpack.c.b16 %v1702, %v1698
        %v1947 = vpack.c.b16 %v1703, %v1699
        %v1948 = vpack.c.b16 %v1708, %v1704
        %v1949 = vpack.c.b16 %v1709, %v1705
        %v1950 = vpack.c.b16 %v1710, %v1706
        %v1951 = vpack.c.b16 %v1711, %v1707
        %v1952 = vpack.c.b16 %v1716, %v1712
        %v1953 = vpack.c.b16 %v1717, %v1713
        %v1954 = vpack.c.b16 %v1718, %v1714
        %v1955 = vpack.c.b16 %v1719, %v1715
        %v1956 = vpack.c.b16 %v1724, %v1720
        %v1957 = vpack.c.b16 %v1725, %v1721
        %v1958 = vpack.c.b16 %v1726, %v1722
        %v1959 = vpack.c.b16 %v1727, %v1723
        %v1960 = vpack.c.b16 %v1732, %v1728
        %v1961 = vpack.c.b16 %v1733, %v1729
        %v1962 = vpack.c.b16 %v1734, %v1730
        %v1963 = vpack.c.b16 %v1735, %v1731
        %v1964 = vpack.c.b16 %v1740, %v1736
        %v1965 = vpack.c.b16 %v1741, %v1737
        %v1966 = vpack.c.b16 %v1742, %v1738
        %v1967 = vpack.c.b16 %v1743, %v1739
        %v1968 = vpack.c.b16 %v1748, %v1744
        %v1969 = vpack.c.b16 %v1749, %v1745
        %v1970 = vpack.c.b16 %v1750, %v1746
        %v1971 = vpack.c.b16 %v1751, %v1747
        %v1972 = vpack.c.b16 %v1756, %v1752
        %v1973 = vpack.c.b16 %v1757, %v1753
        %v1974 = vpack.c.b16 %v1758, %v1754
        %v1975 = vpack.c.b16 %v1759, %v1755
        %v1976 = vpack.c.b16 %v1764, %v1760
        %v1977 = vpack.c.b16 %v1765, %v1761
        %v1978 = vpack.c.b16 %v1766, %v1762
        %v1979 = vpack.c.b16 %v1767, %v1763
        %v1980 = vpack.c.b16 %v1772, %v1768
        %v1981 = vpack.c.b16 %v1773, %v1769
        %v1982 = vpack.c.b16 %v1774, %v1770
        %v1983 = vpack.c.b16 %v1775, %v1771
        %v1984 = vpack.c.b16 %v1780, %v1776
        %v1985 = vpack.c.b16 %v1781, %v1777
        %v1986 = vpack.c.b16 %v1782, %v1778
        %v1987 = vpack.c.b16 %v1783, %v1779
        %v1988 = vpack.c.b16 %v1788, %v1784
        %v1989 = vpack.c.b16 %v1789, %v1785
        %v1990 = vpack.c.b16 %v1790, %v1786
        %v1991 = vpack.c.b16 %v1791, %v1787
        %v1992 = vpack.c.b16 %v1796, %v1792
        %v1993 = vpack.c.b16 %v1797, %v1793
        %v1994 = vpack.c.b16 %v1798, %v1794
        %v1995 = vpack.c.b16 %v1799, %v1795
        %v1996 = vpack.c.b16 %v1804, %v1800
        %v1997 = vpack.c.b16 %v1805, %v1801
        %v1998 = vpack.c.b16 %v1806, %v1802
        %v1999 = vpack.c.b16 %v1807, %v1803
        %v2000 = vpack.c.b16 %v1812, %v1808
        %v2001 = vpack.c.b16 %v1813, %v1809
        %v2002 = vpack.c.b16 %v1814, %v1810
        %v2003 = vpack.c.b16 %v1815, %v1811
        %v2004 = vpack.c.b16 %v1820, %v1816
        %v2005 = vpack.c.b16 %v1821, %v1817
        %v2006 = vpack.c.b16 %v1822, %v1818
        %v2007 = vpack.c.b16 %v1823, %v1819
        %v2008 = vpack.c.b16 %v1828, %v1824
        %v2009 = vpack.c.b16 %v1829, %v1825
        %v2010 = vpack.c.b16 %v1830, %v1826
        %v2011 = vpack.c.b16 %v1831, %v1827
        %v2012 = vpack.c.b16 %v1836, %v1832
        %v2013 = vpack.c.b16 %v1837, %v1833
        %v2014 = vpack.c.b16 %v1838, %v1834
        %v2015 = vpack.c.b16 %v1839, %v1835
        %v2016 = vpack.c.b16 %v1844, %v1840
        %v2017 = vpack.c.b16 %v1845, %v1841
        %v2018 = vpack.c.b16 %v1846, %v1842
        %v2019 = vpack.c.b16 %v1847, %v1843
        %v2020 = vpack.c.b16 %v1852, %v1848
        %v2021 = vpack.c.b16 %v1853, %v1849
        %v2022 = vpack.c.b16 %v1854, %v1850
        %v2023 = vpack.c.b16 %v1855, %v1851
        %v2024 = vpack.c.b16 %v1860, %v1856
        %v2025 = vpack.c.b16 %v1861, %v1857
        %v2026 = vpack.c.b16 %v1862, %v1858
        %v2027 = vpack.c.b16 %v1863, %v1859
        %v2028 = vpack.c.b16 %v1868, %v1864
        %v2029 = vpack.c.b16 %v1869, %v1865
        %v2030 = vpack.c.b16 %v1870, %v1866
        %v2031 = vpack.c.b16 %v1871, %v1867
        %v2032 = vpack.c.b16 %v1876, %v1872
        %v2033 = vpack.c.b16 %v1877, %v1873
        %v2034 = vpack.c.b16 %v1878, %v1874
        %v2035 = vpack.c.b16 %v1879, %v1875
        %v2036 = vpack.c.b16 %v1884, %v1880
        %v2037 = vpack.c.b16 %v1885, %v1881
        %v2038 = vpack.c.b16 %v1886, %v1882
        %v2039 = vpack.c.b16 %v1887, %v1883
        %v2040 = vpack.c.b16 %v1892, %v1888
        %v2041 = vpack.c.b16 %v1893, %v1889
        %v2042 = vpack.c.b16 %v1894, %v1890
        %v2043 = vpack.c.b16 %v1895, %v1891
        %v2044 = vpack.c.b16 %v1900, %v1896
        %v2045 = vpack.c.b16 %v1901, %v1897
        %v2046 = vpack.c.b16 %v1902, %v1898
        %v2047 = vpack.c.b16 %v1903, %v1899
        %v2048 = vpack.c.b16 %v1908, %v1904
        %v2049 = vpack.c.b16 %v1909, %v1905
        %v2050 = vpack.c.b16 %v1910, %v1906
        %v2051 = vpack.c.b16 %v1911, %v1907
        %v2052 = vpack.c.b16 %v1916, %v1912
        %v2053 = vpack.c.b16 %v1917, %v1913
        %v2054 = vpack.c.b16 %v1918, %v1914
        %v2055 = vpack.c.b16 %v1919, %v1915
        %v2056 = vpack.c.b16 %v1924, %v1920
        %v2057 = vpack.c.b16 %v1925, %v1921
        %v2058 = vpack.c.b16 %v1926, %v1922
        %v2059 = vpack.c.b16 %v1927, %v1923
        %v2060 = vpack.c.b16 %v1932, %v1928
        %v2061 = vpack.c.b16 %v1933, %v1929
        %v2062 = vpack.c.b16 %v1934, %v1930
        %v2063 = vpack.c.b16 %v1935, %v1931
        %2192 = vmatprep.subr.bf16.mxu0 %v1937
        %2193 = vmatpush1.bf16.msra.mxu0 %v1936
        %2194 = vmatprep.subr.bf16.mxu0 %v1941
        %2195 = vmatpush1.bf16.msra.mxu0 %v1940
        %2196 = vmatprep.subr.bf16.mxu0 %v1945
        %2197 = vmatpush1.bf16.msra.mxu0 %v1944
        %2198 = vmatprep.subr.bf16.mxu0 %v1949
        %2199 = vmatpush1.bf16.msra.mxu0 %v1948
        %2200 = vmatprep.subr.bf16.mxu0 %v1953
        %2201 = vmatpush1.bf16.msra.mxu0 %v1952
        %2202 = vmatprep.subr.bf16.mxu0 %v1957
        %2203 = vmatpush1.bf16.msra.mxu0 %v1956
        %2204 = vmatprep.subr.bf16.mxu0 %v1961
        %2205 = vmatpush1.bf16.msra.mxu0 %v1960
        %2206 = vmatprep.subr.bf16.mxu0 %v1965
        %2207 = vmatpush1.bf16.msra.mxu0 %v1964
        %2208 = vmatprep.subr.bf16.mxu0 %v1969
        %2209 = vmatpush1.bf16.msra.mxu0 %v1968
        %2210 = vmatprep.subr.bf16.mxu0 %v1973
        %2211 = vmatpush1.bf16.msra.mxu0 %v1972
        %2212 = vmatprep.subr.bf16.mxu0 %v1977
        %2213 = vmatpush1.bf16.msra.mxu0 %v1976
        %2214 = vmatprep.subr.bf16.mxu0 %v1981
        %2215 = vmatpush1.bf16.msra.mxu0 %v1980
        %2216 = vmatprep.subr.bf16.mxu0 %v1985
        %2217 = vmatpush1.bf16.msra.mxu0 %v1984
        %2218 = vmatprep.subr.bf16.mxu0 %v1989
        %2219 = vmatpush1.bf16.msra.mxu0 %v1988
        %2220 = vmatprep.subr.bf16.mxu0 %v1993
        %2221 = vmatpush1.bf16.msra.mxu0 %v1992
        %2222 = vmatprep.subr.bf16.mxu0 %v1997
        %2223 = vmatpush1.bf16.msra.mxu0 %v1996
        %2224 = vmatprep.mubr.bf16.mxu0 %v1393
        %2225 = vmatmul.mubr.bf16.gmra.mrb[0].mxu0 %v1392
        %v2226 = vpop.f32.mrb[0].mxu0
        %v2227 = vadd.f32 0.0, %v2226
        %v2228 = vpop.f32.mrb[0].mxu0
        %v2229 = vadd.f32 0.0, %v2228
        %v2230 = vpop.f32.mrb[0].mxu0
        %v2231 = vadd.f32 0.0, %v2230
        %v2232 = vpop.f32.mrb[0].mxu0
        %v2233 = vadd.f32 0.0, %v2232
        %2234 = vmatprep.mubr.bf16.mxu0 %v1397
        %2235 = vmatmul.mubr.bf16.gmra.mrb[0].mxu0 %v1396
        %v2236 = vpop.f32.mrb[0].mxu0
        %v2237 = vadd.f32 0.0, %v2236
        %v2238 = vpop.f32.mrb[0].mxu0
        %v2239 = vadd.f32 0.0, %v2238
        %v2240 = vpop.f32.mrb[0].mxu0
        %v2241 = vadd.f32 0.0, %v2240
        %v2242 = vpop.f32.mrb[0].mxu0
        %v2243 = vadd.f32 0.0, %v2242
        %2244 = vmatprep.mubr.bf16.mxu0 %v1401
        %2245 = vmatmul.mubr.bf16.gmra.mrb[0].mxu0 %v1400
        %v2246 = vpop.f32.mrb[0].mxu0
        %v2247 = vadd.f32 0.0, %v2246
        %v2248 = vpop.f32.mrb[0].mxu0
        %v2249 = vadd.f32 0.0, %v2248
        %v2250 = vpop.f32.mrb[0].mxu0
        %v2251 = vadd.f32 0.0, %v2250
        %v2252 = vpop.f32.mrb[0].mxu0
        %v2253 = vadd.f32 0.0, %v2252
        %2254 = vmatprep.mubr.bf16.mxu0 %v1405
        %2255 = vmatmul.mubr.bf16.gmra.mrb[0].mxu0 %v1404
        %v2256 = vpop.f32.mrb[0].mxu0
        %v2257 = vadd.f32 0.0, %v2256
        %v2258 = vpop.f32.mrb[0].mxu0
        %v2259 = vadd.f32 0.0, %v2258
        %v2260 = vpop.f32.mrb[0].mxu0
        %v2261 = vadd.f32 0.0, %v2260
        %v2262 = vpop.f32.mrb[0].mxu0
        %v2263 = vadd.f32 0.0, %v2262
        %2264 = vmatprep.mubr.bf16.mxu0 %v1409
        %2265 = vmatmul.mubr.bf16.gmra.mrb[0].mxu0 %v1408
        %v2266 = vpop.f32.mrb[0].mxu0
        %v2267 = vadd.f32 0.0, %v2266
        %v2268 = vpop.f32.mrb[0].mxu0
        %v2269 = vadd.f32 0.0, %v2268
        %v2270 = vpop.f32.mrb[0].mxu0
        %v2271 = vadd.f32 0.0, %v2270
        %v2272 = vpop.f32.mrb[0].mxu0
        %v2273 = vadd.f32 0.0, %v2272
        %2274 = vmatprep.mubr.bf16.mxu0 %v1413
        %2275 = vmatmul.mubr.bf16.gmra.mrb[0].mxu0 %v1412
        %v2276 = vpop.f32.mrb[0].mxu0
        %v2277 = vadd.f32 0.0, %v2276
        %v2278 = vpop.f32.mrb[0].mxu0
        %v2279 = vadd.f32 0.0, %v2278
        %v2280 = vpop.f32.mrb[0].mxu0
        %v2281 = vadd.f32 0.0, %v2280
        %v2282 = vpop.f32.mrb[0].mxu0
        %v2283 = vadd.f32 0.0, %v2282
        %2284 = vmatprep.mubr.bf16.mxu0 %v1417
        %2285 = vmatmul.mubr.bf16.gmra.mrb[0].mxu0 %v1416
        %v2286 = vpop.f32.mrb[0].mxu0
        %v2287 = vadd.f32 0.0, %v2286
        %v2288 = vpop.f32.mrb[0].mxu0
        %v2289 = vadd.f32 0.0, %v2288
        %v2290 = vpop.f32.mrb[0].mxu0
        %v2291 = vadd.f32 0.0, %v2290
        %v2292 = vpop.f32.mrb[0].mxu0
        %v2293 = vadd.f32 0.0, %v2292
        %2294 = vmatprep.mubr.bf16.mxu0 %v1421
        %2295 = vmatmul.mubr.bf16.gmra.mrb[0].mxu0 %v1420
        %v2296 = vpop.f32.mrb[0].mxu0
        %v2297 = vadd.f32 0.0, %v2296
        %v2298 = vpop.f32.mrb[0].mxu0
        %v2299 = vadd.f32 0.0, %v2298
        %v2300 = vpop.f32.mrb[0].mxu0
        %v2301 = vadd.f32 0.0, %v2300
        %v2302 = vpop.f32.mrb[0].mxu0
        %v2303 = vadd.f32 0.0, %v2302
        %2304 = vdwg.mxu0
        %2305 = vmatprep.subr.bf16.mxu0 %v2001
        %2306 = vmatpush1.bf16.msra.mxu0 %v2000
        %2307 = vmatprep.subr.bf16.mxu0 %v2005
        %2308 = vmatpush1.bf16.msra.mxu0 %v2004
        %2309 = vmatprep.subr.bf16.mxu0 %v2009
        %2310 = vmatpush1.bf16.msra.mxu0 %v2008
        %2311 = vmatprep.subr.bf16.mxu0 %v2013
        %2312 = vmatpush1.bf16.msra.mxu0 %v2012
        %2313 = vmatprep.subr.bf16.mxu0 %v2017
        %2314 = vmatpush1.bf16.msra.mxu0 %v2016
        %2315 = vmatprep.subr.bf16.mxu0 %v2021
        %2316 = vmatpush1.bf16.msra.mxu0 %v2020
        %2317 = vmatprep.subr.bf16.mxu0 %v2025
        %2318 = vmatpush1.bf16.msra.mxu0 %v2024
        %2319 = vmatprep.subr.bf16.mxu0 %v2029
        %2320 = vmatpush1.bf16.msra.mxu0 %v2028
        %2321 = vmatprep.subr.bf16.mxu0 %v2033
        %2322 = vmatpush1.bf16.msra.mxu0 %v2032
        %2323 = vmatprep.subr.bf16.mxu0 %v2037
        %2324 = vmatpush1.bf16.msra.mxu0 %v2036
        %2325 = vmatprep.subr.bf16.mxu0 %v2041
        %2326 = vmatpush1.bf16.msra.mxu0 %v2040
        %2327 = vmatprep.subr.bf16.mxu0 %v2045
        %2328 = vmatpush1.bf16.msra.mxu0 %v2044
        %2329 = vmatprep.subr.bf16.mxu0 %v2049
        %2330 = vmatpush1.bf16.msra.mxu0 %v2048
        %2331 = vmatprep.subr.bf16.mxu0 %v2053
        %2332 = vmatpush1.bf16.msra.mxu0 %v2052
        %2333 = vmatprep.subr.bf16.mxu0 %v2057
        %2334 = vmatpush1.bf16.msra.mxu0 %v2056
        %2335 = vmatprep.subr.bf16.mxu0 %v2061
        %2336 = vmatpush1.bf16.msra.mxu0 %v2060
        %2337 = vmatprep.mubr.bf16.mxu0 %v1395
        %2338 = vmatmul.mubr.bf16.gmra.mrb[0].mxu0 %v1394
        %v2339 = vpop.f32.mrb[0].mxu0
        %v2340 = vadd.f32 %v2227, %v2339
        %v2341 = vpop.f32.mrb[0].mxu0
        %v2342 = vadd.f32 %v2229, %v2341
        %v2343 = vpop.f32.mrb[0].mxu0
        %v2344 = vadd.f32 %v2231, %v2343
        %v2345 = vpop.f32.mrb[0].mxu0
        %v2346 = vadd.f32 %v2233, %v2345
        %2347 = vmatprep.mubr.bf16.mxu0 %v1399
        %2348 = vmatmul.mubr.bf16.gmra.mrb[0].mxu0 %v1398
        %v2349 = vpop.f32.mrb[0].mxu0
        %v2350 = vadd.f32 %v2237, %v2349
        %v2351 = vpop.f32.mrb[0].mxu0
        %v2352 = vadd.f32 %v2239, %v2351
        %v2353 = vpop.f32.mrb[0].mxu0
        %v2354 = vadd.f32 %v2241, %v2353
        %v2355 = vpop.f32.mrb[0].mxu0
        %v2356 = vadd.f32 %v2243, %v2355
        %2357 = vmatprep.mubr.bf16.mxu0 %v1403
        %2358 = vmatmul.mubr.bf16.gmra.mrb[0].mxu0 %v1402
        %v2359 = vpop.f32.mrb[0].mxu0
        %v2360 = vadd.f32 %v2247, %v2359
        %v2361 = vpop.f32.mrb[0].mxu0
        %v2362 = vadd.f32 %v2249, %v2361
        %v2363 = vpop.f32.mrb[0].mxu0
        %v2364 = vadd.f32 %v2251, %v2363
        %v2365 = vpop.f32.mrb[0].mxu0
        %v2366 = vadd.f32 %v2253, %v2365
        %2367 = vmatprep.mubr.bf16.mxu0 %v1407
        %2368 = vmatmul.mubr.bf16.gmra.mrb[0].mxu0 %v1406
        %v2369 = vpop.f32.mrb[0].mxu0
        %v2370 = vadd.f32 %v2257, %v2369
        %v2371 = vpop.f32.mrb[0].mxu0
        %v2372 = vadd.f32 %v2259, %v2371
        %v2373 = vpop.f32.mrb[0].mxu0
        %v2374 = vadd.f32 %v2261, %v2373
        %v2375 = vpop.f32.mrb[0].mxu0
        %v2376 = vadd.f32 %v2263, %v2375
        %2377 = vmatprep.mubr.bf16.mxu0 %v1411
        %2378 = vmatmul.mubr.bf16.gmra.mrb[0].mxu0 %v1410
        %v2379 = vpop.f32.mrb[0].mxu0
        %v2380 = vadd.f32 %v2267, %v2379
        %v2381 = vpop.f32.mrb[0].mxu0
        %v2382 = vadd.f32 %v2269, %v2381
        %v2383 = vpop.f32.mrb[0].mxu0
        %v2384 = vadd.f32 %v2271, %v2383
        %v2385 = vpop.f32.mrb[0].mxu0
        %v2386 = vadd.f32 %v2273, %v2385
        %2387 = vmatprep.mubr.bf16.mxu0 %v1415
        %2388 = vmatmul.mubr.bf16.gmra.mrb[0].mxu0 %v1414
        %v2389 = vpop.f32.mrb[0].mxu0
        %v2390 = vadd.f32 %v2277, %v2389
        %v2391 = vpop.f32.mrb[0].mxu0
        %v2392 = vadd.f32 %v2279, %v2391
        %v2393 = vpop.f32.mrb[0].mxu0
        %v2394 = vadd.f32 %v2281, %v2393
        %v2395 = vpop.f32.mrb[0].mxu0
        %v2396 = vadd.f32 %v2283, %v2395
        %2397 = vmatprep.mubr.bf16.mxu0 %v1419
        %2398 = vmatmul.mubr.bf16.gmra.mrb[0].mxu0 %v1418
        %v2399 = vpop.f32.mrb[0].mxu0
        %v2400 = vadd.f32 %v2287, %v2399
        %v2401 = vpop.f32.mrb[0].mxu0
        %v2402 = vadd.f32 %v2289, %v2401
        %v2403 = vpop.f32.mrb[0].mxu0
        %v2404 = vadd.f32 %v2291, %v2403
        %v2405 = vpop.f32.mrb[0].mxu0
        %v2406 = vadd.f32 %v2293, %v2405
        %2407 = vmatprep.mubr.bf16.mxu0 %v1423
        %2408 = vmatmul.mubr.bf16.gmra.mrb[0].mxu0 %v1422
        %v2409 = vpop.f32.mrb[0].mxu0
        %v2410 = vadd.f32 %v2297, %v2409
        %v2411 = vpop.f32.mrb[0].mxu0
        %v2412 = vadd.f32 %v2299, %v2411
        %v2413 = vpop.f32.mrb[0].mxu0
        %v2414 = vadd.f32 %v2301, %v2413
        %v2415 = vpop.f32.mrb[0].mxu0
        %v2416 = vadd.f32 %v2303, %v2415
        %2417 = vdwg.mxu0
        %2418 = vmatprep.subr.bf16.mxu0 %v1939
        %2419 = vmatpush1.bf16.msra.mxu0 %v1938
        %2420 = vmatprep.subr.bf16.mxu0 %v1943
        %2421 = vmatpush1.bf16.msra.mxu0 %v1942
        %2422 = vmatprep.subr.bf16.mxu0 %v1947
        %2423 = vmatpush1.bf16.msra.mxu0 %v1946
        %2424 = vmatprep.subr.bf16.mxu0 %v1951
        %2425 = vmatpush1.bf16.msra.mxu0 %v1950
        %2426 = vmatprep.subr.bf16.mxu0 %v1955
        %2427 = vmatpush1.bf16.msra.mxu0 %v1954
        %2428 = vmatprep.subr.bf16.mxu0 %v1959
        %2429 = vmatpush1.bf16.msra.mxu0 %v1958
        %2430 = vmatprep.subr.bf16.mxu0 %v1963
        %2431 = vmatpush1.bf16.msra.mxu0 %v1962
        %2432 = vmatprep.subr.bf16.mxu0 %v1967
        %2433 = vmatpush1.bf16.msra.mxu0 %v1966
        %2434 = vmatprep.subr.bf16.mxu0 %v1971
        %2435 = vmatpush1.bf16.msra.mxu0 %v1970
        %2436 = vmatprep.subr.bf16.mxu0 %v1975
        %2437 = vmatpush1.bf16.msra.mxu0 %v1974
        %2438 = vmatprep.subr.bf16.mxu0 %v1979
        %2439 = vmatpush1.bf16.msra.mxu0 %v1978
        %2440 = vmatprep.subr.bf16.mxu0 %v1983
        %2441 = vmatpush1.bf16.msra.mxu0 %v1982
        %2442 = vmatprep.subr.bf16.mxu0 %v1987
        %2443 = vmatpush1.bf16.msra.mxu0 %v1986
        %2444 = vmatprep.subr.bf16.mxu0 %v1991
        %2445 = vmatpush1.bf16.msra.mxu0 %v1990
        %2446 = vmatprep.subr.bf16.mxu0 %v1995
        %2447 = vmatpush1.bf16.msra.mxu0 %v1994
        %2448 = vmatprep.subr.bf16.mxu0 %v1999
        %2449 = vmatpush1.bf16.msra.mxu0 %v1998
        %2450 = vmatprep.mubr.bf16.mxu0 %v1393
        %2451 = vmatmul.mubr.bf16.gmra.mrb[0].mxu0 %v1392
        %v2452 = vpop.f32.mrb[0].mxu0
        %v2453 = vadd.f32 0.0, %v2452
        %v2454 = vpop.f32.mrb[0].mxu0
        %v2455 = vadd.f32 0.0, %v2454
        %v2456 = vpop.f32.mrb[0].mxu0
        %v2457 = vadd.f32 0.0, %v2456
        %v2458 = vpop.f32.mrb[0].mxu0
        %v2459 = vadd.f32 0.0, %v2458
        %2460 = vmatprep.mubr.bf16.mxu0 %v1397
        %2461 = vmatmul.mubr.bf16.gmra.mrb[0].mxu0 %v1396
        %v2462 = vpop.f32.mrb[0].mxu0
        %v2463 = vadd.f32 0.0, %v2462
        %v2464 = vpop.f32.mrb[0].mxu0
        %v2465 = vadd.f32 0.0, %v2464
        %v2466 = vpop.f32.mrb[0].mxu0
        %v2467 = vadd.f32 0.0, %v2466
        %v2468 = vpop.f32.mrb[0].mxu0
        %v2469 = vadd.f32 0.0, %v2468
        %2470 = vmatprep.mubr.bf16.mxu0 %v1401
        %2471 = vmatmul.mubr.bf16.gmra.mrb[0].mxu0 %v1400
        %v2472 = vpop.f32.mrb[0].mxu0
        %v2473 = vadd.f32 0.0, %v2472
        %v2474 = vpop.f32.mrb[0].mxu0
        %v2475 = vadd.f32 0.0, %v2474
        %v2476 = vpop.f32.mrb[0].mxu0
        %v2477 = vadd.f32 0.0, %v2476
        %v2478 = vpop.f32.mrb[0].mxu0
        %v2479 = vadd.f32 0.0, %v2478
        %2480 = vmatprep.mubr.bf16.mxu0 %v1405
        %2481 = vmatmul.mubr.bf16.gmra.mrb[0].mxu0 %v1404
        %v2482 = vpop.f32.mrb[0].mxu0
        %v2483 = vadd.f32 0.0, %v2482
        %v2484 = vpop.f32.mrb[0].mxu0
        %v2485 = vadd.f32 0.0, %v2484
        %v2486 = vpop.f32.mrb[0].mxu0
        %v2487 = vadd.f32 0.0, %v2486
        %v2488 = vpop.f32.mrb[0].mxu0
        %v2489 = vadd.f32 0.0, %v2488
        %2490 = vmatprep.mubr.bf16.mxu0 %v1409
        %2491 = vmatmul.mubr.bf16.gmra.mrb[0].mxu0 %v1408
        %v2492 = vpop.f32.mrb[0].mxu0
        %v2493 = vadd.f32 0.0, %v2492
        %v2494 = vpop.f32.mrb[0].mxu0
        %v2495 = vadd.f32 0.0, %v2494
        %v2496 = vpop.f32.mrb[0].mxu0
        %v2497 = vadd.f32 0.0, %v2496
        %v2498 = vpop.f32.mrb[0].mxu0
        %v2499 = vadd.f32 0.0, %v2498
        %2500 = vmatprep.mubr.bf16.mxu0 %v1413
        %2501 = vmatmul.mubr.bf16.gmra.mrb[0].mxu0 %v1412
        %v2502 = vpop.f32.mrb[0].mxu0
        %v2503 = vadd.f32 0.0, %v2502
        %v2504 = vpop.f32.mrb[0].mxu0
        %v2505 = vadd.f32 0.0, %v2504
        %v2506 = vpop.f32.mrb[0].mxu0
        %v2507 = vadd.f32 0.0, %v2506
        %v2508 = vpop.f32.mrb[0].mxu0
        %v2509 = vadd.f32 0.0, %v2508
        %2510 = vmatprep.mubr.bf16.mxu0 %v1417
        %2511 = vmatmul.mubr.bf16.gmra.mrb[0].mxu0 %v1416
        %v2512 = vpop.f32.mrb[0].mxu0
        %v2513 = vadd.f32 0.0, %v2512
        %v2514 = vpop.f32.mrb[0].mxu0
        %v2515 = vadd.f32 0.0, %v2514
        %v2516 = vpop.f32.mrb[0].mxu0
        %v2517 = vadd.f32 0.0, %v2516
        %v2518 = vpop.f32.mrb[0].mxu0
        %v2519 = vadd.f32 0.0, %v2518
        %2520 = vmatprep.mubr.bf16.mxu0 %v1421
        %2521 = vmatmul.mubr.bf16.gmra.mrb[0].mxu0 %v1420
        %v2522 = vpop.f32.mrb[0].mxu0
        %v2523 = vadd.f32 0.0, %v2522
        %v2524 = vpop.f32.mrb[0].mxu0
        %v2525 = vadd.f32 0.0, %v2524
        %v2526 = vpop.f32.mrb[0].mxu0
        %v2527 = vadd.f32 0.0, %v2526
        %v2528 = vpop.f32.mrb[0].mxu0
        %v2529 = vadd.f32 0.0, %v2528
        %2530 = vdwg.mxu0
        %2531 = vmatprep.subr.bf16.mxu0 %v2003
        %2532 = vmatpush1.bf16.msra.mxu0 %v2002
        %2533 = vmatprep.subr.bf16.mxu0 %v2007
        %2534 = vmatpush1.bf16.msra.mxu0 %v2006
        %2535 = vmatprep.subr.bf16.mxu0 %v2011
        %2536 = vmatpush1.bf16.msra.mxu0 %v2010
        %2537 = vmatprep.subr.bf16.mxu0 %v2015
        %2538 = vmatpush1.bf16.msra.mxu0 %v2014
        %2539 = vmatprep.subr.bf16.mxu0 %v2019
        %2540 = vmatpush1.bf16.msra.mxu0 %v2018
        %2541 = vmatprep.subr.bf16.mxu0 %v2023
        %2542 = vmatpush1.bf16.msra.mxu0 %v2022
        %2543 = vmatprep.subr.bf16.mxu0 %v2027
        %2544 = vmatpush1.bf16.msra.mxu0 %v2026
        %2545 = vmatprep.subr.bf16.mxu0 %v2031
        %2546 = vmatpush1.bf16.msra.mxu0 %v2030
        %2547 = vmatprep.subr.bf16.mxu0 %v2035
        %2548 = vmatpush1.bf16.msra.mxu0 %v2034
        %2549 = vmatprep.subr.bf16.mxu0 %v2039
        %2550 = vmatpush1.bf16.msra.mxu0 %v2038
        %2551 = vmatprep.subr.bf16.mxu0 %v2043
        %2552 = vmatpush1.bf16.msra.mxu0 %v2042
        %2553 = vmatprep.subr.bf16.mxu0 %v2047
        %2554 = vmatpush1.bf16.msra.mxu0 %v2046
        %2555 = vmatprep.subr.bf16.mxu0 %v2051
        %2556 = vmatpush1.bf16.msra.mxu0 %v2050
        %2557 = vmatprep.subr.bf16.mxu0 %v2055
        %2558 = vmatpush1.bf16.msra.mxu0 %v2054
        %2559 = vmatprep.subr.bf16.mxu0 %v2059
        %2560 = vmatpush1.bf16.msra.mxu0 %v2058
        %2561 = vmatprep.subr.bf16.mxu0 %v2063
        %2562 = vmatpush1.bf16.msra.mxu0 %v2062
        %2563 = vmatprep.mubr.bf16.mxu0 %v1395
        %2564 = vmatmul.mubr.bf16.gmra.mrb[0].mxu0 %v1394
        %v2565 = vpop.f32.mrb[0].mxu0
        %v2566 = vadd.f32 %v2453, %v2565
        %v2567 = vpop.f32.mrb[0].mxu0
        %v2568 = vadd.f32 %v2455, %v2567
        %v2569 = vpop.f32.mrb[0].mxu0
        %v2570 = vadd.f32 %v2457, %v2569
        %v2571 = vpop.f32.mrb[0].mxu0
        %v2572 = vadd.f32 %v2459, %v2571
        %2573 = vmatprep.mubr.bf16.mxu0 %v1399
        %2574 = vmatmul.mubr.bf16.gmra.mrb[0].mxu0 %v1398
        %v2575 = vpop.f32.mrb[0].mxu0
        %v2576 = vadd.f32 %v2463, %v2575
        %v2577 = vpop.f32.mrb[0].mxu0
        %v2578 = vadd.f32 %v2465, %v2577
        %v2579 = vpop.f32.mrb[0].mxu0
        %v2580 = vadd.f32 %v2467, %v2579
        %v2581 = vpop.f32.mrb[0].mxu0
        %v2582 = vadd.f32 %v2469, %v2581
        %2583 = vmatprep.mubr.bf16.mxu0 %v1403
        %2584 = vmatmul.mubr.bf16.gmra.mrb[0].mxu0 %v1402
        %v2585 = vpop.f32.mrb[0].mxu0
        %v2586 = vadd.f32 %v2473, %v2585
        %v2587 = vpop.f32.mrb[0].mxu0
        %v2588 = vadd.f32 %v2475, %v2587
        %v2589 = vpop.f32.mrb[0].mxu0
        %v2590 = vadd.f32 %v2477, %v2589
        %v2591 = vpop.f32.mrb[0].mxu0
        %v2592 = vadd.f32 %v2479, %v2591
        %2593 = vmatprep.mubr.bf16.mxu0 %v1407
        %2594 = vmatmul.mubr.bf16.gmra.mrb[0].mxu0 %v1406
        %v2595 = vpop.f32.mrb[0].mxu0
        %v2596 = vadd.f32 %v2483, %v2595
        %v2597 = vpop.f32.mrb[0].mxu0
        %v2598 = vadd.f32 %v2485, %v2597
        %v2599 = vpop.f32.mrb[0].mxu0
        %v2600 = vadd.f32 %v2487, %v2599
        %v2601 = vpop.f32.mrb[0].mxu0
        %v2602 = vadd.f32 %v2489, %v2601
        %2603 = vmatprep.mubr.bf16.mxu0 %v1411
        %2604 = vmatmul.mubr.bf16.gmra.mrb[0].mxu0 %v1410
        %v2605 = vpop.f32.mrb[0].mxu0
        %v2606 = vadd.f32 %v2493, %v2605
        %v2607 = vpop.f32.mrb[0].mxu0
        %v2608 = vadd.f32 %v2495, %v2607
        %v2609 = vpop.f32.mrb[0].mxu0
        %v2610 = vadd.f32 %v2497, %v2609
        %v2611 = vpop.f32.mrb[0].mxu0
        %v2612 = vadd.f32 %v2499, %v2611
        %2613 = vmatprep.mubr.bf16.mxu0 %v1415
        %2614 = vmatmul.mubr.bf16.gmra.mrb[0].mxu0 %v1414
        %v2615 = vpop.f32.mrb[0].mxu0
        %v2616 = vadd.f32 %v2503, %v2615
        %v2617 = vpop.f32.mrb[0].mxu0
        %v2618 = vadd.f32 %v2505, %v2617
        %v2619 = vpop.f32.mrb[0].mxu0
        %v2620 = vadd.f32 %v2507, %v2619
        %v2621 = vpop.f32.mrb[0].mxu0
        %v2622 = vadd.f32 %v2509, %v2621
        %2623 = vmatprep.mubr.bf16.mxu0 %v1419
        %2624 = vmatmul.mubr.bf16.gmra.mrb[0].mxu0 %v1418
        %v2625 = vpop.f32.mrb[0].mxu0
        %v2626 = vadd.f32 %v2513, %v2625
        %v2627 = vpop.f32.mrb[0].mxu0
        %v2628 = vadd.f32 %v2515, %v2627
        %v2629 = vpop.f32.mrb[0].mxu0
        %v2630 = vadd.f32 %v2517, %v2629
        %v2631 = vpop.f32.mrb[0].mxu0
        %v2632 = vadd.f32 %v2519, %v2631
        %2633 = vmatprep.mubr.bf16.mxu0 %v1423
        %2634 = vmatmul.mubr.bf16.gmra.mrb[0].mxu0 %v1422
        %v2635 = vpop.f32.mrb[0].mxu0
        %v2636 = vadd.f32 %v2523, %v2635
        %v2637 = vpop.f32.mrb[0].mxu0
        %v2638 = vadd.f32 %v2525, %v2637
        %v2639 = vpop.f32.mrb[0].mxu0
        %v2640 = vadd.f32 %v2527, %v2639
        %v2641 = vpop.f32.mrb[0].mxu0
        %v2642 = vadd.f32 %v2529, %v2641
        %2643 = vdwg.mxu0
        %v2644 = vadd.f32 %v2340, %v2344
        %v2645 = vadd.f32 %v2644, %v2350
        %v2646 = vadd.f32 %v2645, %v2354
        %v2647 = vadd.f32 %v2646, %v2360
        %v2648 = vadd.f32 %v2647, %v2364
        %v2649 = vadd.f32 %v2648, %v2370
        %v2650 = vadd.f32 %v2649, %v2374
        %v2651 = vadd.f32 %v2650, %v2380
        %v2652 = vadd.f32 %v2651, %v2384
        %v2653 = vadd.f32 %v2652, %v2390
        %v2654 = vadd.f32 %v2653, %v2394
        %v2655 = vadd.f32 %v2654, %v2400
        %v2656 = vadd.f32 %v2655, %v2404
        %v2657 = vadd.f32 %v2656, %v2410
        %v2658 = vadd.f32 %v2657, %v2414
        %v2659 = vrot.slane %v2658, 4
        %v2660 = vadd.f32 %v2658, %v2659
        %v2661 = vrot.slane %v2660, 2
        %v2662 = vadd.f32 %v2660, %v2661
        %v2663 = vrot.slane %v2662, 1
        %v2664 = vadd.f32 %v2662, %v2663
        %v2665 = vadd.f32 %v2342, %v2346
        %v2666 = vadd.f32 %v2665, %v2352
        %v2667 = vadd.f32 %v2666, %v2356
        %v2668 = vadd.f32 %v2667, %v2362
        %v2669 = vadd.f32 %v2668, %v2366
        %v2670 = vadd.f32 %v2669, %v2372
        %v2671 = vadd.f32 %v2670, %v2376
        %v2672 = vadd.f32 %v2671, %v2382
        %v2673 = vadd.f32 %v2672, %v2386
        %v2674 = vadd.f32 %v2673, %v2392
        %v2675 = vadd.f32 %v2674, %v2396
        %v2676 = vadd.f32 %v2675, %v2402
        %v2677 = vadd.f32 %v2676, %v2406
        %v2678 = vadd.f32 %v2677, %v2412
        %v2679 = vadd.f32 %v2678, %v2416
        %v2680 = vrot.slane %v2679, 4
        %v2681 = vadd.f32 %v2679, %v2680
        %v2682 = vrot.slane %v2681, 2
        %v2683 = vadd.f32 %v2681, %v2682
        %v2684 = vrot.slane %v2683, 1
        %v2685 = vadd.f32 %v2683, %v2684
        %v2686 = vadd.f32 %v2566, %v2570
        %v2687 = vadd.f32 %v2686, %v2576
        %v2688 = vadd.f32 %v2687, %v2580
        %v2689 = vadd.f32 %v2688, %v2586
        %v2690 = vadd.f32 %v2689, %v2590
        %v2691 = vadd.f32 %v2690, %v2596
        %v2692 = vadd.f32 %v2691, %v2600
        %v2693 = vadd.f32 %v2692, %v2606
        %v2694 = vadd.f32 %v2693, %v2610
        %v2695 = vadd.f32 %v2694, %v2616
        %v2696 = vadd.f32 %v2695, %v2620
        %v2697 = vadd.f32 %v2696, %v2626
        %v2698 = vadd.f32 %v2697, %v2630
        %v2699 = vadd.f32 %v2698, %v2636
        %v2700 = vadd.f32 %v2699, %v2640
        %v2701 = vrot.slane %v2700, 4
        %v2702 = vadd.f32 %v2700, %v2701
        %v2703 = vrot.slane %v2702, 2
        %v2704 = vadd.f32 %v2702, %v2703
        %v2705 = vrot.slane %v2704, 1
        %v2706 = vadd.f32 %v2704, %v2705
        %v2707 = vadd.f32 %v2568, %v2572
        %v2708 = vadd.f32 %v2707, %v2578
        %v2709 = vadd.f32 %v2708, %v2582
        %v2710 = vadd.f32 %v2709, %v2588
        %v2711 = vadd.f32 %v2710, %v2592
        %v2712 = vadd.f32 %v2711, %v2598
        %v2713 = vadd.f32 %v2712, %v2602
        %v2714 = vadd.f32 %v2713, %v2608
        %v2715 = vadd.f32 %v2714, %v2612
        %v2716 = vadd.f32 %v2715, %v2618
        %v2717 = vadd.f32 %v2716, %v2622
        %v2718 = vadd.f32 %v2717, %v2628
        %v2719 = vadd.f32 %v2718, %v2632
        %v2720 = vadd.f32 %v2719, %v2638
        %v2721 = vadd.f32 %v2720, %v2642
        %v2722 = vrot.slane %v2721, 4
        %v2723 = vadd.f32 %v2721, %v2722
        %v2724 = vrot.slane %v2723, 2
        %v2725 = vadd.f32 %v2723, %v2724
        %v2726 = vrot.slane %v2725, 1
        %v2727 = vadd.f32 %v2725, %v2726
        %v2728 = vmul.f32 %v2664, %v1035
        %v2729 = vmul.f32 %v2685, %v1035
        %v2730 = vmul.f32 %v2706, %v1035
        %v2731 = vmul.f32 %v2727, %v1035
        %v2732 = vsub.f32 %v2340, %v2728
        %v2733 = vsub.f32 %v2342, %v2729
        %v2734 = vsub.f32 %v2566, %v2730
        %v2735 = vsub.f32 %v2568, %v2731
        %v2736 = vsub.f32 %v2344, %v2728
        %v2737 = vsub.f32 %v2346, %v2729
        %v2738 = vsub.f32 %v2570, %v2730
        %v2739 = vsub.f32 %v2572, %v2731
        %v2740 = vsub.f32 %v2350, %v2728
        %v2741 = vsub.f32 %v2352, %v2729
        %v2742 = vsub.f32 %v2576, %v2730
        %v2743 = vsub.f32 %v2578, %v2731
        %v2744 = vsub.f32 %v2354, %v2728
        %v2745 = vsub.f32 %v2356, %v2729
        %v2746 = vsub.f32 %v2580, %v2730
        %v2747 = vsub.f32 %v2582, %v2731
        %v2748 = vsub.f32 %v2360, %v2728
        %v2749 = vsub.f32 %v2362, %v2729
        %v2750 = vsub.f32 %v2586, %v2730
        %v2751 = vsub.f32 %v2588, %v2731
        %v2752 = vsub.f32 %v2364, %v2728
        %v2753 = vsub.f32 %v2366, %v2729
        %v2754 = vsub.f32 %v2590, %v2730
        %v2755 = vsub.f32 %v2592, %v2731
        %v2756 = vsub.f32 %v2370, %v2728
        %v2757 = vsub.f32 %v2372, %v2729
        %v2758 = vsub.f32 %v2596, %v2730
        %v2759 = vsub.f32 %v2598, %v2731
        %v2760 = vsub.f32 %v2374, %v2728
        %v2761 = vsub.f32 %v2376, %v2729
        %v2762 = vsub.f32 %v2600, %v2730
        %v2763 = vsub.f32 %v2602, %v2731
        %v2764 = vsub.f32 %v2380, %v2728
        %v2765 = vsub.f32 %v2382, %v2729
        %v2766 = vsub.f32 %v2606, %v2730
        %v2767 = vsub.f32 %v2608, %v2731
        %v2768 = vsub.f32 %v2384, %v2728
        %v2769 = vsub.f32 %v2386, %v2729
        %v2770 = vsub.f32 %v2610, %v2730
        %v2771 = vsub.f32 %v2612, %v2731
        %v2772 = vsub.f32 %v2390, %v2728
        %v2773 = vsub.f32 %v2392, %v2729
        %v2774 = vsub.f32 %v2616, %v2730
        %v2775 = vsub.f32 %v2618, %v2731
        %v2776 = vsub.f32 %v2394, %v2728
        %v2777 = vsub.f32 %v2396, %v2729
        %v2778 = vsub.f32 %v2620, %v2730
        %v2779 = vsub.f32 %v2622, %v2731
        %v2780 = vsub.f32 %v2400, %v2728
        %v2781 = vsub.f32 %v2402, %v2729
        %v2782 = vsub.f32 %v2626, %v2730
        %v2783 = vsub.f32 %v2628, %v2731
        %v2784 = vsub.f32 %v2404, %v2728
        %v2785 = vsub.f32 %v2406, %v2729
        %v2786 = vsub.f32 %v2630, %v2730
        %v2787 = vsub.f32 %v2632, %v2731
        %v2788 = vsub.f32 %v2410, %v2728
        %v2789 = vsub.f32 %v2412, %v2729
        %v2790 = vsub.f32 %v2636, %v2730
        %v2791 = vsub.f32 %v2638, %v2731
        %v2792 = vsub.f32 %v2414, %v2728
        %v2793 = vsub.f32 %v2416, %v2729
        %v2794 = vsub.f32 %v2640, %v2730
        %v2795 = vsub.f32 %v2642, %v2731
        %v2796 = vmul.f32 %v2732, %v2732
        %v2797 = vmul.f32 %v2733, %v2733
        %v2798 = vmul.f32 %v2734, %v2734
        %v2799 = vmul.f32 %v2735, %v2735
        %v2800 = vmul.f32 %v2736, %v2736
        %v2801 = vmul.f32 %v2737, %v2737
        %v2802 = vmul.f32 %v2738, %v2738
        %v2803 = vmul.f32 %v2739, %v2739
        %v2804 = vmul.f32 %v2740, %v2740
        %v2805 = vmul.f32 %v2741, %v2741
        %v2806 = vmul.f32 %v2742, %v2742
        %v2807 = vmul.f32 %v2743, %v2743
        %v2808 = vmul.f32 %v2744, %v2744
        %v2809 = vmul.f32 %v2745, %v2745
        %v2810 = vmul.f32 %v2746, %v2746
        %v2811 = vmul.f32 %v2747, %v2747
        %v2812 = vmul.f32 %v2748, %v2748
        %v2813 = vmul.f32 %v2749, %v2749
        %v2814 = vmul.f32 %v2750, %v2750
        %v2815 = vmul.f32 %v2751, %v2751
        %v2816 = vmul.f32 %v2752, %v2752
        %v2817 = vmul.f32 %v2753, %v2753
        %v2818 = vmul.f32 %v2754, %v2754
        %v2819 = vmul.f32 %v2755, %v2755
        %v2820 = vmul.f32 %v2756, %v2756
        %v2821 = vmul.f32 %v2757, %v2757
        %v2822 = vmul.f32 %v2758, %v2758
        %v2823 = vmul.f32 %v2759, %v2759
        %v2824 = vmul.f32 %v2760, %v2760
        %v2825 = vmul.f32 %v2761, %v2761
        %v2826 = vmul.f32 %v2762, %v2762
        %v2827 = vmul.f32 %v2763, %v2763
        %v2828 = vmul.f32 %v2764, %v2764
        %v2829 = vmul.f32 %v2765, %v2765
        %v2830 = vmul.f32 %v2766, %v2766
        %v2831 = vmul.f32 %v2767, %v2767
        %v2832 = vmul.f32 %v2768, %v2768
        %v2833 = vmul.f32 %v2769, %v2769
        %v2834 = vmul.f32 %v2770, %v2770
        %v2835 = vmul.f32 %v2771, %v2771
        %v2836 = vmul.f32 %v2772, %v2772
        %v2837 = vmul.f32 %v2773, %v2773
        %v2838 = vmul.f32 %v2774, %v2774
        %v2839 = vmul.f32 %v2775, %v2775
        %v2840 = vmul.f32 %v2776, %v2776
        %v2841 = vmul.f32 %v2777, %v2777
        %v2842 = vmul.f32 %v2778, %v2778
        %v2843 = vmul.f32 %v2779, %v2779
        %v2844 = vmul.f32 %v2780, %v2780
        %v2845 = vmul.f32 %v2781, %v2781
        %v2846 = vmul.f32 %v2782, %v2782
        %v2847 = vmul.f32 %v2783, %v2783
        %v2848 = vmul.f32 %v2784, %v2784
        %v2849 = vmul.f32 %v2785, %v2785
        %v2850 = vmul.f32 %v2786, %v2786
        %v2851 = vmul.f32 %v2787, %v2787
        %v2852 = vmul.f32 %v2788, %v2788
        %v2853 = vmul.f32 %v2789, %v2789
        %v2854 = vmul.f32 %v2790, %v2790
        %v2855 = vmul.f32 %v2791, %v2791
        %v2856 = vmul.f32 %v2792, %v2792
        %v2857 = vmul.f32 %v2793, %v2793
        %v2858 = vmul.f32 %v2794, %v2794
        %v2859 = vmul.f32 %v2795, %v2795
        %v2860 = vadd.f32 %v2796, %v2800
        %v2861 = vadd.f32 %v2860, %v2804
        %v2862 = vadd.f32 %v2861, %v2808
        %v2863 = vadd.f32 %v2862, %v2812
        %v2864 = vadd.f32 %v2863, %v2816
        %v2865 = vadd.f32 %v2864, %v2820
        %v2866 = vadd.f32 %v2865, %v2824
        %v2867 = vadd.f32 %v2866, %v2828
        %v2868 = vadd.f32 %v2867, %v2832
        %v2869 = vadd.f32 %v2868, %v2836
        %v2870 = vadd.f32 %v2869, %v2840
        %v2871 = vadd.f32 %v2870, %v2844
        %v2872 = vadd.f32 %v2871, %v2848
        %v2873 = vadd.f32 %v2872, %v2852
        %v2874 = vadd.f32 %v2873, %v2856
        %v2875 = vrot.slane %v2874, 4
        %v2876 = vadd.f32 %v2874, %v2875
        %v2877 = vrot.slane %v2876, 2
        %v2878 = vadd.f32 %v2876, %v2877
        %v2879 = vrot.slane %v2878, 1
        %v2880 = vadd.f32 %v2878, %v2879
        %v2881 = vadd.f32 %v2797, %v2801
        %v2882 = vadd.f32 %v2881, %v2805
        %v2883 = vadd.f32 %v2882, %v2809
        %v2884 = vadd.f32 %v2883, %v2813
        %v2885 = vadd.f32 %v2884, %v2817
        %v2886 = vadd.f32 %v2885, %v2821
        %v2887 = vadd.f32 %v2886, %v2825
        %v2888 = vadd.f32 %v2887, %v2829
        %v2889 = vadd.f32 %v2888, %v2833
        %v2890 = vadd.f32 %v2889, %v2837
        %v2891 = vadd.f32 %v2890, %v2841
        %v2892 = vadd.f32 %v2891, %v2845
        %v2893 = vadd.f32 %v2892, %v2849
        %v2894 = vadd.f32 %v2893, %v2853
        %v2895 = vadd.f32 %v2894, %v2857
        %v2896 = vrot.slane %v2895, 4
        %v2897 = vadd.f32 %v2895, %v2896
        %v2898 = vrot.slane %v2897, 2
        %v2899 = vadd.f32 %v2897, %v2898
        %v2900 = vrot.slane %v2899, 1
        %v2901 = vadd.f32 %v2899, %v2900
        %v2902 = vadd.f32 %v2798, %v2802
        %v2903 = vadd.f32 %v2902, %v2806
        %v2904 = vadd.f32 %v2903, %v2810
        %v2905 = vadd.f32 %v2904, %v2814
        %v2906 = vadd.f32 %v2905, %v2818
        %v2907 = vadd.f32 %v2906, %v2822
        %v2908 = vadd.f32 %v2907, %v2826
        %v2909 = vadd.f32 %v2908, %v2830
        %v2910 = vadd.f32 %v2909, %v2834
        %v2911 = vadd.f32 %v2910, %v2838
        %v2912 = vadd.f32 %v2911, %v2842
        %v2913 = vadd.f32 %v2912, %v2846
        %v2914 = vadd.f32 %v2913, %v2850
        %v2915 = vadd.f32 %v2914, %v2854
        %v2916 = vadd.f32 %v2915, %v2858
        %v2917 = vrot.slane %v2916, 4
        %v2918 = vadd.f32 %v2916, %v2917
        %v2919 = vrot.slane %v2918, 2
        %v2920 = vadd.f32 %v2918, %v2919
        %v2921 = vrot.slane %v2920, 1
        %v2922 = vadd.f32 %v2920, %v2921
        %v2923 = vadd.f32 %v2799, %v2803
        %v2924 = vadd.f32 %v2923, %v2807
        %v2925 = vadd.f32 %v2924, %v2811
        %v2926 = vadd.f32 %v2925, %v2815
        %v2927 = vadd.f32 %v2926, %v2819
        %v2928 = vadd.f32 %v2927, %v2823
        %v2929 = vadd.f32 %v2928, %v2827
        %v2930 = vadd.f32 %v2929, %v2831
        %v2931 = vadd.f32 %v2930, %v2835
        %v2932 = vadd.f32 %v2931, %v2839
        %v2933 = vadd.f32 %v2932, %v2843
        %v2934 = vadd.f32 %v2933, %v2847
        %v2935 = vadd.f32 %v2934, %v2851
        %v2936 = vadd.f32 %v2935, %v2855
        %v2937 = vadd.f32 %v2936, %v2859
        %v2938 = vrot.slane %v2937, 4
        %v2939 = vadd.f32 %v2937, %v2938
        %v2940 = vrot.slane %v2939, 2
        %v2941 = vadd.f32 %v2939, %v2940
        %v2942 = vrot.slane %v2941, 1
        %v2943 = vadd.f32 %v2941, %v2942
        %v2944 = vmul.f32 %v2880, %v1035
        %v2945 = vmul.f32 %v2901, %v1035
        %v2946 = vmul.f32 %v2922, %v1035
        %v2947 = vmul.f32 %v2943, %v1035
        %v2948 = vadd.f32 %v2944, 1e-05
        %v2949 = vadd.f32 %v2945, 1e-05
        %v2950 = vadd.f32 %v2946, 1e-05
        %v2951 = vadd.f32 %v2947, 1e-05
        %v2952 = vrsqrt.pop %v2948
        %v2953 = vrsqrt.pop %v2949
        %v2954 = vrsqrt.pop %v2950
        %v2955 = vrsqrt.pop %v2951
        %v2956 = vmul.f32 %v2732, %v2952
        %v2957 = vmul.f32 %v2733, %v2953
        %v2958 = vmul.f32 %v2734, %v2954
        %v2959 = vmul.f32 %v2735, %v2955
        %v2960 = vmul.f32 %v2736, %v2952
        %v2961 = vmul.f32 %v2737, %v2953
        %v2962 = vmul.f32 %v2738, %v2954
        %v2963 = vmul.f32 %v2739, %v2955
        %v2964 = vmul.f32 %v2740, %v2952
        %v2965 = vmul.f32 %v2741, %v2953
        %v2966 = vmul.f32 %v2742, %v2954
        %v2967 = vmul.f32 %v2743, %v2955
        %v2968 = vmul.f32 %v2744, %v2952
        %v2969 = vmul.f32 %v2745, %v2953
        %v2970 = vmul.f32 %v2746, %v2954
        %v2971 = vmul.f32 %v2747, %v2955
        %v2972 = vmul.f32 %v2748, %v2952
        %v2973 = vmul.f32 %v2749, %v2953
        %v2974 = vmul.f32 %v2750, %v2954
        %v2975 = vmul.f32 %v2751, %v2955
        %v2976 = vmul.f32 %v2752, %v2952
        %v2977 = vmul.f32 %v2753, %v2953
        %v2978 = vmul.f32 %v2754, %v2954
        %v2979 = vmul.f32 %v2755, %v2955
        %v2980 = vmul.f32 %v2756, %v2952
        %v2981 = vmul.f32 %v2757, %v2953
        %v2982 = vmul.f32 %v2758, %v2954
        %v2983 = vmul.f32 %v2759, %v2955
        %v2984 = vmul.f32 %v2760, %v2952
        %v2985 = vmul.f32 %v2761, %v2953
        %v2986 = vmul.f32 %v2762, %v2954
        %v2987 = vmul.f32 %v2763, %v2955
        %v2988 = vmul.f32 %v2764, %v2952
        %v2989 = vmul.f32 %v2765, %v2953
        %v2990 = vmul.f32 %v2766, %v2954
        %v2991 = vmul.f32 %v2767, %v2955
        %v2992 = vmul.f32 %v2768, %v2952
        %v2993 = vmul.f32 %v2769, %v2953
        %v2994 = vmul.f32 %v2770, %v2954
        %v2995 = vmul.f32 %v2771, %v2955
        %v2996 = vmul.f32 %v2772, %v2952
        %v2997 = vmul.f32 %v2773, %v2953
        %v2998 = vmul.f32 %v2774, %v2954
        %v2999 = vmul.f32 %v2775, %v2955
        %v3000 = vmul.f32 %v2776, %v2952
        %v3001 = vmul.f32 %v2777, %v2953
        %v3002 = vmul.f32 %v2778, %v2954
        %v3003 = vmul.f32 %v2779, %v2955
        %v3004 = vmul.f32 %v2780, %v2952
        %v3005 = vmul.f32 %v2781, %v2953
        %v3006 = vmul.f32 %v2782, %v2954
        %v3007 = vmul.f32 %v2783, %v2955
        %v3008 = vmul.f32 %v2784, %v2952
        %v3009 = vmul.f32 %v2785, %v2953
        %v3010 = vmul.f32 %v2786, %v2954
        %v3011 = vmul.f32 %v2787, %v2955
        %v3012 = vmul.f32 %v2788, %v2952
        %v3013 = vmul.f32 %v2789, %v2953
        %v3014 = vmul.f32 %v2790, %v2954
        %v3015 = vmul.f32 %v2791, %v2955
        %v3016 = vmul.f32 %v2792, %v2952
        %v3017 = vmul.f32 %v2793, %v2953
        %v3018 = vmul.f32 %v2794, %v2954
        %v3019 = vmul.f32 %v2795, %v2955
        %v3020 = vmax.f32 %v2956, 0.0
        %v3021 = vmax.f32 %v2957, 0.0
        %v3022 = vmax.f32 %v2958, 0.0
        %v3023 = vmax.f32 %v2959, 0.0
        %v3024 = vmax.f32 %v2960, 0.0
        %v3025 = vmax.f32 %v2961, 0.0
        %v3026 = vmax.f32 %v2962, 0.0
        %v3027 = vmax.f32 %v2963, 0.0
        %v3028 = vmax.f32 %v2964, 0.0
        %v3029 = vmax.f32 %v2965, 0.0
        %v3030 = vmax.f32 %v2966, 0.0
        %v3031 = vmax.f32 %v2967, 0.0
        %v3032 = vmax.f32 %v2968, 0.0
        %v3033 = vmax.f32 %v2969, 0.0
        %v3034 = vmax.f32 %v2970, 0.0
        %v3035 = vmax.f32 %v2971, 0.0
        %v3036 = vmax.f32 %v2972, 0.0
        %v3037 = vmax.f32 %v2973, 0.0
        %v3038 = vmax.f32 %v2974, 0.0
        %v3039 = vmax.f32 %v2975, 0.0
        %v3040 = vmax.f32 %v2976, 0.0
        %v3041 = vmax.f32 %v2977, 0.0
        %v3042 = vmax.f32 %v2978, 0.0
        %v3043 = vmax.f32 %v2979, 0.0
        %v3044 = vmax.f32 %v2980, 0.0
        %v3045 = vmax.f32 %v2981, 0.0
        %v3046 = vmax.f32 %v2982, 0.0
        %v3047 = vmax.f32 %v2983, 0.0
        %v3048 = vmax.f32 %v2984, 0.0
        %v3049 = vmax.f32 %v2985, 0.0
        %v3050 = vmax.f32 %v2986, 0.0
        %v3051 = vmax.f32 %v2987, 0.0
        %v3052 = vmax.f32 %v2988, 0.0
        %v3053 = vmax.f32 %v2989, 0.0
        %v3054 = vmax.f32 %v2990, 0.0
        %v3055 = vmax.f32 %v2991, 0.0
        %v3056 = vmax.f32 %v2992, 0.0
        %v3057 = vmax.f32 %v2993, 0.0
        %v3058 = vmax.f32 %v2994, 0.0
        %v3059 = vmax.f32 %v2995, 0.0
        %v3060 = vmax.f32 %v2996, 0.0
        %v3061 = vmax.f32 %v2997, 0.0
        %v3062 = vmax.f32 %v2998, 0.0
        %v3063 = vmax.f32 %v2999, 0.0
        %v3064 = vmax.f32 %v3000, 0.0
        %v3065 = vmax.f32 %v3001, 0.0
        %v3066 = vmax.f32 %v3002, 0.0
        %v3067 = vmax.f32 %v3003, 0.0
        %v3068 = vmax.f32 %v3004, 0.0
        %v3069 = vmax.f32 %v3005, 0.0
        %v3070 = vmax.f32 %v3006, 0.0
        %v3071 = vmax.f32 %v3007, 0.0
        %v3072 = vmax.f32 %v3008, 0.0
        %v3073 = vmax.f32 %v3009, 0.0
        %v3074 = vmax.f32 %v3010, 0.0
        %v3075 = vmax.f32 %v3011, 0.0
        %v3076 = vmax.f32 %v3012, 0.0
        %v3077 = vmax.f32 %v3013, 0.0
        %v3078 = vmax.f32 %v3014, 0.0
        %v3079 = vmax.f32 %v3015, 0.0
        %v3080 = vmax.f32 %v3016, 0.0
        %v3081 = vmax.f32 %v3017, 0.0
        %v3082 = vmax.f32 %v3018, 0.0
        %v3083 = vmax.f32 %v3019, 0.0
        %v3084 = vpack.c.bf16 %v3024, %v3020
        %v3085 = vpack.c.bf16 %v3025, %v3021
        %v3086 = vpack.c.bf16 %v3026, %v3022
        %v3087 = vpack.c.bf16 %v3027, %v3023
        %v3088 = vpack.c.bf16 %v3032, %v3028
        %v3089 = vpack.c.bf16 %v3033, %v3029
        %v3090 = vpack.c.bf16 %v3034, %v3030
        %v3091 = vpack.c.bf16 %v3035, %v3031
        %v3092 = vpack.c.bf16 %v3040, %v3036
        %v3093 = vpack.c.bf16 %v3041, %v3037
        %v3094 = vpack.c.bf16 %v3042, %v3038
        %v3095 = vpack.c.bf16 %v3043, %v3039
        %v3096 = vpack.c.bf16 %v3048, %v3044
        %v3097 = vpack.c.bf16 %v3049, %v3045
        %v3098 = vpack.c.bf16 %v3050, %v3046
        %v3099 = vpack.c.bf16 %v3051, %v3047
        %v3100 = vpack.c.bf16 %v3056, %v3052
        %v3101 = vpack.c.bf16 %v3057, %v3053
        %v3102 = vpack.c.bf16 %v3058, %v3054
        %v3103 = vpack.c.bf16 %v3059, %v3055
        %v3104 = vpack.c.bf16 %v3064, %v3060
        %v3105 = vpack.c.bf16 %v3065, %v3061
        %v3106 = vpack.c.bf16 %v3066, %v3062
        %v3107 = vpack.c.bf16 %v3067, %v3063
        %v3108 = vpack.c.bf16 %v3072, %v3068
        %v3109 = vpack.c.bf16 %v3073, %v3069
        %v3110 = vpack.c.bf16 %v3074, %v3070
        %v3111 = vpack.c.bf16 %v3075, %v3071
        %v3112 = vpack.c.bf16 %v3080, %v3076
        %v3113 = vpack.c.bf16 %v3081, %v3077
        %v3114 = vpack.c.bf16 %v3082, %v3078
        %v3115 = vpack.c.bf16 %v3083, %v3079
        %v3116 = vld [vmem:[%s218] sm:$0xff]
        %v3117 = vld [vmem:[%s218 + $0x8] sm:$0xff]
        %v3118 = vld [vmem:[%s218 + $0x10] sm:$0xff]
        %v3119 = vld [vmem:[%s218 + $0x18] sm:$0xff]
        %v3120 = vld [vmem:[%s218 + $0x20] sm:$0xff]
        %v3121 = vld [vmem:[%s218 + $0x28] sm:$0xff]
        %v3122 = vld [vmem:[%s218 + $0x30] sm:$0xff]
        %v3123 = vld [vmem:[%s218 + $0x38] sm:$0xff]
        %v3124 = vld [vmem:[%s218 + $0x40] sm:$0xff]
        %v3125 = vld [vmem:[%s218 + $0x48] sm:$0xff]
        %v3126 = vld [vmem:[%s218 + $0x50] sm:$0xff]
        %v3127 = vld [vmem:[%s218 + $0x58] sm:$0xff]
        %v3128 = vld [vmem:[%s218 + $0x60] sm:$0xff]
        %v3129 = vld [vmem:[%s218 + $0x68] sm:$0xff]
        %v3130 = vld [vmem:[%s218 + $0x70] sm:$0xff]
        %v3131 = vld [vmem:[%s218 + $0x78] sm:$0xff]
        %v3132 = vld [vmem:[%s218 + $0x80] sm:$0xff]
        %v3133 = vld [vmem:[%s218 + $0x88] sm:$0xff]
        %v3134 = vld [vmem:[%s218 + $0x90] sm:$0xff]
        %v3135 = vld [vmem:[%s218 + $0x98] sm:$0xff]
        %v3136 = vld [vmem:[%s218 + $0xa0] sm:$0xff]
        %v3137 = vld [vmem:[%s218 + $0xa8] sm:$0xff]
        %v3138 = vld [vmem:[%s218 + $0xb0] sm:$0xff]
        %v3139 = vld [vmem:[%s218 + $0xb8] sm:$0xff]
        %v3140 = vld [vmem:[%s218 + $0xc0] sm:$0xff]
        %v3141 = vld [vmem:[%s218 + $0xc8] sm:$0xff]
        %v3142 = vld [vmem:[%s218 + $0xd0] sm:$0xff]
        %v3143 = vld [vmem:[%s218 + $0xd8] sm:$0xff]
        %v3144 = vld [vmem:[%s218 + $0xe0] sm:$0xff]
        %v3145 = vld [vmem:[%s218 + $0xe8] sm:$0xff]
        %v3146 = vld [vmem:[%s218 + $0xf0] sm:$0xff]
        %v3147 = vld [vmem:[%s218 + $0xf8] sm:$0xff]
        %v3148 = vld [vmem:[%s218 + $0x100] sm:$0xff]
        %v3149 = vld [vmem:[%s218 + $0x108] sm:$0xff]
        %v3150 = vld [vmem:[%s218 + $0x110] sm:$0xff]
        %v3151 = vld [vmem:[%s218 + $0x118] sm:$0xff]
        %v3152 = vld [vmem:[%s218 + $0x120] sm:$0xff]
        %v3153 = vld [vmem:[%s218 + $0x128] sm:$0xff]
        %v3154 = vld [vmem:[%s218 + $0x130] sm:$0xff]
        %v3155 = vld [vmem:[%s218 + $0x138] sm:$0xff]
        %v3156 = vld [vmem:[%s218 + $0x140] sm:$0xff]
        %v3157 = vld [vmem:[%s218 + $0x148] sm:$0xff]
        %v3158 = vld [vmem:[%s218 + $0x150] sm:$0xff]
        %v3159 = vld [vmem:[%s218 + $0x158] sm:$0xff]
        %v3160 = vld [vmem:[%s218 + $0x160] sm:$0xff]
        %v3161 = vld [vmem:[%s218 + $0x168] sm:$0xff]
        %v3162 = vld [vmem:[%s218 + $0x170] sm:$0xff]
        %v3163 = vld [vmem:[%s218 + $0x178] sm:$0xff]
        %v3164 = vld [vmem:[%s218 + $0x180] sm:$0xff]
        %v3165 = vld [vmem:[%s218 + $0x188] sm:$0xff]
        %v3166 = vld [vmem:[%s218 + $0x190] sm:$0xff]
        %v3167 = vld [vmem:[%s218 + $0x198] sm:$0xff]
        %v3168 = vld [vmem:[%s218 + $0x1a0] sm:$0xff]
        %v3169 = vld [vmem:[%s218 + $0x1a8] sm:$0xff]
        %v3170 = vld [vmem:[%s218 + $0x1b0] sm:$0xff]
        %v3171 = vld [vmem:[%s218 + $0x1b8] sm:$0xff]
        %v3172 = vld [vmem:[%s218 + $0x1c0] sm:$0xff]
        %v3173 = vld [vmem:[%s218 + $0x1c8] sm:$0xff]
        %v3174 = vld [vmem:[%s218 + $0x1d0] sm:$0xff]
        %v3175 = vld [vmem:[%s218 + $0x1d8] sm:$0xff]
        %v3176 = vld [vmem:[%s218 + $0x1e0] sm:$0xff]
        %v3177 = vld [vmem:[%s218 + $0x1e8] sm:$0xff]
        %v3178 = vld [vmem:[%s218 + $0x1f0] sm:$0xff]
        %v3179 = vld [vmem:[%s218 + $0x1f8] sm:$0xff]
        %v3244 = vunpack.c.l.b16 %v3116
        %v3245 = vunpack.c.h.b16 %v3116
        %v3246 = vunpack.c.l.b16 %v3117
        %v3247 = vunpack.c.h.b16 %v3117
        %v3248 = vunpack.c.l.b16 %v3118
        %v3249 = vunpack.c.h.b16 %v3118
        %v3250 = vunpack.c.l.b16 %v3119
        %v3251 = vunpack.c.h.b16 %v3119
        %v3252 = vunpack.c.l.b16 %v3120
        %v3253 = vunpack.c.h.b16 %v3120
        %v3254 = vunpack.c.l.b16 %v3121
        %v3255 = vunpack.c.h.b16 %v3121
        %v3256 = vunpack.c.l.b16 %v3122
        %v3257 = vunpack.c.h.b16 %v3122
        %v3258 = vunpack.c.l.b16 %v3123
        %v3259 = vunpack.c.h.b16 %v3123
        %v3260 = vunpack.c.l.b16 %v3124
        %v3261 = vunpack.c.h.b16 %v3124
        %v3262 = vunpack.c.l.b16 %v3125
        %v3263 = vunpack.c.h.b16 %v3125
        %v3264 = vunpack.c.l.b16 %v3126
        %v3265 = vunpack.c.h.b16 %v3126
        %v3266 = vunpack.c.l.b16 %v3127
        %v3267 = vunpack.c.h.b16 %v3127
        %v3268 = vunpack.c.l.b16 %v3128
        %v3269 = vunpack.c.h.b16 %v3128
        %v3270 = vunpack.c.l.b16 %v3129
        %v3271 = vunpack.c.h.b16 %v3129
        %v3272 = vunpack.c.l.b16 %v3130
        %v3273 = vunpack.c.h.b16 %v3130
        %v3274 = vunpack.c.l.b16 %v3131
        %v3275 = vunpack.c.h.b16 %v3131
        %v3276 = vunpack.c.l.b16 %v3132
        %v3277 = vunpack.c.h.b16 %v3132
        %v3278 = vunpack.c.l.b16 %v3133
        %v3279 = vunpack.c.h.b16 %v3133
        %v3280 = vunpack.c.l.b16 %v3134
        %v3281 = vunpack.c.h.b16 %v3134
        %v3282 = vunpack.c.l.b16 %v3135
        %v3283 = vunpack.c.h.b16 %v3135
        %v3284 = vunpack.c.l.b16 %v3136
        %v3285 = vunpack.c.h.b16 %v3136
        %v3286 = vunpack.c.l.b16 %v3137
        %v3287 = vunpack.c.h.b16 %v3137
        %v3288 = vunpack.c.l.b16 %v3138
        %v3289 = vunpack.c.h.b16 %v3138
        %v3290 = vunpack.c.l.b16 %v3139
        %v3291 = vunpack.c.h.b16 %v3139
        %v3292 = vunpack.c.l.b16 %v3140
        %v3293 = vunpack.c.h.b16 %v3140
        %v3294 = vunpack.c.l.b16 %v3141
        %v3295 = vunpack.c.h.b16 %v3141
        %v3296 = vunpack.c.l.b16 %v3142
        %v3297 = vunpack.c.h.b16 %v3142
        %v3298 = vunpack.c.l.b16 %v3143
        %v3299 = vunpack.c.h.b16 %v3143
        %v3300 = vunpack.c.l.b16 %v3144
        %v3301 = vunpack.c.h.b16 %v3144
        %v3302 = vunpack.c.l.b16 %v3145
        %v3303 = vunpack.c.h.b16 %v3145
        %v3304 = vunpack.c.l.b16 %v3146
        %v3305 = vunpack.c.h.b16 %v3146
        %v3306 = vunpack.c.l.b16 %v3147
        %v3307 = vunpack.c.h.b16 %v3147
        %v3308 = vunpack.c.l.b16 %v3148
        %v3309 = vunpack.c.h.b16 %v3148
        %v3310 = vunpack.c.l.b16 %v3149
        %v3311 = vunpack.c.h.b16 %v3149
        %v3312 = vunpack.c.l.b16 %v3150
        %v3313 = vunpack.c.h.b16 %v3150
        %v3314 = vunpack.c.l.b16 %v3151
        %v3315 = vunpack.c.h.b16 %v3151
        %v3316 = vunpack.c.l.b16 %v3152
        %v3317 = vunpack.c.h.b16 %v3152
        %v3318 = vunpack.c.l.b16 %v3153
        %v3319 = vunpack.c.h.b16 %v3153
        %v3320 = vunpack.c.l.b16 %v3154
        %v3321 = vunpack.c.h.b16 %v3154
        %v3322 = vunpack.c.l.b16 %v3155
        %v3323 = vunpack.c.h.b16 %v3155
        %v3324 = vunpack.c.l.b16 %v3156
        %v3325 = vunpack.c.h.b16 %v3156
        %v3326 = vunpack.c.l.b16 %v3157
        %v3327 = vunpack.c.h.b16 %v3157
        %v3328 = vunpack.c.l.b16 %v3158
        %v3329 = vunpack.c.h.b16 %v3158
        %v3330 = vunpack.c.l.b16 %v3159
        %v3331 = vunpack.c.h.b16 %v3159
        %v3332 = vunpack.c.l.b16 %v3160
        %v3333 = vunpack.c.h.b16 %v3160
        %v3334 = vunpack.c.l.b16 %v3161
        %v3335 = vunpack.c.h.b16 %v3161
        %v3336 = vunpack.c.l.b16 %v3162
        %v3337 = vunpack.c.h.b16 %v3162
        %v3338 = vunpack.c.l.b16 %v3163
        %v3339 = vunpack.c.h.b16 %v3163
        %v3340 = vunpack.c.l.b16 %v3164
        %v3341 = vunpack.c.h.b16 %v3164
        %v3342 = vunpack.c.l.b16 %v3165
        %v3343 = vunpack.c.h.b16 %v3165
        %v3344 = vunpack.c.l.b16 %v3166
        %v3345 = vunpack.c.h.b16 %v3166
        %v3346 = vunpack.c.l.b16 %v3167
        %v3347 = vunpack.c.h.b16 %v3167
        %v3348 = vunpack.c.l.b16 %v3168
        %v3349 = vunpack.c.h.b16 %v3168
        %v3350 = vunpack.c.l.b16 %v3169
        %v3351 = vunpack.c.h.b16 %v3169
        %v3352 = vunpack.c.l.b16 %v3170
        %v3353 = vunpack.c.h.b16 %v3170
        %v3354 = vunpack.c.l.b16 %v3171
        %v3355 = vunpack.c.h.b16 %v3171
        %v3356 = vunpack.c.l.b16 %v3172
        %v3357 = vunpack.c.h.b16 %v3172
        %v3358 = vunpack.c.l.b16 %v3173
        %v3359 = vunpack.c.h.b16 %v3173
        %v3360 = vunpack.c.l.b16 %v3174
        %v3361 = vunpack.c.h.b16 %v3174
        %v3362 = vunpack.c.l.b16 %v3175
        %v3363 = vunpack.c.h.b16 %v3175
        %v3364 = vunpack.c.l.b16 %v3176
        %v3365 = vunpack.c.h.b16 %v3176
        %v3366 = vunpack.c.l.b16 %v3177
        %v3367 = vunpack.c.h.b16 %v3177
        %v3368 = vunpack.c.l.b16 %v3178
        %v3369 = vunpack.c.h.b16 %v3178
        %v3370 = vunpack.c.l.b16 %v3179
        %v3371 = vunpack.c.h.b16 %v3179
        %v3372 = vpack.c.b16 %v3246, %v3244
        %v3373 = vpack.c.b16 %v3247, %v3245
        %v3374 = vpack.c.b16 %v3250, %v3248
        %v3375 = vpack.c.b16 %v3251, %v3249
        %v3376 = vpack.c.b16 %v3254, %v3252
        %v3377 = vpack.c.b16 %v3255, %v3253
        %v3378 = vpack.c.b16 %v3258, %v3256
        %v3379 = vpack.c.b16 %v3259, %v3257
        %v3380 = vpack.c.b16 %v3262, %v3260
        %v3381 = vpack.c.b16 %v3263, %v3261
        %v3382 = vpack.c.b16 %v3266, %v3264
        %v3383 = vpack.c.b16 %v3267, %v3265
        %v3384 = vpack.c.b16 %v3270, %v3268
        %v3385 = vpack.c.b16 %v3271, %v3269
        %v3386 = vpack.c.b16 %v3274, %v3272
        %v3387 = vpack.c.b16 %v3275, %v3273
        %v3388 = vpack.c.b16 %v3278, %v3276
        %v3389 = vpack.c.b16 %v3279, %v3277
        %v3390 = vpack.c.b16 %v3282, %v3280
        %v3391 = vpack.c.b16 %v3283, %v3281
        %v3392 = vpack.c.b16 %v3286, %v3284
        %v3393 = vpack.c.b16 %v3287, %v3285
        %v3394 = vpack.c.b16 %v3290, %v3288
        %v3395 = vpack.c.b16 %v3291, %v3289
        %v3396 = vpack.c.b16 %v3294, %v3292
        %v3397 = vpack.c.b16 %v3295, %v3293
        %v3398 = vpack.c.b16 %v3298, %v3296
        %v3399 = vpack.c.b16 %v3299, %v3297
        %v3400 = vpack.c.b16 %v3302, %v3300
        %v3401 = vpack.c.b16 %v3303, %v3301
        %v3402 = vpack.c.b16 %v3306, %v3304
        %v3403 = vpack.c.b16 %v3307, %v3305
        %v3404 = vpack.c.b16 %v3310, %v3308
        %v3405 = vpack.c.b16 %v3311, %v3309
        %v3406 = vpack.c.b16 %v3314, %v3312
        %v3407 = vpack.c.b16 %v3315, %v3313
        %v3408 = vpack.c.b16 %v3318, %v3316
        %v3409 = vpack.c.b16 %v3319, %v3317
        %v3410 = vpack.c.b16 %v3322, %v3320
        %v3411 = vpack.c.b16 %v3323, %v3321
        %v3412 = vpack.c.b16 %v3326, %v3324
        %v3413 = vpack.c.b16 %v3327, %v3325
        %v3414 = vpack.c.b16 %v3330, %v3328
        %v3415 = vpack.c.b16 %v3331, %v3329
        %v3416 = vpack.c.b16 %v3334, %v3332
        %v3417 = vpack.c.b16 %v3335, %v3333
        %v3418 = vpack.c.b16 %v3338, %v3336
        %v3419 = vpack.c.b16 %v3339, %v3337
        %v3420 = vpack.c.b16 %v3342, %v3340
        %v3421 = vpack.c.b16 %v3343, %v3341
        %v3422 = vpack.c.b16 %v3346, %v3344
        %v3423 = vpack.c.b16 %v3347, %v3345
        %v3424 = vpack.c.b16 %v3350, %v3348
        %v3425 = vpack.c.b16 %v3351, %v3349
        %v3426 = vpack.c.b16 %v3354, %v3352
        %v3427 = vpack.c.b16 %v3355, %v3353
        %v3428 = vpack.c.b16 %v3358, %v3356
        %v3429 = vpack.c.b16 %v3359, %v3357
        %v3430 = vpack.c.b16 %v3362, %v3360
        %v3431 = vpack.c.b16 %v3363, %v3361
        %v3432 = vpack.c.b16 %v3366, %v3364
        %v3433 = vpack.c.b16 %v3367, %v3365
        %v3434 = vpack.c.b16 %v3370, %v3368
        %v3435 = vpack.c.b16 %v3371, %v3369
        %3500 = vmatprep.subr.bf16.mxu0 %v3373
        %3501 = vmatpush1.bf16.msra.mxu0 %v3372
        %3502 = vmatprep.subr.bf16.mxu0 %v3375
        %3503 = vmatpush1.bf16.msra.mxu0 %v3374
        %3504 = vmatprep.subr.bf16.mxu0 %v3377
        %3505 = vmatpush1.bf16.msra.mxu0 %v3376
        %3506 = vmatprep.subr.bf16.mxu0 %v3379
        %3507 = vmatpush1.bf16.msra.mxu0 %v3378
        %3508 = vmatprep.subr.bf16.mxu0 %v3381
        %3509 = vmatpush1.bf16.msra.mxu0 %v3380
        %3510 = vmatprep.subr.bf16.mxu0 %v3383
        %3511 = vmatpush1.bf16.msra.mxu0 %v3382
        %3512 = vmatprep.subr.bf16.mxu0 %v3385
        %3513 = vmatpush1.bf16.msra.mxu0 %v3384
        %3514 = vmatprep.subr.bf16.mxu0 %v3387
        %3515 = vmatpush1.bf16.msra.mxu0 %v3386
        %3516 = vmatprep.subr.bf16.mxu0 %v3389
        %3517 = vmatpush1.bf16.msra.mxu0 %v3388
        %3518 = vmatprep.subr.bf16.mxu0 %v3391
        %3519 = vmatpush1.bf16.msra.mxu0 %v3390
        %3520 = vmatprep.subr.bf16.mxu0 %v3393
        %3521 = vmatpush1.bf16.msra.mxu0 %v3392
        %3522 = vmatprep.subr.bf16.mxu0 %v3395
        %3523 = vmatpush1.bf16.msra.mxu0 %v3394
        %3524 = vmatprep.subr.bf16.mxu0 %v3397
        %3525 = vmatpush1.bf16.msra.mxu0 %v3396
        %3526 = vmatprep.subr.bf16.mxu0 %v3399
        %3527 = vmatpush1.bf16.msra.mxu0 %v3398
        %3528 = vmatprep.subr.bf16.mxu0 %v3401
        %3529 = vmatpush1.bf16.msra.mxu0 %v3400
        %3530 = vmatprep.subr.bf16.mxu0 %v3403
        %3531 = vmatpush1.bf16.msra.mxu0 %v3402
        %3532 = vmatprep.mubr.bf16.mxu0 %v3085
        %3533 = vmatmul.mubr.bf16.gmra.mrb[0].mxu0 %v3084
        %v3534 = vpop.f32.mrb[0].mxu0
        %v3535 = vadd.f32 0.0, %v3534
        %v3536 = vpop.f32.mrb[0].mxu0
        %v3537 = vadd.f32 0.0, %v3536
        %v3538 = vpop.f32.mrb[0].mxu0
        %v3539 = vadd.f32 0.0, %v3538
        %v3540 = vpop.f32.mrb[0].mxu0
        %v3541 = vadd.f32 0.0, %v3540
        %3542 = vmatprep.mubr.bf16.mxu0 %v3089
        %3543 = vmatmul.mubr.bf16.gmra.mrb[0].mxu0 %v3088
        %v3544 = vpop.f32.mrb[0].mxu0
        %v3545 = vadd.f32 0.0, %v3544
        %v3546 = vpop.f32.mrb[0].mxu0
        %v3547 = vadd.f32 0.0, %v3546
        %v3548 = vpop.f32.mrb[0].mxu0
        %v3549 = vadd.f32 0.0, %v3548
        %v3550 = vpop.f32.mrb[0].mxu0
        %v3551 = vadd.f32 0.0, %v3550
        %3552 = vmatprep.mubr.bf16.mxu0 %v3093
        %3553 = vmatmul.mubr.bf16.gmra.mrb[0].mxu0 %v3092
        %v3554 = vpop.f32.mrb[0].mxu0
        %v3555 = vadd.f32 0.0, %v3554
        %v3556 = vpop.f32.mrb[0].mxu0
        %v3557 = vadd.f32 0.0, %v3556
        %v3558 = vpop.f32.mrb[0].mxu0
        %v3559 = vadd.f32 0.0, %v3558
        %v3560 = vpop.f32.mrb[0].mxu0
        %v3561 = vadd.f32 0.0, %v3560
        %3562 = vmatprep.mubr.bf16.mxu0 %v3097
        %3563 = vmatmul.mubr.bf16.gmra.mrb[0].mxu0 %v3096
        %v3564 = vpop.f32.mrb[0].mxu0
        %v3565 = vadd.f32 0.0, %v3564
        %v3566 = vpop.f32.mrb[0].mxu0
        %v3567 = vadd.f32 0.0, %v3566
        %v3568 = vpop.f32.mrb[0].mxu0
        %v3569 = vadd.f32 0.0, %v3568
        %v3570 = vpop.f32.mrb[0].mxu0
        %v3571 = vadd.f32 0.0, %v3570
        %3572 = vmatprep.mubr.bf16.mxu0 %v3101
        %3573 = vmatmul.mubr.bf16.gmra.mrb[0].mxu0 %v3100
        %v3574 = vpop.f32.mrb[0].mxu0
        %v3575 = vadd.f32 0.0, %v3574
        %v3576 = vpop.f32.mrb[0].mxu0
        %v3577 = vadd.f32 0.0, %v3576
        %v3578 = vpop.f32.mrb[0].mxu0
        %v3579 = vadd.f32 0.0, %v3578
        %v3580 = vpop.f32.mrb[0].mxu0
        %v3581 = vadd.f32 0.0, %v3580
        %3582 = vmatprep.mubr.bf16.mxu0 %v3105
        %3583 = vmatmul.mubr.bf16.gmra.mrb[0].mxu0 %v3104
        %v3584 = vpop.f32.mrb[0].mxu0
        %v3585 = vadd.f32 0.0, %v3584
        %v3586 = vpop.f32.mrb[0].mxu0
        %v3587 = vadd.f32 0.0, %v3586
        %v3588 = vpop.f32.mrb[0].mxu0
        %v3589 = vadd.f32 0.0, %v3588
        %v3590 = vpop.f32.mrb[0].mxu0
        %v3591 = vadd.f32 0.0, %v3590
        %3592 = vmatprep.mubr.bf16.mxu0 %v3109
        %3593 = vmatmul.mubr.bf16.gmra.mrb[0].mxu0 %v3108
        %v3594 = vpop.f32.mrb[0].mxu0
        %v3595 = vadd.f32 0.0, %v3594
        %v3596 = vpop.f32.mrb[0].mxu0
        %v3597 = vadd.f32 0.0, %v3596
        %v3598 = vpop.f32.mrb[0].mxu0
        %v3599 = vadd.f32 0.0, %v3598
        %v3600 = vpop.f32.mrb[0].mxu0
        %v3601 = vadd.f32 0.0, %v3600
        %3602 = vmatprep.mubr.bf16.mxu0 %v3113
        %3603 = vmatmul.mubr.bf16.gmra.mrb[0].mxu0 %v3112
        %v3604 = vpop.f32.mrb[0].mxu0
        %v3605 = vadd.f32 0.0, %v3604
        %v3606 = vpop.f32.mrb[0].mxu0
        %v3607 = vadd.f32 0.0, %v3606
        %v3608 = vpop.f32.mrb[0].mxu0
        %v3609 = vadd.f32 0.0, %v3608
        %v3610 = vpop.f32.mrb[0].mxu0
        %v3611 = vadd.f32 0.0, %v3610
        %3612 = vdwg.mxu0
        %3613 = vmatprep.subr.bf16.mxu0 %v3405
        %3614 = vmatpush1.bf16.msra.mxu0 %v3404
        %3615 = vmatprep.subr.bf16.mxu0 %v3407
        %3616 = vmatpush1.bf16.msra.mxu0 %v3406
        %3617 = vmatprep.subr.bf16.mxu0 %v3409
        %3618 = vmatpush1.bf16.msra.mxu0 %v3408
        %3619 = vmatprep.subr.bf16.mxu0 %v3411
        %3620 = vmatpush1.bf16.msra.mxu0 %v3410
        %3621 = vmatprep.subr.bf16.mxu0 %v3413
        %3622 = vmatpush1.bf16.msra.mxu0 %v3412
        %3623 = vmatprep.subr.bf16.mxu0 %v3415
        %3624 = vmatpush1.bf16.msra.mxu0 %v3414
        %3625 = vmatprep.subr.bf16.mxu0 %v3417
        %3626 = vmatpush1.bf16.msra.mxu0 %v3416
        %3627 = vmatprep.subr.bf16.mxu0 %v3419
        %3628 = vmatpush1.bf16.msra.mxu0 %v3418
        %3629 = vmatprep.subr.bf16.mxu0 %v3421
        %3630 = vmatpush1.bf16.msra.mxu0 %v3420
        %3631 = vmatprep.subr.bf16.mxu0 %v3423
        %3632 = vmatpush1.bf16.msra.mxu0 %v3422
        %3633 = vmatprep.subr.bf16.mxu0 %v3425
        %3634 = vmatpush1.bf16.msra.mxu0 %v3424
        %3635 = vmatprep.subr.bf16.mxu0 %v3427
        %3636 = vmatpush1.bf16.msra.mxu0 %v3426
        %3637 = vmatprep.subr.bf16.mxu0 %v3429
        %3638 = vmatpush1.bf16.msra.mxu0 %v3428
        %3639 = vmatprep.subr.bf16.mxu0 %v3431
        %3640 = vmatpush1.bf16.msra.mxu0 %v3430
        %3641 = vmatprep.subr.bf16.mxu0 %v3433
        %3642 = vmatpush1.bf16.msra.mxu0 %v3432
        %3643 = vmatprep.subr.bf16.mxu0 %v3435
        %3644 = vmatpush1.bf16.msra.mxu0 %v3434
        %3645 = vmatprep.mubr.bf16.mxu0 %v3087
        %3646 = vmatmul.mubr.bf16.gmra.mrb[0].mxu0 %v3086
        %v3647 = vpop.f32.mrb[0].mxu0
        %v3648 = vadd.f32 %v3535, %v3647
        %v3649 = vpop.f32.mrb[0].mxu0
        %v3650 = vadd.f32 %v3537, %v3649
        %v3651 = vpop.f32.mrb[0].mxu0
        %v3652 = vadd.f32 %v3539, %v3651
        %v3653 = vpop.f32.mrb[0].mxu0
        %v3654 = vadd.f32 %v3541, %v3653
        %3655 = vmatprep.mubr.bf16.mxu0 %v3091
        %3656 = vmatmul.mubr.bf16.gmra.mrb[0].mxu0 %v3090
        %v3657 = vpop.f32.mrb[0].mxu0
        %v3658 = vadd.f32 %v3545, %v3657
        %v3659 = vpop.f32.mrb[0].mxu0
        %v3660 = vadd.f32 %v3547, %v3659
        %v3661 = vpop.f32.mrb[0].mxu0
        %v3662 = vadd.f32 %v3549, %v3661
        %v3663 = vpop.f32.mrb[0].mxu0
        %v3664 = vadd.f32 %v3551, %v3663
        %3665 = vmatprep.mubr.bf16.mxu0 %v3095
        %3666 = vmatmul.mubr.bf16.gmra.mrb[0].mxu0 %v3094
        %v3667 = vpop.f32.mrb[0].mxu0
        %v3668 = vadd.f32 %v3555, %v3667
        %v3669 = vpop.f32.mrb[0].mxu0
        %v3670 = vadd.f32 %v3557, %v3669
        %v3671 = vpop.f32.mrb[0].mxu0
        %v3672 = vadd.f32 %v3559, %v3671
        %v3673 = vpop.f32.mrb[0].mxu0
        %v3674 = vadd.f32 %v3561, %v3673
        %3675 = vmatprep.mubr.bf16.mxu0 %v3099
        %3676 = vmatmul.mubr.bf16.gmra.mrb[0].mxu0 %v3098
        %v3677 = vpop.f32.mrb[0].mxu0
        %v3678 = vadd.f32 %v3565, %v3677
        %v3679 = vpop.f32.mrb[0].mxu0
        %v3680 = vadd.f32 %v3567, %v3679
        %v3681 = vpop.f32.mrb[0].mxu0
        %v3682 = vadd.f32 %v3569, %v3681
        %v3683 = vpop.f32.mrb[0].mxu0
        %v3684 = vadd.f32 %v3571, %v3683
        %3685 = vmatprep.mubr.bf16.mxu0 %v3103
        %3686 = vmatmul.mubr.bf16.gmra.mrb[0].mxu0 %v3102
        %v3687 = vpop.f32.mrb[0].mxu0
        %v3688 = vadd.f32 %v3575, %v3687
        %v3689 = vpop.f32.mrb[0].mxu0
        %v3690 = vadd.f32 %v3577, %v3689
        %v3691 = vpop.f32.mrb[0].mxu0
        %v3692 = vadd.f32 %v3579, %v3691
        %v3693 = vpop.f32.mrb[0].mxu0
        %v3694 = vadd.f32 %v3581, %v3693
        %3695 = vmatprep.mubr.bf16.mxu0 %v3107
        %3696 = vmatmul.mubr.bf16.gmra.mrb[0].mxu0 %v3106
        %v3697 = vpop.f32.mrb[0].mxu0
        %v3698 = vadd.f32 %v3585, %v3697
        %v3699 = vpop.f32.mrb[0].mxu0
        %v3700 = vadd.f32 %v3587, %v3699
        %v3701 = vpop.f32.mrb[0].mxu0
        %v3702 = vadd.f32 %v3589, %v3701
        %v3703 = vpop.f32.mrb[0].mxu0
        %v3704 = vadd.f32 %v3591, %v3703
        %3705 = vmatprep.mubr.bf16.mxu0 %v3111
        %3706 = vmatmul.mubr.bf16.gmra.mrb[0].mxu0 %v3110
        %v3707 = vpop.f32.mrb[0].mxu0
        %v3708 = vadd.f32 %v3595, %v3707
        %v3709 = vpop.f32.mrb[0].mxu0
        %v3710 = vadd.f32 %v3597, %v3709
        %v3711 = vpop.f32.mrb[0].mxu0
        %v3712 = vadd.f32 %v3599, %v3711
        %v3713 = vpop.f32.mrb[0].mxu0
        %v3714 = vadd.f32 %v3601, %v3713
        %3715 = vmatprep.mubr.bf16.mxu0 %v3115
        %3716 = vmatmul.mubr.bf16.gmra.mrb[0].mxu0 %v3114
        %v3717 = vpop.f32.mrb[0].mxu0
        %v3718 = vadd.f32 %v3605, %v3717
        %v3719 = vpop.f32.mrb[0].mxu0
        %v3720 = vadd.f32 %v3607, %v3719
        %v3721 = vpop.f32.mrb[0].mxu0
        %v3722 = vadd.f32 %v3609, %v3721
        %v3723 = vpop.f32.mrb[0].mxu0
        %v3724 = vadd.f32 %v3611, %v3723
        %3725 = vdwg.mxu0
        %v3726 = vadd.f32 %v3648, %v3652
        %v3727 = vadd.f32 %v3726, %v3658
        %v3728 = vadd.f32 %v3727, %v3662
        %v3729 = vadd.f32 %v3728, %v3668
        %v3730 = vadd.f32 %v3729, %v3672
        %v3731 = vadd.f32 %v3730, %v3678
        %v3732 = vadd.f32 %v3731, %v3682
        %v3733 = vadd.f32 %v3732, %v3688
        %v3734 = vadd.f32 %v3733, %v3692
        %v3735 = vadd.f32 %v3734, %v3698
        %v3736 = vadd.f32 %v3735, %v3702
        %v3737 = vadd.f32 %v3736, %v3708
        %v3738 = vadd.f32 %v3737, %v3712
        %v3739 = vadd.f32 %v3738, %v3718
        %v3740 = vadd.f32 %v3739, %v3722
        %v3741 = vrot.slane %v3740, 4
        %v3742 = vadd.f32 %v3740, %v3741
        %v3743 = vrot.slane %v3742, 2
        %v3744 = vadd.f32 %v3742, %v3743
        %v3745 = vrot.slane %v3744, 1
        %v3746 = vadd.f32 %v3744, %v3745
        %v3747 = vadd.f32 %v3650, %v3654
        %v3748 = vadd.f32 %v3747, %v3660
        %v3749 = vadd.f32 %v3748, %v3664
        %v3750 = vadd.f32 %v3749, %v3670
        %v3751 = vadd.f32 %v3750, %v3674
        %v3752 = vadd.f32 %v3751, %v3680
        %v3753 = vadd.f32 %v3752, %v3684
        %v3754 = vadd.f32 %v3753, %v3690
        %v3755 = vadd.f32 %v3754, %v3694
        %v3756 = vadd.f32 %v3755, %v3700
        %v3757 = vadd.f32 %v3756, %v3704
        %v3758 = vadd.f32 %v3757, %v3710
        %v3759 = vadd.f32 %v3758, %v3714
        %v3760 = vadd.f32 %v3759, %v3720
        %v3761 = vadd.f32 %v3760, %v3724
        %v3762 = vrot.slane %v3761, 4
        %v3763 = vadd.f32 %v3761, %v3762
        %v3764 = vrot.slane %v3763, 2
        %v3765 = vadd.f32 %v3763, %v3764
        %v3766 = vrot.slane %v3765, 1
        %v3767 = vadd.f32 %v3765, %v3766
        %v3768 = vmul.f32 %v3746, %v1035
        %v3769 = vmul.f32 %v3767, %v1035
        %v3770 = vsub.f32 %v3648, %v3768
        %v3771 = vsub.f32 %v3650, %v3769
        %v3772 = vsub.f32 %v3652, %v3768
        %v3773 = vsub.f32 %v3654, %v3769
        %v3774 = vsub.f32 %v3658, %v3768
        %v3775 = vsub.f32 %v3660, %v3769
        %v3776 = vsub.f32 %v3662, %v3768
        %v3777 = vsub.f32 %v3664, %v3769
        %v3778 = vsub.f32 %v3668, %v3768
        %v3779 = vsub.f32 %v3670, %v3769
        %v3780 = vsub.f32 %v3672, %v3768
        %v3781 = vsub.f32 %v3674, %v3769
        %v3782 = vsub.f32 %v3678, %v3768
        %v3783 = vsub.f32 %v3680, %v3769
        %v3784 = vsub.f32 %v3682, %v3768
        %v3785 = vsub.f32 %v3684, %v3769
        %v3786 = vsub.f32 %v3688, %v3768
        %v3787 = vsub.f32 %v3690, %v3769
        %v3788 = vsub.f32 %v3692, %v3768
        %v3789 = vsub.f32 %v3694, %v3769
        %v3790 = vsub.f32 %v3698, %v3768
        %v3791 = vsub.f32 %v3700, %v3769
        %v3792 = vsub.f32 %v3702, %v3768
        %v3793 = vsub.f32 %v3704, %v3769
        %v3794 = vsub.f32 %v3708, %v3768
        %v3795 = vsub.f32 %v3710, %v3769
        %v3796 = vsub.f32 %v3712, %v3768
        %v3797 = vsub.f32 %v3714, %v3769
        %v3798 = vsub.f32 %v3718, %v3768
        %v3799 = vsub.f32 %v3720, %v3769
        %v3800 = vsub.f32 %v3722, %v3768
        %v3801 = vsub.f32 %v3724, %v3769
        %v3802 = vmul.f32 %v3770, %v3770
        %v3803 = vmul.f32 %v3771, %v3771
        %v3804 = vmul.f32 %v3772, %v3772
        %v3805 = vmul.f32 %v3773, %v3773
        %v3806 = vmul.f32 %v3774, %v3774
        %v3807 = vmul.f32 %v3775, %v3775
        %v3808 = vmul.f32 %v3776, %v3776
        %v3809 = vmul.f32 %v3777, %v3777
        %v3810 = vmul.f32 %v3778, %v3778
        %v3811 = vmul.f32 %v3779, %v3779
        %v3812 = vmul.f32 %v3780, %v3780
        %v3813 = vmul.f32 %v3781, %v3781
        %v3814 = vmul.f32 %v3782, %v3782
        %v3815 = vmul.f32 %v3783, %v3783
        %v3816 = vmul.f32 %v3784, %v3784
        %v3817 = vmul.f32 %v3785, %v3785
        %v3818 = vmul.f32 %v3786, %v3786
        %v3819 = vmul.f32 %v3787, %v3787
        %v3820 = vmul.f32 %v3788, %v3788
        %v3821 = vmul.f32 %v3789, %v3789
        %v3822 = vmul.f32 %v3790, %v3790
        %v3823 = vmul.f32 %v3791, %v3791
        %v3824 = vmul.f32 %v3792, %v3792
        %v3825 = vmul.f32 %v3793, %v3793
        %v3826 = vmul.f32 %v3794, %v3794
        %v3827 = vmul.f32 %v3795, %v3795
        %v3828 = vmul.f32 %v3796, %v3796
        %v3829 = vmul.f32 %v3797, %v3797
        %v3830 = vmul.f32 %v3798, %v3798
        %v3831 = vmul.f32 %v3799, %v3799
        %v3832 = vmul.f32 %v3800, %v3800
        %v3833 = vmul.f32 %v3801, %v3801
        %v3834 = vadd.f32 %v3802, %v3804
        %v3835 = vadd.f32 %v3834, %v3806
        %v3836 = vadd.f32 %v3835, %v3808
        %v3837 = vadd.f32 %v3836, %v3810
        %v3838 = vadd.f32 %v3837, %v3812
        %v3839 = vadd.f32 %v3838, %v3814
        %v3840 = vadd.f32 %v3839, %v3816
        %v3841 = vadd.f32 %v3840, %v3818
        %v3842 = vadd.f32 %v3841, %v3820
        %v3843 = vadd.f32 %v3842, %v3822
        %v3844 = vadd.f32 %v3843, %v3824
        %v3845 = vadd.f32 %v3844, %v3826
        %v3846 = vadd.f32 %v3845, %v3828
        %v3847 = vadd.f32 %v3846, %v3830
        %v3848 = vadd.f32 %v3847, %v3832
        %v3849 = vrot.slane %v3848, 4
        %v3850 = vadd.f32 %v3848, %v3849
        %v3851 = vrot.slane %v3850, 2
        %v3852 = vadd.f32 %v3850, %v3851
        %v3853 = vrot.slane %v3852, 1
        %v3854 = vadd.f32 %v3852, %v3853
        %v3855 = vadd.f32 %v3803, %v3805
        %v3856 = vadd.f32 %v3855, %v3807
        %v3857 = vadd.f32 %v3856, %v3809
        %v3858 = vadd.f32 %v3857, %v3811
        %v3859 = vadd.f32 %v3858, %v3813
        %v3860 = vadd.f32 %v3859, %v3815
        %v3861 = vadd.f32 %v3860, %v3817
        %v3862 = vadd.f32 %v3861, %v3819
        %v3863 = vadd.f32 %v3862, %v3821
        %v3864 = vadd.f32 %v3863, %v3823
        %v3865 = vadd.f32 %v3864, %v3825
        %v3866 = vadd.f32 %v3865, %v3827
        %v3867 = vadd.f32 %v3866, %v3829
        %v3868 = vadd.f32 %v3867, %v3831
        %v3869 = vadd.f32 %v3868, %v3833
        %v3870 = vrot.slane %v3869, 4
        %v3871 = vadd.f32 %v3869, %v3870
        %v3872 = vrot.slane %v3871, 2
        %v3873 = vadd.f32 %v3871, %v3872
        %v3874 = vrot.slane %v3873, 1
        %v3875 = vadd.f32 %v3873, %v3874
        %v3876 = vmul.f32 %v3854, %v1035
        %v3877 = vmul.f32 %v3875, %v1035
        %v3878 = vadd.f32 %v3876, 1e-05
        %v3879 = vadd.f32 %v3877, 1e-05
        %v3880 = vrsqrt.pop %v3878
        %v3881 = vrsqrt.pop %v3879
        %v3882 = vmul.f32 %v3770, %v3880
        %v3883 = vmul.f32 %v3771, %v3881
        %v3884 = vmul.f32 %v3772, %v3880
        %v3885 = vmul.f32 %v3773, %v3881
        %v3886 = vmul.f32 %v3774, %v3880
        %v3887 = vmul.f32 %v3775, %v3881
        %v3888 = vmul.f32 %v3776, %v3880
        %v3889 = vmul.f32 %v3777, %v3881
        %v3890 = vmul.f32 %v3778, %v3880
        %v3891 = vmul.f32 %v3779, %v3881
        %v3892 = vmul.f32 %v3780, %v3880
        %v3893 = vmul.f32 %v3781, %v3881
        %v3894 = vmul.f32 %v3782, %v3880
        %v3895 = vmul.f32 %v3783, %v3881
        %v3896 = vmul.f32 %v3784, %v3880
        %v3897 = vmul.f32 %v3785, %v3881
        %v3898 = vmul.f32 %v3786, %v3880
        %v3899 = vmul.f32 %v3787, %v3881
        %v3900 = vmul.f32 %v3788, %v3880
        %v3901 = vmul.f32 %v3789, %v3881
        %v3902 = vmul.f32 %v3790, %v3880
        %v3903 = vmul.f32 %v3791, %v3881
        %v3904 = vmul.f32 %v3792, %v3880
        %v3905 = vmul.f32 %v3793, %v3881
        %v3906 = vmul.f32 %v3794, %v3880
        %v3907 = vmul.f32 %v3795, %v3881
        %v3908 = vmul.f32 %v3796, %v3880
        %v3909 = vmul.f32 %v3797, %v3881
        %v3910 = vmul.f32 %v3798, %v3880
        %v3911 = vmul.f32 %v3799, %v3881
        %v3912 = vmul.f32 %v3800, %v3880
        %v3913 = vmul.f32 %v3801, %v3881
        %3914 = vst [vmem:[%s242] sm:$0xff] %v3882
        %3915 = vst [vmem:[%s242 + $0x8] sm:$0xff] %v3883
        %3916 = vst [vmem:[%s242 + $0x10] sm:$0xff] %v3884
        %3917 = vst [vmem:[%s242 + $0x18] sm:$0xff] %v3885
        %3918 = vst [vmem:[%s242 + $0x20] sm:$0xff] %v3886
        %3919 = vst [vmem:[%s242 + $0x28] sm:$0xff] %v3887
        %3920 = vst [vmem:[%s242 + $0x30] sm:$0xff] %v3888
        %3921 = vst [vmem:[%s242 + $0x38] sm:$0xff] %v3889
        %3922 = vst [vmem:[%s242 + $0x40] sm:$0xff] %v3890
        %3923 = vst [vmem:[%s242 + $0x48] sm:$0xff] %v3891
        %3924 = vst [vmem:[%s242 + $0x50] sm:$0xff] %v3892
        %3925 = vst [vmem:[%s242 + $0x58] sm:$0xff] %v3893
        %3926 = vst [vmem:[%s242 + $0x60] sm:$0xff] %v3894
        %3927 = vst [vmem:[%s242 + $0x68] sm:$0xff] %v3895
        %3928 = vst [vmem:[%s242 + $0x70] sm:$0xff] %v3896
        %3929 = vst [vmem:[%s242 + $0x78] sm:$0xff] %v3897
        %3930 = vst [vmem:[%s242 + $0x80] sm:$0xff] %v3898
        %3931 = vst [vmem:[%s242 + $0x88] sm:$0xff] %v3899
        %3932 = vst [vmem:[%s242 + $0x90] sm:$0xff] %v3900
        %3933 = vst [vmem:[%s242 + $0x98] sm:$0xff] %v3901
        %3934 = vst [vmem:[%s242 + $0xa0] sm:$0xff] %v3902
        %3935 = vst [vmem:[%s242 + $0xa8] sm:$0xff] %v3903
        %3936 = vst [vmem:[%s242 + $0xb0] sm:$0xff] %v3904
        %3937 = vst [vmem:[%s242 + $0xb8] sm:$0xff] %v3905
        %3938 = vst [vmem:[%s242 + $0xc0] sm:$0xff] %v3906
        %3939 = vst [vmem:[%s242 + $0xc8] sm:$0xff] %v3907
        %3940 = vst [vmem:[%s242 + $0xd0] sm:$0xff] %v3908
        %3941 = vst [vmem:[%s242 + $0xd8] sm:$0xff] %v3909
        %3942 = vst [vmem:[%s242 + $0xe0] sm:$0xff] %v3910
        %3943 = vst [vmem:[%s242 + $0xe8] sm:$0xff] %v3911
        %3944 = vst [vmem:[%s242 + $0xf0] sm:$0xff] %v3912
        %3945 = vst [vmem:[%s242 + $0xf8] sm:$0xff] %v3913
        %s3946 = sand.u32 %s117, 1
        %s3947 = scalar_lea.sflag [#allocation4], %s3946
        %s3948 = sand.u32 %s117, 1
        %s3949 = smul.addr %s3948, 256
        %s3950 = scalar_lea.vmem [#allocation8], %s3949
        // Predicated region
        $region49: #{mlp_forward.1} parent=35 // pred_check
          %p3951 = pneg %p127
        $region50: #{mlp_forward.1} parent=35 // pred_check_branch
          %3953 = sbr.rel (%p3951) target = $region52
        $region51: #{mlp_forward.1} parent=35 // pred_region
          %s3954 = smul.u32 2, %s20
          %s3956 = ssub.s32 4096, 4096
          %3957 = vsyncadd %s3947, %s3956
          %s3958 = smul.addr %s3954, 128
          %s3959 = scalar_lea.hbm %s4, %s3958
          %s3960 = sshll.u32 %s3950, 4
          %s3961 = int_to_ptr.vmem [resolvable:$true] %s3960
          %3966 = dma.vmem_to_hbm [thread:$0]  %s3961, 4096, %s3959, %s3947, 256, 512, 16
        $region52: #{mlp_forward.1} parent=35 // pred_fallthru
          _
      $region36: #{mlp_forward.1} parent=5 // pred_fallthru
        _
      %p3967 = scmp.le.s32.totalorder 2, %s15
      // Predicated region
      $region53: #{mlp_forward.1} parent=5 // pred_check
        %p3968 = pneg %p3967
      $region54: #{mlp_forward.1} parent=5 // pred_check_branch
        %3970 = sbr.rel (%p3968) target = $region56
      $region55: #{mlp_forward.1} parent=5 // pred_region
        %s3971 = ssub.s32 %s15, 2
        // Predicated region
        $region57: #{mlp_forward.1} parent=55 // pred_check
          %p3972 = pneg %p133
        $region58: #{mlp_forward.1} parent=55 // pred_check_branch
          %3974 = sbr.rel (%p3972) target = $region60
        $region59: #{mlp_forward.1} parent=55 // pred_region
          %s3975 = sand.u32 %s118, 1
          %s3976 = scalar_lea.sflag [#allocation4], %s3975
          %s3977 = sand.u32 %s118, 1
          %s3978 = smul.addr %s3977, 256
          %s3979 = scalar_lea.vmem [#allocation8], %s3978
          %3980 = dma.done %s3976, 4096
        $region60: #{mlp_forward.1} parent=55 // pred_fallthru
          _
      $region56: #{mlp_forward.1} parent=5 // pred_fallthru
        _
    $region6: #{mlp_forward.1} parent=1 // loop_footer
      %s19 = sadd.s32 1, %s15
    $region7: #{mlp_forward.1} parent=1 // loop_footer_branch
      %14 = sbr.rel target = $region3
    $region8: #{mlp_forward.1} parent=1 // loop_exit
      _
    %3981 = vsyncpa [#allocation3], 1
    %s3982 = scalar_lea.sflag [#allocation3], 1
    %3983 = vsyncpa %s3982, 1
    %3984 = vsyncpa [#allocation6], 1
    %3985 = vsyncpa [#allocation4], 1
    %s3986 = scalar_lea.sflag [#allocation4], 1
    %3987 = vsyncpa %s3986, 1

</llo_original>
